<compile_context>
chip_gen: v6e
topology: v6e:2x2x1
jax: 0.10.0
libtpu: 0.0.40
codegen_flags: <defaults>
</compile_context>

<pallas_src>
import jax
import jax.numpy as jnp
from jax.experimental import pallas as pl
from jax.experimental.pallas import tpu as pltpu

LATENT_DIM = 10
IN_DIM = 32 * 32  # 1024
HID = 100

# (in_features, out_features) for each of the 10 Linear layers, in forward order.
LAYER_DIMS = [
    (IN_DIM, HID), (HID, HID), (HID, HID), (HID, HID), (HID, LATENT_DIM),   # encoder
    (LATENT_DIM, HID), (HID, HID), (HID, HID), (HID, HID), (HID, IN_DIM),   # decoder
]

_LANE = 128      # lane width: pad all hidden / latent feature dims to this
_SUBLANE = 8     # sublane granularity for the batch tile

_RELU, _LINEAR, _SIGMOID = 0, 1, 2
_ACTS_UNFUSED = (_RELU,) * 4 + (_LINEAR,) + (_RELU,) * 4 + (_SIGMOID,)
_ACTS_FUSED = (_RELU,) * 8 + (_SIGMOID,)   # latent pair fused into one ReLU layer


def _round_up(n, m):
    return ((n + m - 1) // m) * m


def _make_kernel(activations):
    """Kernel over refs = (x, w1, b1, ..., wL, bL, out). Feature dims padded."""
    n_layers = len(activations)

    def kernel(x_ref, *refs):
        out_ref = refs[-1]
        h = x_ref[...]                              # (tile, 1024)
        for layer in range(n_layers):
            w = refs[2 * layer][...]                # (K_pad, N_pad), f32 or bf16
            b = refs[2 * layer + 1][...]            # (1, N_pad), always f32
            # Matmul in the weight dtype (bf16 MXU fast path), f32 accumulation.
            h = jnp.dot(h.astype(w.dtype), w, preferred_element_type=jnp.float32)
            h = h + b                               # bias add / activations in f32
            act = activations[layer]
            if act == _RELU:
                h = jnp.maximum(h, 0.0)
            elif act == _SIGMOID:
                h = jax.nn.sigmoid(h)
        out_ref[...] = h.astype(out_ref.dtype)

    return kernel


def autoencoder_linear_forward(x, params, *, batch_tile=512,
                               param_dtype=jnp.bfloat16,
                               out_dtype=None, fuse_latent=True):
    """x: (B, 1024). params: list of (W, b) with W (in, out), b (1, out) or (out,)."""
    B, D = x.shape
    assert D == IN_DIM
    out_dtype = x.dtype if out_dtype is None else out_dtype

    # ---- build layer list, optionally fusing the two activation-free layers --
    mats = [(jnp.asarray(w, jnp.float32),
             jnp.asarray(b, jnp.float32).reshape(1, -1)) for (w, b) in params]
    if fuse_latent:
        (w5, b5), (w6, b6) = mats[4], mats[5]
        mats = mats[:4] + [(w5 @ w6, b5 @ w6 + b6)] + mats[6:]
        activations = _ACTS_FUSED
    else:
        activations = _ACTS_UNFUSED

    # ---- pad parameters to lane-aligned shapes (extra rows/cols/biases = 0) --
    padded = []
    for w, b in mats:
        fi, fo = int(w.shape[0]), int(w.shape[1])
        fi_p, fo_p = _round_up(fi, _LANE), _round_up(fo, _LANE)
        w_p = jnp.zeros((fi_p, fo_p), jnp.float32).at[:fi, :fo].set(w)
        w_p = w_p.astype(param_dtype)
        b_p = jnp.zeros((1, fo_p), jnp.float32).at[:, :fo].set(b)
        padded.append((w_p, b_p))
    flat_params = [p for wb in padded for p in wb]

    # ---- batch tile: cap at batch_tile, but prefer >= 2 grid steps so the
    #      "parallel" grid axis can shard across v7x's two TensorCores. --------
    half = _round_up(pl.cdiv(B, 2), _SUBLANE)
    tile = max(_SUBLANE, min(batch_tile, half))
    grid = (pl.cdiv(B, tile),)          # ragged last block handled by Pallas

    x_spec = pl.BlockSpec((tile, IN_DIM), lambda i: (i, 0))
    out_spec = pl.BlockSpec((tile, IN_DIM), lambda i: (i, 0))

    flops = 2 * B * sum(int(w.shape[0]) * int(w.shape[1]) for w, _ in mats)
    bytes_accessed = (
        int(x.size) * x.dtype.itemsize
        + B * IN_DIM * jnp.dtype(out_dtype).itemsize
        # weights/biases are resident across grid steps -> count once.
        + sum(int(w.size) * w.dtype.itemsize + int(b.size) * 4 for w, b in padded))
    cost = pl.CostEstimate(flops=flops,
                           transcendentals=B * IN_DIM,   # sigmoid on output
                           bytes_accessed=int(bytes_accessed))

    kernel = _make_kernel(activations)

    def _call(single_buffer_params):
        def pspec(shape):
            # Constant block index -> Pallas skips re-DMA across the batch grid;
            # single-buffering the resident params saves VMEM (matters on v7x).
            if single_buffer_params:
                return pl.BlockSpec(shape, lambda i: (0, 0),
                                    pipeline_mode=pl.Buffered(1))
            return pl.BlockSpec(shape, lambda i: (0, 0))

        in_specs = [x_spec] + [pspec(p.shape) for p in flat_params]
        return pl.pallas_call(
            kernel,
            out_shape=jax.ShapeDtypeStruct((B, IN_DIM), out_dtype),
            grid_spec=pltpu.PrefetchScalarGridSpec(
                num_scalar_prefetch=0,
                grid=grid,
                in_specs=in_specs,
                out_specs=out_spec,
            ),
            compiler_params=pltpu.CompilerParams(
                dimension_semantics=("parallel",),   # megacore-shard batch tiles
                vmem_limit_bytes=48 << 20,           # safe on v7x, ample on v5e/v6e
            ),
            cost_estimate=cost,
        )(x, *flat_params)

    try:
        return _call(True)
    except Exception:
        # pipeline_mode=pl.Buffered(1) unsupported on this jax build -> default buffering.
        return _call(False)


def init_params(key):
    """Deterministic init mimicking PyTorch Linear default (U(-1/sqrt(in), 1/sqrt(in)))."""
    params = []
    for (fan_in, fan_out) in LAYER_DIMS:
        key, kw, kb = jax.random.split(key, 3)
        bound = 1.0 / jnp.sqrt(jnp.float32(fan_in))
        w = jax.random.uniform(kw, (fan_in, fan_out), jnp.float32, -bound, bound)
        b = jax.random.uniform(kb, (1, fan_out), jnp.float32, -bound, bound)
        params.append((w, b))
    return params


def reference_forward(x, params):
    """Plain-JAX reference of the PyTorch forward pass."""
    h = x
    for layer, (w, b) in enumerate(params):
        h = h @ w + b
        if layer == 4:          # encoder output (latent): no activation
            pass
        elif layer == 9:        # decoder output: sigmoid
            h = jax.nn.sigmoid(h)
        else:
            h = jnp.maximum(h, 0.0)
    return h


if __name__ == "__main__":
    key = jax.random.PRNGKey(0)
    key, kx1, kx2 = jax.random.split(key, 3)
    params = init_params(key)

    # Small batch that is NOT a multiple of the tile: exercises the ragged last
    # grid block and still yields 2 grid steps (tile shrinks to 8 rows here).
    B = 12
    x = jax.random.uniform(kx1, (B, IN_DIM), jnp.float32)  # flattened 32x32 images
    ref = reference_forward(x, params)

    # Default path: bf16 weights (MXU fast path) + fused latent layers.
    out = jax.block_until_ready(autoencoder_linear_forward(x, params))
    assert out.shape == (B, IN_DIM)
    assert jnp.allclose(out, ref, atol=3e-2, rtol=3e-2), "bf16 mismatch vs reference"

    # f32 weights, unfused: zero-padding only -> tight tolerance vs reference.
    out_f32 = jax.block_until_ready(
        autoencoder_linear_forward(x, params, param_dtype=jnp.float32,
                                   fuse_latent=False))
    assert jnp.allclose(out_f32, ref, atol=1e-5, rtol=1e-5), "f32 mismatch vs reference"

    # f32 weights with the fused latent pair: exact up to matmul reassociation.
    out_fused = jax.block_until_ready(
        autoencoder_linear_forward(x, params, param_dtype=jnp.float32))
    assert jnp.allclose(out_fused, ref, atol=1e-4, rtol=1e-4), "fused-latent mismatch"

    # Larger non-multiple batch: 2 ragged grid steps, no wrapper pad/slice.
    B2 = 300
    x2 = jax.random.uniform(kx2, (B2, IN_DIM), jnp.float32)
    ref2 = reference_forward(x2, params)
    out2 = jax.block_until_ready(
        autoencoder_linear_forward(x2, params, param_dtype=jnp.float32,
                                   fuse_latent=False))
    assert out2.shape == (B2, IN_DIM)
    assert jnp.allclose(out2, ref2, atol=1e-5, rtol=1e-5), "ragged-batch mismatch"

    print("KERNEL_OK")
</pallas_src>

<mosaic_0001>
module attributes {stable_mosaic.version = 11 : i64} {
  func.func @kernel(%arg0: i32, %arg1: memref<8x1024xf32, #tpu.memory_space<vmem>>, %arg2: memref<1024x128xbf16, #tpu.memory_space<vmem>>, %arg3: memref<1x128xf32, #tpu.memory_space<vmem>>, %arg4: memref<128x128xbf16, #tpu.memory_space<vmem>>, %arg5: memref<1x128xf32, #tpu.memory_space<vmem>>, %arg6: memref<128x128xbf16, #tpu.memory_space<vmem>>, %arg7: memref<1x128xf32, #tpu.memory_space<vmem>>, %arg8: memref<128x128xbf16, #tpu.memory_space<vmem>>, %arg9: memref<1x128xf32, #tpu.memory_space<vmem>>, %arg10: memref<128x128xbf16, #tpu.memory_space<vmem>>, %arg11: memref<1x128xf32, #tpu.memory_space<vmem>>, %arg12: memref<128x128xbf16, #tpu.memory_space<vmem>>, %arg13: memref<1x128xf32, #tpu.memory_space<vmem>>, %arg14: memref<128x128xbf16, #tpu.memory_space<vmem>>, %arg15: memref<1x128xf32, #tpu.memory_space<vmem>>, %arg16: memref<128x128xbf16, #tpu.memory_space<vmem>>, %arg17: memref<1x128xf32, #tpu.memory_space<vmem>>, %arg18: memref<128x1024xbf16, #tpu.memory_space<vmem>>, %arg19: memref<1x1024xf32, #tpu.memory_space<vmem>>, %arg20: memref<8x1024xf32, #tpu.memory_space<vmem>>) attributes {dimension_semantics = [#tpu.dimension_semantics<parallel>], iteration_bounds = array<i64: 2>, scalar_prefetch = 0 : i64, scratch_operands = 0 : i64, tpu.core_type = #tpu.core_type<tc>, window_params = [{transform_indices = @transform_0, window_bounds = array<i64: 8, 1024>}, {pipeline_mode = #tpu.pipeline_mode<synchronous>, transform_indices = @transform_1, window_bounds = array<i64: 1024, 128>}, {pipeline_mode = #tpu.pipeline_mode<synchronous>, transform_indices = @transform_2, window_bounds = array<i64: 1, 128>}, {pipeline_mode = #tpu.pipeline_mode<synchronous>, transform_indices = @transform_3, window_bounds = array<i64: 128, 128>}, {pipeline_mode = #tpu.pipeline_mode<synchronous>, transform_indices = @transform_4, window_bounds = array<i64: 1, 128>}, {pipeline_mode = #tpu.pipeline_mode<synchronous>, transform_indices = @transform_5, window_bounds = array<i64: 128, 128>}, {pipeline_mode = #tpu.pipeline_mode<synchronous>, transform_indices = @transform_6, window_bounds = array<i64: 1, 128>}, {pipeline_mode = #tpu.pipeline_mode<synchronous>, transform_indices = @transform_7, window_bounds = array<i64: 128, 128>}, {pipeline_mode = #tpu.pipeline_mode<synchronous>, transform_indices = @transform_8, window_bounds = array<i64: 1, 128>}, {pipeline_mode = #tpu.pipeline_mode<synchronous>, transform_indices = @transform_9, window_bounds = array<i64: 128, 128>}, {pipeline_mode = #tpu.pipeline_mode<synchronous>, transform_indices = @transform_10, window_bounds = array<i64: 1, 128>}, {pipeline_mode = #tpu.pipeline_mode<synchronous>, transform_indices = @transform_11, window_bounds = array<i64: 128, 128>}, {pipeline_mode = #tpu.pipeline_mode<synchronous>, transform_indices = @transform_12, window_bounds = array<i64: 1, 128>}, {pipeline_mode = #tpu.pipeline_mode<synchronous>, transform_indices = @transform_13, window_bounds = array<i64: 128, 128>}, {pipeline_mode = #tpu.pipeline_mode<synchronous>, transform_indices = @transform_14, window_bounds = array<i64: 1, 128>}, {pipeline_mode = #tpu.pipeline_mode<synchronous>, transform_indices = @transform_15, window_bounds = array<i64: 128, 128>}, {pipeline_mode = #tpu.pipeline_mode<synchronous>, transform_indices = @transform_16, window_bounds = array<i64: 1, 128>}, {pipeline_mode = #tpu.pipeline_mode<synchronous>, transform_indices = @transform_17, window_bounds = array<i64: 128, 1024>}, {pipeline_mode = #tpu.pipeline_mode<synchronous>, transform_indices = @transform_18, window_bounds = array<i64: 1, 1024>}, {transform_indices = @transform_19, window_bounds = array<i64: 8, 1024>}]} {
    %c0 = arith.constant 0 : index
    %c0_0 = arith.constant 0 : index
    %0 = vector.load %arg1[%c0, %c0_0] : memref<8x1024xf32, #tpu.memory_space<vmem>>, vector<8x1024xf32>
    %c0_1 = arith.constant 0 : index
    %c0_2 = arith.constant 0 : index
    %1 = vector.load %arg2[%c0_1, %c0_2] : memref<1024x128xbf16, #tpu.memory_space<vmem>>, vector<1024x128xbf16>
    %c0_3 = arith.constant 0 : index
    %c0_4 = arith.constant 0 : index
    %2 = vector.load %arg3[%c0_3, %c0_4] : memref<1x128xf32, #tpu.memory_space<vmem>>, vector<1x128xf32>
    %3 = arith.truncf %0 : vector<8x1024xf32> to vector<8x1024xbf16>
    %cst = arith.constant dense<0.000000e+00> : vector<8x128xf32>
    %4 = tpu.matmul %3, %1, %cst {dimension_numbers = #tpu.dot_dimension_numbers<[1], [0], [0], [1], [0, 0, 1, 1], [], []>} : vector<8x1024xbf16>, vector<1024x128xbf16>, vector<8x128xf32> -> vector<8x128xf32>
    %5 = vector.broadcast %2 : vector<1x128xf32> to vector<8x128xf32>
    %6 = arith.addf %4, %5 : vector<8x128xf32>
    %cst_5 = arith.constant 0.000000e+00 : f32
    %7 = vector.broadcast %cst_5 : f32 to vector<8x128xf32>
    %8 = arith.maximumf %6, %7 : vector<8x128xf32>
    %c0_6 = arith.constant 0 : index
    %c0_7 = arith.constant 0 : index
    %9 = vector.load %arg4[%c0_6, %c0_7] : memref<128x128xbf16, #tpu.memory_space<vmem>>, vector<128x128xbf16>
    %c0_8 = arith.constant 0 : index
    %c0_9 = arith.constant 0 : index
    %10 = vector.load %arg5[%c0_8, %c0_9] : memref<1x128xf32, #tpu.memory_space<vmem>>, vector<1x128xf32>
    %11 = arith.truncf %8 : vector<8x128xf32> to vector<8x128xbf16>
    %cst_10 = arith.constant dense<0.000000e+00> : vector<8x128xf32>
    %12 = tpu.matmul %11, %9, %cst_10 {dimension_numbers = #tpu.dot_dimension_numbers<[1], [0], [0], [1], [0, 0, 1, 1], [], []>} : vector<8x128xbf16>, vector<128x128xbf16>, vector<8x128xf32> -> vector<8x128xf32>
    %13 = vector.broadcast %10 : vector<1x128xf32> to vector<8x128xf32>
    %14 = arith.addf %12, %13 : vector<8x128xf32>
    %cst_11 = arith.constant 0.000000e+00 : f32
    %15 = vector.broadcast %cst_11 : f32 to vector<8x128xf32>
    %16 = arith.maximumf %14, %15 : vector<8x128xf32>
    %c0_12 = arith.constant 0 : index
    %c0_13 = arith.constant 0 : index
    %17 = vector.load %arg6[%c0_12, %c0_13] : memref<128x128xbf16, #tpu.memory_space<vmem>>, vector<128x128xbf16>
    %c0_14 = arith.constant 0 : index
    %c0_15 = arith.constant 0 : index
    %18 = vector.load %arg7[%c0_14, %c0_15] : memref<1x128xf32, #tpu.memory_space<vmem>>, vector<1x128xf32>
    %19 = arith.truncf %16 : vector<8x128xf32> to vector<8x128xbf16>
    %cst_16 = arith.constant dense<0.000000e+00> : vector<8x128xf32>
    %20 = tpu.matmul %19, %17, %cst_16 {dimension_numbers = #tpu.dot_dimension_numbers<[1], [0], [0], [1], [0, 0, 1, 1], [], []>} : vector<8x128xbf16>, vector<128x128xbf16>, vector<8x128xf32> -> vector<8x128xf32>
    %21 = vector.broadcast %18 : vector<1x128xf32> to vector<8x128xf32>
    %22 = arith.addf %20, %21 : vector<8x128xf32>
    %cst_17 = arith.constant 0.000000e+00 : f32
    %23 = vector.broadcast %cst_17 : f32 to vector<8x128xf32>
    %24 = arith.maximumf %22, %23 : vector<8x128xf32>
    %c0_18 = arith.constant 0 : index
    %c0_19 = arith.constant 0 : index
    %25 = vector.load %arg8[%c0_18, %c0_19] : memref<128x128xbf16, #tpu.memory_space<vmem>>, vector<128x128xbf16>
    %c0_20 = arith.constant 0 : index
    %c0_21 = arith.constant 0 : index
    %26 = vector.load %arg9[%c0_20, %c0_21] : memref<1x128xf32, #tpu.memory_space<vmem>>, vector<1x128xf32>
    %27 = arith.truncf %24 : vector<8x128xf32> to vector<8x128xbf16>
    %cst_22 = arith.constant dense<0.000000e+00> : vector<8x128xf32>
    %28 = tpu.matmul %27, %25, %cst_22 {dimension_numbers = #tpu.dot_dimension_numbers<[1], [0], [0], [1], [0, 0, 1, 1], [], []>} : vector<8x128xbf16>, vector<128x128xbf16>, vector<8x128xf32> -> vector<8x128xf32>
    %29 = vector.broadcast %26 : vector<1x128xf32> to vector<8x128xf32>
    %30 = arith.addf %28, %29 : vector<8x128xf32>
    %cst_23 = arith.constant 0.000000e+00 : f32
    %31 = vector.broadcast %cst_23 : f32 to vector<8x128xf32>
    %32 = arith.maximumf %30, %31 : vector<8x128xf32>
    %c0_24 = arith.constant 0 : index
    %c0_25 = arith.constant 0 : index
    %33 = vector.load %arg10[%c0_24, %c0_25] : memref<128x128xbf16, #tpu.memory_space<vmem>>, vector<128x128xbf16>
    %c0_26 = arith.constant 0 : index
    %c0_27 = arith.constant 0 : index
    %34 = vector.load %arg11[%c0_26, %c0_27] : memref<1x128xf32, #tpu.memory_space<vmem>>, vector<1x128xf32>
    %35 = arith.truncf %32 : vector<8x128xf32> to vector<8x128xbf16>
    %cst_28 = arith.constant dense<0.000000e+00> : vector<8x128xf32>
    %36 = tpu.matmul %35, %33, %cst_28 {dimension_numbers = #tpu.dot_dimension_numbers<[1], [0], [0], [1], [0, 0, 1, 1], [], []>} : vector<8x128xbf16>, vector<128x128xbf16>, vector<8x128xf32> -> vector<8x128xf32>
    %37 = vector.broadcast %34 : vector<1x128xf32> to vector<8x128xf32>
    %38 = arith.addf %36, %37 : vector<8x128xf32>
    %cst_29 = arith.constant 0.000000e+00 : f32
    %39 = vector.broadcast %cst_29 : f32 to vector<8x128xf32>
    %40 = arith.maximumf %38, %39 : vector<8x128xf32>
    %c0_30 = arith.constant 0 : index
    %c0_31 = arith.constant 0 : index
    %41 = vector.load %arg12[%c0_30, %c0_31] : memref<128x128xbf16, #tpu.memory_space<vmem>>, vector<128x128xbf16>
    %c0_32 = arith.constant 0 : index
    %c0_33 = arith.constant 0 : index
    %42 = vector.load %arg13[%c0_32, %c0_33] : memref<1x128xf32, #tpu.memory_space<vmem>>, vector<1x128xf32>
    %43 = arith.truncf %40 : vector<8x128xf32> to vector<8x128xbf16>
    %cst_34 = arith.constant dense<0.000000e+00> : vector<8x128xf32>
    %44 = tpu.matmul %43, %41, %cst_34 {dimension_numbers = #tpu.dot_dimension_numbers<[1], [0], [0], [1], [0, 0, 1, 1], [], []>} : vector<8x128xbf16>, vector<128x128xbf16>, vector<8x128xf32> -> vector<8x128xf32>
    %45 = vector.broadcast %42 : vector<1x128xf32> to vector<8x128xf32>
    %46 = arith.addf %44, %45 : vector<8x128xf32>
    %cst_35 = arith.constant 0.000000e+00 : f32
    %47 = vector.broadcast %cst_35 : f32 to vector<8x128xf32>
    %48 = arith.maximumf %46, %47 : vector<8x128xf32>
    %c0_36 = arith.constant 0 : index
    %c0_37 = arith.constant 0 : index
    %49 = vector.load %arg14[%c0_36, %c0_37] : memref<128x128xbf16, #tpu.memory_space<vmem>>, vector<128x128xbf16>
    %c0_38 = arith.constant 0 : index
    %c0_39 = arith.constant 0 : index
    %50 = vector.load %arg15[%c0_38, %c0_39] : memref<1x128xf32, #tpu.memory_space<vmem>>, vector<1x128xf32>
    %51 = arith.truncf %48 : vector<8x128xf32> to vector<8x128xbf16>
    %cst_40 = arith.constant dense<0.000000e+00> : vector<8x128xf32>
    %52 = tpu.matmul %51, %49, %cst_40 {dimension_numbers = #tpu.dot_dimension_numbers<[1], [0], [0], [1], [0, 0, 1, 1], [], []>} : vector<8x128xbf16>, vector<128x128xbf16>, vector<8x128xf32> -> vector<8x128xf32>
    %53 = vector.broadcast %50 : vector<1x128xf32> to vector<8x128xf32>
    %54 = arith.addf %52, %53 : vector<8x128xf32>
    %cst_41 = arith.constant 0.000000e+00 : f32
    %55 = vector.broadcast %cst_41 : f32 to vector<8x128xf32>
    %56 = arith.maximumf %54, %55 : vector<8x128xf32>
    %c0_42 = arith.constant 0 : index
    %c0_43 = arith.constant 0 : index
    %57 = vector.load %arg16[%c0_42, %c0_43] : memref<128x128xbf16, #tpu.memory_space<vmem>>, vector<128x128xbf16>
    %c0_44 = arith.constant 0 : index
    %c0_45 = arith.constant 0 : index
    %58 = vector.load %arg17[%c0_44, %c0_45] : memref<1x128xf32, #tpu.memory_space<vmem>>, vector<1x128xf32>
    %59 = arith.truncf %56 : vector<8x128xf32> to vector<8x128xbf16>
    %cst_46 = arith.constant dense<0.000000e+00> : vector<8x128xf32>
    %60 = tpu.matmul %59, %57, %cst_46 {dimension_numbers = #tpu.dot_dimension_numbers<[1], [0], [0], [1], [0, 0, 1, 1], [], []>} : vector<8x128xbf16>, vector<128x128xbf16>, vector<8x128xf32> -> vector<8x128xf32>
    %61 = vector.broadcast %58 : vector<1x128xf32> to vector<8x128xf32>
    %62 = arith.addf %60, %61 : vector<8x128xf32>
    %cst_47 = arith.constant 0.000000e+00 : f32
    %63 = vector.broadcast %cst_47 : f32 to vector<8x128xf32>
    %64 = arith.maximumf %62, %63 : vector<8x128xf32>
    %c0_48 = arith.constant 0 : index
    %c0_49 = arith.constant 0 : index
    %65 = vector.load %arg18[%c0_48, %c0_49] : memref<128x1024xbf16, #tpu.memory_space<vmem>>, vector<128x1024xbf16>
    %c0_50 = arith.constant 0 : index
    %c0_51 = arith.constant 0 : index
    %66 = vector.load %arg19[%c0_50, %c0_51] : memref<1x1024xf32, #tpu.memory_space<vmem>>, vector<1x1024xf32>
    %67 = arith.truncf %64 : vector<8x128xf32> to vector<8x128xbf16>
    %cst_52 = arith.constant dense<0.000000e+00> : vector<8x1024xf32>
    %68 = tpu.matmul %67, %65, %cst_52 {dimension_numbers = #tpu.dot_dimension_numbers<[1], [0], [0], [1], [0, 0, 1, 1], [], []>} : vector<8x128xbf16>, vector<128x1024xbf16>, vector<8x1024xf32> -> vector<8x1024xf32>
    %69 = vector.broadcast %66 : vector<1x1024xf32> to vector<8x1024xf32>
    %70 = arith.addf %68, %69 : vector<8x1024xf32>
    %71 = arith.negf %70 : vector<8x1024xf32>
    %72 = math.exp %71 : vector<8x1024xf32>
    %cst_53 = arith.constant 1.000000e+00 : f32
    %73 = vector.broadcast %cst_53 : f32 to vector<8x1024xf32>
    %74 = arith.addf %73, %72 : vector<8x1024xf32>
    %75 = arith.divf %73, %74 : vector<8x1024xf32>
    %c0_54 = arith.constant 0 : index
    %c0_55 = arith.constant 0 : index
    %76 = vector.load %arg20[%c0_54, %c0_55] : memref<8x1024xf32, #tpu.memory_space<vmem>>, vector<8x1024xf32>
    tpu.vector_store %arg20[%c0_54, %c0_55], %75 {strides = array<i32>} : memref<8x1024xf32, #tpu.memory_space<vmem>>, vector<8x1024xf32>,
    return
  }
  func.func @transform_0(%arg0: i32) -> (i32, i32) {
    %c0_i32 = arith.constant 0 : i32
    %c0_i32_0 = arith.constant 0 : i32
    return %arg0, %c0_i32 : i32, i32
  }
  func.func @transform_1(%arg0: i32) -> (i32, i32) {
    %c0_i32 = arith.constant 0 : i32
    %c0_i32_0 = arith.constant 0 : i32
    %c0_i32_1 = arith.constant 0 : i32
    return %c0_i32, %c0_i32_0 : i32, i32
  }
  func.func @transform_2(%arg0: i32) -> (i32, i32) {
    %c0_i32 = arith.constant 0 : i32
    %c0_i32_0 = arith.constant 0 : i32
    %c0_i32_1 = arith.constant 0 : i32
    return %c0_i32, %c0_i32_0 : i32, i32
  }
  func.func @transform_3(%arg0: i32) -> (i32, i32) {
    %c0_i32 = arith.constant 0 : i32
    %c0_i32_0 = arith.constant 0 : i32
    %c0_i32_1 = arith.constant 0 : i32
    return %c0_i32, %c0_i32_0 : i32, i32
  }
  func.func @transform_4(%arg0: i32) -> (i32, i32) {
    %c0_i32 = arith.constant 0 : i32
    %c0_i32_0 = arith.constant 0 : i32
    %c0_i32_1 = arith.constant 0 : i32
    return %c0_i32, %c0_i32_0 : i32, i32
  }
  func.func @transform_5(%arg0: i32) -> (i32, i32) {
    %c0_i32 = arith.constant 0 : i32
    %c0_i32_0 = arith.constant 0 : i32
    %c0_i32_1 = arith.constant 0 : i32
    return %c0_i32, %c0_i32_0 : i32, i32
  }
  func.func @transform_6(%arg0: i32) -> (i32, i32) {
    %c0_i32 = arith.constant 0 : i32
    %c0_i32_0 = arith.constant 0 : i32
    %c0_i32_1 = arith.constant 0 : i32
    return %c0_i32, %c0_i32_0 : i32, i32
  }
  func.func @transform_7(%arg0: i32) -> (i32, i32) {
    %c0_i32 = arith.constant 0 : i32
    %c0_i32_0 = arith.constant 0 : i32
    %c0_i32_1 = arith.constant 0 : i32
    return %c0_i32, %c0_i32_0 : i32, i32
  }
  func.func @transform_8(%arg0: i32) -> (i32, i32) {
    %c0_i32 = arith.constant 0 : i32
    %c0_i32_0 = arith.constant 0 : i32
    %c0_i32_1 = arith.constant 0 : i32
    return %c0_i32, %c0_i32_0 : i32, i32
  }
  func.func @transform_9(%arg0: i32) -> (i32, i32) {
    %c0_i32 = arith.constant 0 : i32
    %c0_i32_0 = arith.constant 0 : i32
    %c0_i32_1 = arith.constant 0 : i32
    return %c0_i32, %c0_i32_0 : i32, i32
  }
  func.func @transform_10(%arg0: i32) -> (i32, i32) {
    %c0_i32 = arith.constant 0 : i32
    %c0_i32_0 = arith.constant 0 : i32
    %c0_i32_1 = arith.constant 0 : i32
    return %c0_i32, %c0_i32_0 : i32, i32
  }
  func.func @transform_11(%arg0: i32) -> (i32, i32) {
    %c0_i32 = arith.constant 0 : i32
    %c0_i32_0 = arith.constant 0 : i32
    %c0_i32_1 = arith.constant 0 : i32
    return %c0_i32, %c0_i32_0 : i32, i32
  }
  func.func @transform_12(%arg0: i32) -> (i32, i32) {
    %c0_i32 = arith.constant 0 : i32
    %c0_i32_0 = arith.constant 0 : i32
    %c0_i32_1 = arith.constant 0 : i32
    return %c0_i32, %c0_i32_0 : i32, i32
  }
  func.func @transform_13(%arg0: i32) -> (i32, i32) {
    %c0_i32 = arith.constant 0 : i32
    %c0_i32_0 = arith.constant 0 : i32
    %c0_i32_1 = arith.constant 0 : i32
    return %c0_i32, %c0_i32_0 : i32, i32
  }
  func.func @transform_14(%arg0: i32) -> (i32, i32) {
    %c0_i32 = arith.constant 0 : i32
    %c0_i32_0 = arith.constant 0 : i32
    %c0_i32_1 = arith.constant 0 : i32
    return %c0_i32, %c0_i32_0 : i32, i32
  }
  func.func @transform_15(%arg0: i32) -> (i32, i32) {
    %c0_i32 = arith.constant 0 : i32
    %c0_i32_0 = arith.constant 0 : i32
    %c0_i32_1 = arith.constant 0 : i32
    return %c0_i32, %c0_i32_0 : i32, i32
  }
  func.func @transform_16(%arg0: i32) -> (i32, i32) {
    %c0_i32 = arith.constant 0 : i32
    %c0_i32_0 = arith.constant 0 : i32
    %c0_i32_1 = arith.constant 0 : i32
    return %c0_i32, %c0_i32_0 : i32, i32
  }
  func.func @transform_17(%arg0: i32) -> (i32, i32) {
    %c0_i32 = arith.constant 0 : i32
    %c0_i32_0 = arith.constant 0 : i32
    %c0_i32_1 = arith.constant 0 : i32
    return %c0_i32, %c0_i32_0 : i32, i32
  }
  func.func @transform_18(%arg0: i32) -> (i32, i32) {
    %c0_i32 = arith.constant 0 : i32
    %c0_i32_0 = arith.constant 0 : i32
    %c0_i32_1 = arith.constant 0 : i32
    return %c0_i32, %c0_i32_0 : i32, i32
  }
  func.func @transform_19(%arg0: i32) -> (i32, i32) {
    %c0_i32 = arith.constant 0 : i32
    %c0_i32_0 = arith.constant 0 : i32
    return %arg0, %c0_i32 : i32, i32
  }
}

module attributes {stable_mosaic.version = 11 : i64} {
  func.func @kernel(%arg0: i32, %arg1: memref<8x1024xf32, #tpu.memory_space<vmem>>, %arg2: memref<1024x128xbf16, #tpu.memory_space<vmem>>, %arg3: memref<1x128xf32, #tpu.memory_space<vmem>>, %arg4: memref<128x128xbf16, #tpu.memory_space<vmem>>, %arg5: memref<1x128xf32, #tpu.memory_space<vmem>>, %arg6: memref<128x128xbf16, #tpu.memory_space<vmem>>, %arg7: memref<1x128xf32, #tpu.memory_space<vmem>>, %arg8: memref<128x128xbf16, #tpu.memory_space<vmem>>, %arg9: memref<1x128xf32, #tpu.memory_space<vmem>>, %arg10: memref<128x128xbf16, #tpu.memory_space<vmem>>, %arg11: memref<1x128xf32, #tpu.memory_space<vmem>>, %arg12: memref<128x128xbf16, #tpu.memory_space<vmem>>, %arg13: memref<1x128xf32, #tpu.memory_space<vmem>>, %arg14: memref<128x128xbf16, #tpu.memory_space<vmem>>, %arg15: memref<1x128xf32, #tpu.memory_space<vmem>>, %arg16: memref<128x128xbf16, #tpu.memory_space<vmem>>, %arg17: memref<1x128xf32, #tpu.memory_space<vmem>>, %arg18: memref<128x1024xbf16, #tpu.memory_space<vmem>>, %arg19: memref<1x1024xf32, #tpu.memory_space<vmem>>, %arg20: memref<8x1024xf32, #tpu.memory_space<vmem>>) attributes {dimension_semantics = [#tpu.dimension_semantics<parallel>], iteration_bounds = array<i64: 2>, scalar_prefetch = 0 : i64, scratch_operands = 0 : i64, tpu.core_type = #tpu.core_type<tc>, window_params = [{transform_indices = @transform_0, window_bounds = array<i64: 8, 1024>}, {pipeline_mode = #tpu.pipeline_mode<synchronous>, transform_indices = @transform_1, window_bounds = array<i64: 1024, 128>}, {pipeline_mode = #tpu.pipeline_mode<synchronous>, transform_indices = @transform_2, window_bounds = array<i64: 1, 128>}, {pipeline_mode = #tpu.pipeline_mode<synchronous>, transform_indices = @transform_3, window_bounds = array<i64: 128, 128>}, {pipeline_mode = #tpu.pipeline_mode<synchronous>, transform_indices = @transform_4, window_bounds = array<i64: 1, 128>}, {pipeline_mode = #tpu.pipeline_mode<synchronous>, transform_indices = @transform_5, window_bounds = array<i64: 128, 128>}, {pipeline_mode = #tpu.pipeline_mode<synchronous>, transform_indices = @transform_6, window_bounds = array<i64: 1, 128>}, {pipeline_mode = #tpu.pipeline_mode<synchronous>, transform_indices = @transform_7, window_bounds = array<i64: 128, 128>}, {pipeline_mode = #tpu.pipeline_mode<synchronous>, transform_indices = @transform_8, window_bounds = array<i64: 1, 128>}, {pipeline_mode = #tpu.pipeline_mode<synchronous>, transform_indices = @transform_9, window_bounds = array<i64: 128, 128>}, {pipeline_mode = #tpu.pipeline_mode<synchronous>, transform_indices = @transform_10, window_bounds = array<i64: 1, 128>}, {pipeline_mode = #tpu.pipeline_mode<synchronous>, transform_indices = @transform_11, window_bounds = array<i64: 128, 128>}, {pipeline_mode = #tpu.pipeline_mode<synchronous>, transform_indices = @transform_12, window_bounds = array<i64: 1, 128>}, {pipeline_mode = #tpu.pipeline_mode<synchronous>, transform_indices = @transform_13, window_bounds = array<i64: 128, 128>}, {pipeline_mode = #tpu.pipeline_mode<synchronous>, transform_indices = @transform_14, window_bounds = array<i64: 1, 128>}, {pipeline_mode = #tpu.pipeline_mode<synchronous>, transform_indices = @transform_15, window_bounds = array<i64: 128, 128>}, {pipeline_mode = #tpu.pipeline_mode<synchronous>, transform_indices = @transform_16, window_bounds = array<i64: 1, 128>}, {pipeline_mode = #tpu.pipeline_mode<synchronous>, transform_indices = @transform_17, window_bounds = array<i64: 128, 1024>}, {pipeline_mode = #tpu.pipeline_mode<synchronous>, transform_indices = @transform_18, window_bounds = array<i64: 1, 1024>}, {transform_indices = @transform_19, window_bounds = array<i64: 8, 1024>}]} {
    %c0 = arith.constant 0 : index
    %c0_0 = arith.constant 0 : index
    %0 = vector.load %arg1[%c0, %c0_0] : memref<8x1024xf32, #tpu.memory_space<vmem>>, vector<8x1024xf32>
    %c0_1 = arith.constant 0 : index
    %c0_2 = arith.constant 0 : index
    %1 = vector.load %arg2[%c0_1, %c0_2] : memref<1024x128xbf16, #tpu.memory_space<vmem>>, vector<1024x128xbf16>
    %c0_3 = arith.constant 0 : index
    %c0_4 = arith.constant 0 : index
    %2 = vector.load %arg3[%c0_3, %c0_4] : memref<1x128xf32, #tpu.memory_space<vmem>>, vector<1x128xf32>
    %3 = arith.truncf %0 : vector<8x1024xf32> to vector<8x1024xbf16>
    %cst = arith.constant dense<0.000000e+00> : vector<8x128xf32>
    %4 = tpu.matmul %3, %1, %cst {dimension_numbers = #tpu.dot_dimension_numbers<[1], [0], [0], [1], [0, 0, 1, 1], [], []>} : vector<8x1024xbf16>, vector<1024x128xbf16>, vector<8x128xf32> -> vector<8x128xf32>
    %5 = vector.broadcast %2 : vector<1x128xf32> to vector<8x128xf32>
    %6 = arith.addf %4, %5 : vector<8x128xf32>
    %cst_5 = arith.constant 0.000000e+00 : f32
    %7 = vector.broadcast %cst_5 : f32 to vector<8x128xf32>
    %8 = arith.maximumf %6, %7 : vector<8x128xf32>
    %c0_6 = arith.constant 0 : index
    %c0_7 = arith.constant 0 : index
    %9 = vector.load %arg4[%c0_6, %c0_7] : memref<128x128xbf16, #tpu.memory_space<vmem>>, vector<128x128xbf16>
    %c0_8 = arith.constant 0 : index
    %c0_9 = arith.constant 0 : index
    %10 = vector.load %arg5[%c0_8, %c0_9] : memref<1x128xf32, #tpu.memory_space<vmem>>, vector<1x128xf32>
    %11 = arith.truncf %8 : vector<8x128xf32> to vector<8x128xbf16>
    %cst_10 = arith.constant dense<0.000000e+00> : vector<8x128xf32>
    %12 = tpu.matmul %11, %9, %cst_10 {dimension_numbers = #tpu.dot_dimension_numbers<[1], [0], [0], [1], [0, 0, 1, 1], [], []>} : vector<8x128xbf16>, vector<128x128xbf16>, vector<8x128xf32> -> vector<8x128xf32>
    %13 = vector.broadcast %10 : vector<1x128xf32> to vector<8x128xf32>
    %14 = arith.addf %12, %13 : vector<8x128xf32>
    %cst_11 = arith.constant 0.000000e+00 : f32
    %15 = vector.broadcast %cst_11 : f32 to vector<8x128xf32>
    %16 = arith.maximumf %14, %15 : vector<8x128xf32>
    %c0_12 = arith.constant 0 : index
    %c0_13 = arith.constant 0 : index
    %17 = vector.load %arg6[%c0_12, %c0_13] : memref<128x128xbf16, #tpu.memory_space<vmem>>, vector<128x128xbf16>
    %c0_14 = arith.constant 0 : index
    %c0_15 = arith.constant 0 : index
    %18 = vector.load %arg7[%c0_14, %c0_15] : memref<1x128xf32, #tpu.memory_space<vmem>>, vector<1x128xf32>
    %19 = arith.truncf %16 : vector<8x128xf32> to vector<8x128xbf16>
    %cst_16 = arith.constant dense<0.000000e+00> : vector<8x128xf32>
    %20 = tpu.matmul %19, %17, %cst_16 {dimension_numbers = #tpu.dot_dimension_numbers<[1], [0], [0], [1], [0, 0, 1, 1], [], []>} : vector<8x128xbf16>, vector<128x128xbf16>, vector<8x128xf32> -> vector<8x128xf32>
    %21 = vector.broadcast %18 : vector<1x128xf32> to vector<8x128xf32>
    %22 = arith.addf %20, %21 : vector<8x128xf32>
    %cst_17 = arith.constant 0.000000e+00 : f32
    %23 = vector.broadcast %cst_17 : f32 to vector<8x128xf32>
    %24 = arith.maximumf %22, %23 : vector<8x128xf32>
    %c0_18 = arith.constant 0 : index
    %c0_19 = arith.constant 0 : index
    %25 = vector.load %arg8[%c0_18, %c0_19] : memref<128x128xbf16, #tpu.memory_space<vmem>>, vector<128x128xbf16>
    %c0_20 = arith.constant 0 : index
    %c0_21 = arith.constant 0 : index
    %26 = vector.load %arg9[%c0_20, %c0_21] : memref<1x128xf32, #tpu.memory_space<vmem>>, vector<1x128xf32>
    %27 = arith.truncf %24 : vector<8x128xf32> to vector<8x128xbf16>
    %cst_22 = arith.constant dense<0.000000e+00> : vector<8x128xf32>
    %28 = tpu.matmul %27, %25, %cst_22 {dimension_numbers = #tpu.dot_dimension_numbers<[1], [0], [0], [1], [0, 0, 1, 1], [], []>} : vector<8x128xbf16>, vector<128x128xbf16>, vector<8x128xf32> -> vector<8x128xf32>
    %29 = vector.broadcast %26 : vector<1x128xf32> to vector<8x128xf32>
    %30 = arith.addf %28, %29 : vector<8x128xf32>
    %cst_23 = arith.constant 0.000000e+00 : f32
    %31 = vector.broadcast %cst_23 : f32 to vector<8x128xf32>
    %32 = arith.maximumf %30, %31 : vector<8x128xf32>
    %c0_24 = arith.constant 0 : index
    %c0_25 = arith.constant 0 : index
    %33 = vector.load %arg10[%c0_24, %c0_25] : memref<128x128xbf16, #tpu.memory_space<vmem>>, vector<128x128xbf16>
    %c0_26 = arith.constant 0 : index
    %c0_27 = arith.constant 0 : index
    %34 = vector.load %arg11[%c0_26, %c0_27] : memref<1x128xf32, #tpu.memory_space<vmem>>, vector<1x128xf32>
    %35 = arith.truncf %32 : vector<8x128xf32> to vector<8x128xbf16>
    %cst_28 = arith.constant dense<0.000000e+00> : vector<8x128xf32>
    %36 = tpu.matmul %35, %33, %cst_28 {dimension_numbers = #tpu.dot_dimension_numbers<[1], [0], [0], [1], [0, 0, 1, 1], [], []>} : vector<8x128xbf16>, vector<128x128xbf16>, vector<8x128xf32> -> vector<8x128xf32>
    %37 = vector.broadcast %34 : vector<1x128xf32> to vector<8x128xf32>
    %38 = arith.addf %36, %37 : vector<8x128xf32>
    %cst_29 = arith.constant 0.000000e+00 : f32
    %39 = vector.broadcast %cst_29 : f32 to vector<8x128xf32>
    %40 = arith.maximumf %38, %39 : vector<8x128xf32>
    %c0_30 = arith.constant 0 : index
    %c0_31 = arith.constant 0 : index
    %41 = vector.load %arg12[%c0_30, %c0_31] : memref<128x128xbf16, #tpu.memory_space<vmem>>, vector<128x128xbf16>
    %c0_32 = arith.constant 0 : index
    %c0_33 = arith.constant 0 : index
    %42 = vector.load %arg13[%c0_32, %c0_33] : memref<1x128xf32, #tpu.memory_space<vmem>>, vector<1x128xf32>
    %43 = arith.truncf %40 : vector<8x128xf32> to vector<8x128xbf16>
    %cst_34 = arith.constant dense<0.000000e+00> : vector<8x128xf32>
    %44 = tpu.matmul %43, %41, %cst_34 {dimension_numbers = #tpu.dot_dimension_numbers<[1], [0], [0], [1], [0, 0, 1, 1], [], []>} : vector<8x128xbf16>, vector<128x128xbf16>, vector<8x128xf32> -> vector<8x128xf32>
    %45 = vector.broadcast %42 : vector<1x128xf32> to vector<8x128xf32>
    %46 = arith.addf %44, %45 : vector<8x128xf32>
    %cst_35 = arith.constant 0.000000e+00 : f32
    %47 = vector.broadcast %cst_35 : f32 to vector<8x128xf32>
    %48 = arith.maximumf %46, %47 : vector<8x128xf32>
    %c0_36 = arith.constant 0 : index
    %c0_37 = arith.constant 0 : index
    %49 = vector.load %arg14[%c0_36, %c0_37] : memref<128x128xbf16, #tpu.memory_space<vmem>>, vector<128x128xbf16>
    %c0_38 = arith.constant 0 : index
    %c0_39 = arith.constant 0 : index
    %50 = vector.load %arg15[%c0_38, %c0_39] : memref<1x128xf32, #tpu.memory_space<vmem>>, vector<1x128xf32>
    %51 = arith.truncf %48 : vector<8x128xf32> to vector<8x128xbf16>
    %cst_40 = arith.constant dense<0.000000e+00> : vector<8x128xf32>
    %52 = tpu.matmul %51, %49, %cst_40 {dimension_numbers = #tpu.dot_dimension_numbers<[1], [0], [0], [1], [0, 0, 1, 1], [], []>} : vector<8x128xbf16>, vector<128x128xbf16>, vector<8x128xf32> -> vector<8x128xf32>
    %53 = vector.broadcast %50 : vector<1x128xf32> to vector<8x128xf32>
    %54 = arith.addf %52, %53 : vector<8x128xf32>
    %cst_41 = arith.constant 0.000000e+00 : f32
    %55 = vector.broadcast %cst_41 : f32 to vector<8x128xf32>
    %56 = arith.maximumf %54, %55 : vector<8x128xf32>
    %c0_42 = arith.constant 0 : index
    %c0_43 = arith.constant 0 : index
    %57 = vector.load %arg16[%c0_42, %c0_43] : memref<128x128xbf16, #tpu.memory_space<vmem>>, vector<128x128xbf16>
    %c0_44 = arith.constant 0 : index
    %c0_45 = arith.constant 0 : index
    %58 = vector.load %arg17[%c0_44, %c0_45] : memref<1x128xf32, #tpu.memory_space<vmem>>, vector<1x128xf32>
    %59 = arith.truncf %56 : vector<8x128xf32> to vector<8x128xbf16>
    %cst_46 = arith.constant dense<0.000000e+00> : vector<8x128xf32>
    %60 = tpu.matmul %59, %57, %cst_46 {dimension_numbers = #tpu.dot_dimension_numbers<[1], [0], [0], [1], [0, 0, 1, 1], [], []>} : vector<8x128xbf16>, vector<128x128xbf16>, vector<8x128xf32> -> vector<8x128xf32>
    %61 = vector.broadcast %58 : vector<1x128xf32> to vector<8x128xf32>
    %62 = arith.addf %60, %61 : vector<8x128xf32>
    %cst_47 = arith.constant 0.000000e+00 : f32
    %63 = vector.broadcast %cst_47 : f32 to vector<8x128xf32>
    %64 = arith.maximumf %62, %63 : vector<8x128xf32>
    %c0_48 = arith.constant 0 : index
    %c0_49 = arith.constant 0 : index
    %65 = vector.load %arg18[%c0_48, %c0_49] : memref<128x1024xbf16, #tpu.memory_space<vmem>>, vector<128x1024xbf16>
    %c0_50 = arith.constant 0 : index
    %c0_51 = arith.constant 0 : index
    %66 = vector.load %arg19[%c0_50, %c0_51] : memref<1x1024xf32, #tpu.memory_space<vmem>>, vector<1x1024xf32>
    %67 = arith.truncf %64 : vector<8x128xf32> to vector<8x128xbf16>
    %cst_52 = arith.constant dense<0.000000e+00> : vector<8x1024xf32>
    %68 = tpu.matmul %67, %65, %cst_52 {dimension_numbers = #tpu.dot_dimension_numbers<[1], [0], [0], [1], [0, 0, 1, 1], [], []>} : vector<8x128xbf16>, vector<128x1024xbf16>, vector<8x1024xf32> -> vector<8x1024xf32>
    %69 = vector.broadcast %66 : vector<1x1024xf32> to vector<8x1024xf32>
    %70 = arith.addf %68, %69 : vector<8x1024xf32>
    %71 = arith.negf %70 : vector<8x1024xf32>
    %72 = math.exp %71 : vector<8x1024xf32>
    %cst_53 = arith.constant 1.000000e+00 : f32
    %73 = vector.broadcast %cst_53 : f32 to vector<8x1024xf32>
    %74 = arith.addf %73, %72 : vector<8x1024xf32>
    %75 = arith.divf %73, %74 : vector<8x1024xf32>
    %c0_54 = arith.constant 0 : index
    %c0_55 = arith.constant 0 : index
    %76 = vector.load %arg20[%c0_54, %c0_55] : memref<8x1024xf32, #tpu.memory_space<vmem>>, vector<8x1024xf32>
    tpu.vector_store %arg20[%c0_54, %c0_55], %75 {strides = array<i32>} : memref<8x1024xf32, #tpu.memory_space<vmem>>, vector<8x1024xf32>,
    return
  }
  func.func @transform_0(%arg0: i32) -> (i32, i32) {
    %c0_i32 = arith.constant 0 : i32
    %c0_i32_0 = arith.constant 0 : i32
    return %arg0, %c0_i32 : i32, i32
  }
  func.func @transform_1(%arg0: i32) -> (i32, i32) {
    %c0_i32 = arith.constant 0 : i32
    %c0_i32_0 = arith.constant 0 : i32
    %c0_i32_1 = arith.constant 0 : i32
    return %c0_i32, %c0_i32_0 : i32, i32
  }
  func.func @transform_2(%arg0: i32) -> (i32, i32) {
    %c0_i32 = arith.constant 0 : i32
    %c0_i32_0 = arith.constant 0 : i32
    %c0_i32_1 = arith.constant 0 : i32
    return %c0_i32, %c0_i32_0 : i32, i32
  }
  func.func @transform_3(%arg0: i32) -> (i32, i32) {
    %c0_i32 = arith.constant 0 : i32
    %c0_i32_0 = arith.constant 0 : i32
    %c0_i32_1 = arith.constant 0 : i32
    return %c0_i32, %c0_i32_0 : i32, i32
  }
  func.func @transform_4(%arg0: i32) -> (i32, i32) {
    %c0_i32 = arith.constant 0 : i32
    %c0_i32_0 = arith.constant 0 : i32
    %c0_i32_1 = arith.constant 0 : i32
    return %c0_i32, %c0_i32_0 : i32, i32
  }
  func.func @transform_5(%arg0: i32) -> (i32, i32) {
    %c0_i32 = arith.constant 0 : i32
    %c0_i32_0 = arith.constant 0 : i32
    %c0_i32_1 = arith.constant 0 : i32
    return %c0_i32, %c0_i32_0 : i32, i32
  }
  func.func @transform_6(%arg0: i32) -> (i32, i32) {
    %c0_i32 = arith.constant 0 : i32
    %c0_i32_0 = arith.constant 0 : i32
    %c0_i32_1 = arith.constant 0 : i32
    return %c0_i32, %c0_i32_0 : i32, i32
  }
  func.func @transform_7(%arg0: i32) -> (i32, i32) {
    %c0_i32 = arith.constant 0 : i32
    %c0_i32_0 = arith.constant 0 : i32
    %c0_i32_1 = arith.constant 0 : i32
    return %c0_i32, %c0_i32_0 : i32, i32
  }
  func.func @transform_8(%arg0: i32) -> (i32, i32) {
    %c0_i32 = arith.constant 0 : i32
    %c0_i32_0 = arith.constant 0 : i32
    %c0_i32_1 = arith.constant 0 : i32
    return %c0_i32, %c0_i32_0 : i32, i32
  }
  func.func @transform_9(%arg0: i32) -> (i32, i32) {
    %c0_i32 = arith.constant 0 : i32
    %c0_i32_0 = arith.constant 0 : i32
    %c0_i32_1 = arith.constant 0 : i32
    return %c0_i32, %c0_i32_0 : i32, i32
  }
  func.func @transform_10(%arg0: i32) -> (i32, i32) {
    %c0_i32 = arith.constant 0 : i32
    %c0_i32_0 = arith.constant 0 : i32
    %c0_i32_1 = arith.constant 0 : i32
    return %c0_i32, %c0_i32_0 : i32, i32
  }
  func.func @transform_11(%arg0: i32) -> (i32, i32) {
    %c0_i32 = arith.constant 0 : i32
    %c0_i32_0 = arith.constant 0 : i32
    %c0_i32_1 = arith.constant 0 : i32
    return %c0_i32, %c0_i32_0 : i32, i32
  }
  func.func @transform_12(%arg0: i32) -> (i32, i32) {
    %c0_i32 = arith.constant 0 : i32
    %c0_i32_0 = arith.constant 0 : i32
    %c0_i32_1 = arith.constant 0 : i32
    return %c0_i32, %c0_i32_0 : i32, i32
  }
  func.func @transform_13(%arg0: i32) -> (i32, i32) {
    %c0_i32 = arith.constant 0 : i32
    %c0_i32_0 = arith.constant 0 : i32
    %c0_i32_1 = arith.constant 0 : i32
    return %c0_i32, %c0_i32_0 : i32, i32
  }
  func.func @transform_14(%arg0: i32) -> (i32, i32) {
    %c0_i32 = arith.constant 0 : i32
    %c0_i32_0 = arith.constant 0 : i32
    %c0_i32_1 = arith.constant 0 : i32
    return %c0_i32, %c0_i32_0 : i32, i32
  }
  func.func @transform_15(%arg0: i32) -> (i32, i32) {
    %c0_i32 = arith.constant 0 : i32
    %c0_i32_0 = arith.constant 0 : i32
    %c0_i32_1 = arith.constant 0 : i32
    return %c0_i32, %c0_i32_0 : i32, i32
  }
  func.func @transform_16(%arg0: i32) -> (i32, i32) {
    %c0_i32 = arith.constant 0 : i32
    %c0_i32_0 = arith.constant 0 : i32
    %c0_i32_1 = arith.constant 0 : i32
    return %c0_i32, %c0_i32_0 : i32, i32
  }
  func.func @transform_17(%arg0: i32) -> (i32, i32) {
    %c0_i32 = arith.constant 0 : i32
    %c0_i32_0 = arith.constant 0 : i32
    %c0_i32_1 = arith.constant 0 : i32
    return %c0_i32, %c0_i32_0 : i32, i32
  }
  func.func @transform_18(%arg0: i32) -> (i32, i32) {
    %c0_i32 = arith.constant 0 : i32
    %c0_i32_0 = arith.constant 0 : i32
    %c0_i32_1 = arith.constant 0 : i32
    return %c0_i32, %c0_i32_0 : i32, i32
  }
  func.func @transform_19(%arg0: i32) -> (i32, i32) {
    %c0_i32 = arith.constant 0 : i32
    %c0_i32_0 = arith.constant 0 : i32
    return %arg0, %c0_i32 : i32, i32
  }
}

</mosaic_0001>

<llo_original>
// kernel: tpu_custom_call.1
$region0: #{tpu_custom_call.1}
  #allocation0 [shape = 'u32[]', space=smem, size = 0x4, offset = 0x4, fixed_abs, tag = 'smem constant byte address 0x4 - core index']
  #allocation1 [shape = 'u32[144,128]{1,0:T(1,128)}', space=vmem, size = 0x12000, scoped, tag = 'internal scratch']
  %s0 = inlined_call_operand.hbm [shape: f32[12,1024], index: 0, kind: input, shape index: {}]
  %s1 = inlined_call_operand.hbm [shape: bf16[1024,128], index: 1, kind: input, shape index: {}]
  %s2 = inlined_call_operand.vmem [shape: f32[1,128], index: 2, kind: input, shape index: {}]
  %s3 = inlined_call_operand.hbm [shape: bf16[128,128], index: 3, kind: input, shape index: {}]
  %s4 = inlined_call_operand.vmem [shape: f32[1,128], index: 4, kind: input, shape index: {}]
  %s5 = inlined_call_operand.hbm [shape: bf16[128,128], index: 5, kind: input, shape index: {}]
  %s6 = inlined_call_operand.vmem [shape: f32[1,128], index: 6, kind: input, shape index: {}]
  %s7 = inlined_call_operand.hbm [shape: bf16[128,128], index: 7, kind: input, shape index: {}]
  %s8 = inlined_call_operand.vmem [shape: f32[1,128], index: 8, kind: input, shape index: {}]
  %s9 = inlined_call_operand.hbm [shape: bf16[128,128], index: 9, kind: input, shape index: {}]
  %s10 = inlined_call_operand.vmem [shape: f32[1,128], index: 10, kind: input, shape index: {}]
  %s11 = inlined_call_operand.hbm [shape: bf16[128,128], index: 11, kind: input, shape index: {}]
  %s12 = inlined_call_operand.vmem [shape: f32[1,128], index: 12, kind: input, shape index: {}]
  %s13 = inlined_call_operand.hbm [shape: bf16[128,128], index: 13, kind: input, shape index: {}]
  %s14 = inlined_call_operand.vmem [shape: f32[1,128], index: 14, kind: input, shape index: {}]
  %s15 = inlined_call_operand.hbm [shape: bf16[128,128], index: 15, kind: input, shape index: {}]
  %s16 = inlined_call_operand.vmem [shape: f32[1,128], index: 16, kind: input, shape index: {}]
  %s17 = inlined_call_operand.hbm [shape: bf16[128,1024], index: 17, kind: input, shape index: {}]
  %s18 = inlined_call_operand.vmem [shape: f32[1,1024], index: 18, kind: input, shape index: {}]
  %s19 = inlined_call_operand.hbm [shape: f32[12,1024], index: 19, kind: output, shape index: {}]
  %s20 = sld [smem:[#allocation0]]
  $region149: #{tpu_custom_call.1} parent=0
    _
  %s22 = ssub.s32 1, %s20
  %s23 = scalar_select 0, %s22, %s20
  $region1: #{tpu_custom_call.1} parent=0
    #allocation2 [shape = 'u8[65536]{0}', space=vmem, size = 0x10000, scoped, tag = 'input window, operand 0']
    #allocation3 [shape = 's32[2]{0}', space=sflag, size = 0x8, scoped, tag = 'scoped memory for tpu_custom_call.1']
    #allocation4 [shape = 's32[2]{0}', space=sflag, size = 0x8, scoped, tag = 'scoped memory for tpu_custom_call.1']
    #allocation5 [shape = 'u8[262144]{0}', space=vmem, size = 0x40000, scoped, tag = 'input window, operand 1, single buffered']
    #allocation6 [shape = 's32[1]{0}', space=sflag, size = 0x4, scoped, tag = 'scoped memory for tpu_custom_call.1']
    #allocation7 [shape = 'u8[32768]{0}', space=vmem, size = 0x8000, scoped, tag = 'input window, operand 3, single buffered']
    #allocation8 [shape = 'u8[32768]{0}', space=vmem, size = 0x8000, scoped, tag = 'input window, operand 5, single buffered']
    #allocation9 [shape = 's32[1]{0}', space=sflag, size = 0x4, scoped, tag = 'scoped memory for tpu_custom_call.1']
    #allocation10 [shape = 'u8[32768]{0}', space=vmem, size = 0x8000, scoped, tag = 'input window, operand 7, single buffered']
    #allocation11 [shape = 'u8[32768]{0}', space=vmem, size = 0x8000, scoped, tag = 'input window, operand 9, single buffered']
    #allocation12 [shape = 's32[1]{0}', space=sflag, size = 0x4, scoped, tag = 'scoped memory for tpu_custom_call.1']
    #allocation13 [shape = 'u8[32768]{0}', space=vmem, size = 0x8000, scoped, tag = 'input window, operand 11, single buffered']
    #allocation14 [shape = 'u8[32768]{0}', space=vmem, size = 0x8000, scoped, tag = 'input window, operand 13, single buffered']
    #allocation15 [shape = 's32[1]{0}', space=sflag, size = 0x4, scoped, tag = 'scoped memory for tpu_custom_call.1']
    #allocation16 [shape = 'u8[32768]{0}', space=vmem, size = 0x8000, scoped, tag = 'input window, operand 15, single buffered']
    #allocation17 [shape = 'u8[262144]{0}', space=vmem, size = 0x40000, scoped, tag = 'input window, operand 17, single buffered']
    #allocation18 [shape = 's32[1]{0}', space=sflag, size = 0x4, scoped, tag = 'scoped memory for tpu_custom_call.1']
    #allocation19 [shape = 'u8[65536]{0}', space=vmem, size = 0x10000, scoped, tag = 'output window, operand 0']
    %24 = vsyncpa [#allocation3], 0
    %s25 = scalar_lea.sflag [#allocation3], 1
    %26 = vsyncpa %s25, 0
    %27 = vsyncpa [#allocation6], 0
    %28 = vsyncpa [#allocation9], 0
    %29 = vsyncpa [#allocation12], 0
    %30 = vsyncpa [#allocation15], 0
    %31 = vsyncpa [#allocation18], 0
    %32 = vsyncpa [#allocation4], 0
    %s33 = scalar_lea.sflag [#allocation4], 1
    %34 = vsyncpa %s33, 0
    loop: start=0, step=1, limit=4
    $region2: #{tpu_custom_call.1} parent=1 // loop_pre_header
      _
    $region3: #{tpu_custom_call.1} parent=1 // loop_header
      %s36 = sphi 0, %s40
      %p37 = scmp.ge.s32.totalorder %s36, 4
      %s46 = sphi 0, %s48
      %s49 = sphi 0, %s46
      %s50 = sphi 0, %s49
      %s66 = sphi 0, %s50
      %s70 = sphi 0, %s70
      %s72 = sphi 0, %s70
      %s73 = sphi 0, %s72
      %s87 = sphi 0, %s73
      %s91 = sphi 0, %s91
      %s93 = sphi 0, %s91
      %s94 = sphi 0, %s93
      %s108 = sphi 0, %s94
      %s112 = sphi 0, %s112
      %s114 = sphi 0, %s112
      %s115 = sphi 0, %s114
      %s129 = sphi 0, %s115
      %s133 = sphi 0, %s133
      %s135 = sphi 0, %s133
      %s136 = sphi 0, %s135
      %s150 = sphi 0, %s136
      %s154 = sphi 0, %s154
      %s156 = sphi 0, %s154
      %s157 = sphi 0, %s156
      %s171 = sphi 0, %s157
      %s175 = sphi 0, %s175
      %s177 = sphi 0, %s175
      %s178 = sphi 0, %s177
      %s192 = sphi 0, %s178
      %s196 = sphi 0, %s196
      %s198 = sphi 0, %s196
      %s199 = sphi 0, %s198
      %s213 = sphi 0, %s199
      %s217 = sphi 0, %s217
      %s219 = sphi 0, %s217
      %s220 = sphi 0, %s219
      %s234 = sphi 0, %s220
      %s238 = sphi 0, %s238
      %s240 = sphi 0, %s238
      %s241 = sphi 0, %s240
      %s255 = sphi 0, %s241
      %s259 = sphi 0, %s259
      %s261 = sphi 0, %s259
      %s262 = sphi 0, %s261
      %s276 = sphi 0, %s262
      %s280 = sphi 0, %s280
      %s282 = sphi 0, %s280
      %s283 = sphi 0, %s282
      %s297 = sphi 0, %s283
      %s301 = sphi 0, %s301
      %s303 = sphi 0, %s301
      %s304 = sphi 0, %s303
      %s318 = sphi 0, %s304
      %s322 = sphi 0, %s322
      %s324 = sphi 0, %s322
      %s325 = sphi 0, %s324
      %s339 = sphi 0, %s325
      %s343 = sphi 0, %s343
      %s345 = sphi 0, %s343
      %s346 = sphi 0, %s345
      %s360 = sphi 0, %s346
      %s364 = sphi 0, %s364
      %s366 = sphi 0, %s364
      %s367 = sphi 0, %s366
      %s381 = sphi 0, %s367
      %s385 = sphi 0, %s385
      %s387 = sphi 0, %s385
      %s388 = sphi 0, %s387
      %s402 = sphi 0, %s388
      %s406 = sphi 0, %s406
      %s408 = sphi 0, %s406
      %s409 = sphi 0, %s408
      %s423 = sphi 0, %s409
      %s427 = sphi 0, %s427
      %s429 = sphi 0, %s427
      %s430 = sphi 0, %s429
      %s444 = sphi 0, %s430
      %s450 = sphi 0, %s452
      %s453 = sphi 0, %s450
      %s454 = sphi 0, %s453
      %s470 = sphi 0, %s454
    $region4: #{tpu_custom_call.1} parent=1 // loop_header_branch
      %39 = sbr.rel (%p37) target = $region8
    $region5: #{tpu_custom_call.1} parent=1 // loop_body
      %s41 = ssub.s32 %s36, 1
      %s42 = ssub.s32 %s36, 2
      %s43 = sadd.s32 %s36, 1
      %s44 = ssub.s32 %s36, %s43
      %p45 = scmp.eq.s32.totalorder %s44, 0
      %s47 = sadd.s32 %s46, 1
      %s48 = scalar_select %p45, %s46, %s47
      %p51 = pneg %p45
      %p52 = scmp.eq.s32.totalorder %s36, 1
      %p53 = por %p51, %p52
      %p54 = scmp.ne.s32.totalorder %s46, %s49
      %p55 = scmp.eq.s32.totalorder %s36, 0
      %p56 = por %p54, %p55
      %p57 = scmp.ne.s32.totalorder %s46, %s49
      %p58 = scmp.eq.s32.totalorder %s41, 1
      %p59 = por %p57, %p58
      %p60 = scmp.ne.s32.totalorder %s49, %s50
      %p61 = scmp.eq.s32.totalorder %s41, 0
      %p62 = por %p60, %p61
      %p63 = scmp.ne.s32.totalorder %s49, %s50
      %p64 = scmp.eq.s32.totalorder %s42, 1
      %p65 = por %p63, %p64
      %p67 = scmp.ne.s32.totalorder %s50, %s66
      %p68 = scmp.eq.s32.totalorder %s42, 0
      %p69 = por %p67, %p68
      %s71 = sadd.s32 %s70, 1
      %p74 = scmp.eq.s32.totalorder %s36, 1
      %p75 = scmp.ne.s32.totalorder %s70, %s72
      %p76 = scmp.eq.s32.totalorder %s36, 0
      %p77 = por %p75, %p76
      %p78 = scmp.ne.s32.totalorder %s70, %s72
      %p79 = scmp.eq.s32.totalorder %s41, 1
      %p80 = por %p78, %p79
      %p81 = scmp.ne.s32.totalorder %s72, %s73
      %p82 = scmp.eq.s32.totalorder %s41, 0
      %p83 = por %p81, %p82
      %p84 = scmp.ne.s32.totalorder %s72, %s73
      %p85 = scmp.eq.s32.totalorder %s42, 1
      %p86 = por %p84, %p85
      %p88 = scmp.ne.s32.totalorder %s73, %s87
      %p89 = scmp.eq.s32.totalorder %s42, 0
      %p90 = por %p88, %p89
      %s92 = sadd.s32 %s91, 1
      %p95 = scmp.eq.s32.totalorder %s36, 1
      %p96 = scmp.ne.s32.totalorder %s91, %s93
      %p97 = scmp.eq.s32.totalorder %s36, 0
      %p98 = por %p96, %p97
      %p99 = scmp.ne.s32.totalorder %s91, %s93
      %p100 = scmp.eq.s32.totalorder %s41, 1
      %p101 = por %p99, %p100
      %p102 = scmp.ne.s32.totalorder %s93, %s94
      %p103 = scmp.eq.s32.totalorder %s41, 0
      %p104 = por %p102, %p103
      %p105 = scmp.ne.s32.totalorder %s93, %s94
      %p106 = scmp.eq.s32.totalorder %s42, 1
      %p107 = por %p105, %p106
      %p109 = scmp.ne.s32.totalorder %s94, %s108
      %p110 = scmp.eq.s32.totalorder %s42, 0
      %p111 = por %p109, %p110
      %s113 = sadd.s32 %s112, 1
      %p116 = scmp.eq.s32.totalorder %s36, 1
      %p117 = scmp.ne.s32.totalorder %s112, %s114
      %p118 = scmp.eq.s32.totalorder %s36, 0
      %p119 = por %p117, %p118
      %p120 = scmp.ne.s32.totalorder %s112, %s114
      %p121 = scmp.eq.s32.totalorder %s41, 1
      %p122 = por %p120, %p121
      %p123 = scmp.ne.s32.totalorder %s114, %s115
      %p124 = scmp.eq.s32.totalorder %s41, 0
      %p125 = por %p123, %p124
      %p126 = scmp.ne.s32.totalorder %s114, %s115
      %p127 = scmp.eq.s32.totalorder %s42, 1
      %p128 = por %p126, %p127
      %p130 = scmp.ne.s32.totalorder %s115, %s129
      %p131 = scmp.eq.s32.totalorder %s42, 0
      %p132 = por %p130, %p131
      %s134 = sadd.s32 %s133, 1
      %p137 = scmp.eq.s32.totalorder %s36, 1
      %p138 = scmp.ne.s32.totalorder %s133, %s135
      %p139 = scmp.eq.s32.totalorder %s36, 0
      %p140 = por %p138, %p139
      %p141 = scmp.ne.s32.totalorder %s133, %s135
      %p142 = scmp.eq.s32.totalorder %s41, 1
      %p143 = por %p141, %p142
      %p144 = scmp.ne.s32.totalorder %s135, %s136
      %p145 = scmp.eq.s32.totalorder %s41, 0
      %p146 = por %p144, %p145
      %p147 = scmp.ne.s32.totalorder %s135, %s136
      %p148 = scmp.eq.s32.totalorder %s42, 1
      %p149 = por %p147, %p148
      %p151 = scmp.ne.s32.totalorder %s136, %s150
      %p152 = scmp.eq.s32.totalorder %s42, 0
      %p153 = por %p151, %p152
      %s155 = sadd.s32 %s154, 1
      %p158 = scmp.eq.s32.totalorder %s36, 1
      %p159 = scmp.ne.s32.totalorder %s154, %s156
      %p160 = scmp.eq.s32.totalorder %s36, 0
      %p161 = por %p159, %p160
      %p162 = scmp.ne.s32.totalorder %s154, %s156
      %p163 = scmp.eq.s32.totalorder %s41, 1
      %p164 = por %p162, %p163
      %p165 = scmp.ne.s32.totalorder %s156, %s157
      %p166 = scmp.eq.s32.totalorder %s41, 0
      %p167 = por %p165, %p166
      %p168 = scmp.ne.s32.totalorder %s156, %s157
      %p169 = scmp.eq.s32.totalorder %s42, 1
      %p170 = por %p168, %p169
      %p172 = scmp.ne.s32.totalorder %s157, %s171
      %p173 = scmp.eq.s32.totalorder %s42, 0
      %p174 = por %p172, %p173
      %s176 = sadd.s32 %s175, 1
      %p179 = scmp.eq.s32.totalorder %s36, 1
      %p180 = scmp.ne.s32.totalorder %s175, %s177
      %p181 = scmp.eq.s32.totalorder %s36, 0
      %p182 = por %p180, %p181
      %p183 = scmp.ne.s32.totalorder %s175, %s177
      %p184 = scmp.eq.s32.totalorder %s41, 1
      %p185 = por %p183, %p184
      %p186 = scmp.ne.s32.totalorder %s177, %s178
      %p187 = scmp.eq.s32.totalorder %s41, 0
      %p188 = por %p186, %p187
      %p189 = scmp.ne.s32.totalorder %s177, %s178
      %p190 = scmp.eq.s32.totalorder %s42, 1
      %p191 = por %p189, %p190
      %p193 = scmp.ne.s32.totalorder %s178, %s192
      %p194 = scmp.eq.s32.totalorder %s42, 0
      %p195 = por %p193, %p194
      %s197 = sadd.s32 %s196, 1
      %p200 = scmp.eq.s32.totalorder %s36, 1
      %p201 = scmp.ne.s32.totalorder %s196, %s198
      %p202 = scmp.eq.s32.totalorder %s36, 0
      %p203 = por %p201, %p202
      %p204 = scmp.ne.s32.totalorder %s196, %s198
      %p205 = scmp.eq.s32.totalorder %s41, 1
      %p206 = por %p204, %p205
      %p207 = scmp.ne.s32.totalorder %s198, %s199
      %p208 = scmp.eq.s32.totalorder %s41, 0
      %p209 = por %p207, %p208
      %p210 = scmp.ne.s32.totalorder %s198, %s199
      %p211 = scmp.eq.s32.totalorder %s42, 1
      %p212 = por %p210, %p211
      %p214 = scmp.ne.s32.totalorder %s199, %s213
      %p215 = scmp.eq.s32.totalorder %s42, 0
      %p216 = por %p214, %p215
      %s218 = sadd.s32 %s217, 1
      %p221 = scmp.eq.s32.totalorder %s36, 1
      %p222 = scmp.ne.s32.totalorder %s217, %s219
      %p223 = scmp.eq.s32.totalorder %s36, 0
      %p224 = por %p222, %p223
      %p225 = scmp.ne.s32.totalorder %s217, %s219
      %p226 = scmp.eq.s32.totalorder %s41, 1
      %p227 = por %p225, %p226
      %p228 = scmp.ne.s32.totalorder %s219, %s220
      %p229 = scmp.eq.s32.totalorder %s41, 0
      %p230 = por %p228, %p229
      %p231 = scmp.ne.s32.totalorder %s219, %s220
      %p232 = scmp.eq.s32.totalorder %s42, 1
      %p233 = por %p231, %p232
      %p235 = scmp.ne.s32.totalorder %s220, %s234
      %p236 = scmp.eq.s32.totalorder %s42, 0
      %p237 = por %p235, %p236
      %s239 = sadd.s32 %s238, 1
      %p242 = scmp.eq.s32.totalorder %s36, 1
      %p243 = scmp.ne.s32.totalorder %s238, %s240
      %p244 = scmp.eq.s32.totalorder %s36, 0
      %p245 = por %p243, %p244
      %p246 = scmp.ne.s32.totalorder %s238, %s240
      %p247 = scmp.eq.s32.totalorder %s41, 1
      %p248 = por %p246, %p247
      %p249 = scmp.ne.s32.totalorder %s240, %s241
      %p250 = scmp.eq.s32.totalorder %s41, 0
      %p251 = por %p249, %p250
      %p252 = scmp.ne.s32.totalorder %s240, %s241
      %p253 = scmp.eq.s32.totalorder %s42, 1
      %p254 = por %p252, %p253
      %p256 = scmp.ne.s32.totalorder %s241, %s255
      %p257 = scmp.eq.s32.totalorder %s42, 0
      %p258 = por %p256, %p257
      %s260 = sadd.s32 %s259, 1
      %p263 = scmp.eq.s32.totalorder %s36, 1
      %p264 = scmp.ne.s32.totalorder %s259, %s261
      %p265 = scmp.eq.s32.totalorder %s36, 0
      %p266 = por %p264, %p265
      %p267 = scmp.ne.s32.totalorder %s259, %s261
      %p268 = scmp.eq.s32.totalorder %s41, 1
      %p269 = por %p267, %p268
      %p270 = scmp.ne.s32.totalorder %s261, %s262
      %p271 = scmp.eq.s32.totalorder %s41, 0
      %p272 = por %p270, %p271
      %p273 = scmp.ne.s32.totalorder %s261, %s262
      %p274 = scmp.eq.s32.totalorder %s42, 1
      %p275 = por %p273, %p274
      %p277 = scmp.ne.s32.totalorder %s262, %s276
      %p278 = scmp.eq.s32.totalorder %s42, 0
      %p279 = por %p277, %p278
      %s281 = sadd.s32 %s280, 1
      %p284 = scmp.eq.s32.totalorder %s36, 1
      %p285 = scmp.ne.s32.totalorder %s280, %s282
      %p286 = scmp.eq.s32.totalorder %s36, 0
      %p287 = por %p285, %p286
      %p288 = scmp.ne.s32.totalorder %s280, %s282
      %p289 = scmp.eq.s32.totalorder %s41, 1
      %p290 = por %p288, %p289
      %p291 = scmp.ne.s32.totalorder %s282, %s283
      %p292 = scmp.eq.s32.totalorder %s41, 0
      %p293 = por %p291, %p292
      %p294 = scmp.ne.s32.totalorder %s282, %s283
      %p295 = scmp.eq.s32.totalorder %s42, 1
      %p296 = por %p294, %p295
      %p298 = scmp.ne.s32.totalorder %s283, %s297
      %p299 = scmp.eq.s32.totalorder %s42, 0
      %p300 = por %p298, %p299
      %s302 = sadd.s32 %s301, 1
      %p305 = scmp.eq.s32.totalorder %s36, 1
      %p306 = scmp.ne.s32.totalorder %s301, %s303
      %p307 = scmp.eq.s32.totalorder %s36, 0
      %p308 = por %p306, %p307
      %p309 = scmp.ne.s32.totalorder %s301, %s303
      %p310 = scmp.eq.s32.totalorder %s41, 1
      %p311 = por %p309, %p310
      %p312 = scmp.ne.s32.totalorder %s303, %s304
      %p313 = scmp.eq.s32.totalorder %s41, 0
      %p314 = por %p312, %p313
      %p315 = scmp.ne.s32.totalorder %s303, %s304
      %p316 = scmp.eq.s32.totalorder %s42, 1
      %p317 = por %p315, %p316
      %p319 = scmp.ne.s32.totalorder %s304, %s318
      %p320 = scmp.eq.s32.totalorder %s42, 0
      %p321 = por %p319, %p320
      %s323 = sadd.s32 %s322, 1
      %p326 = scmp.eq.s32.totalorder %s36, 1
      %p327 = scmp.ne.s32.totalorder %s322, %s324
      %p328 = scmp.eq.s32.totalorder %s36, 0
      %p329 = por %p327, %p328
      %p330 = scmp.ne.s32.totalorder %s322, %s324
      %p331 = scmp.eq.s32.totalorder %s41, 1
      %p332 = por %p330, %p331
      %p333 = scmp.ne.s32.totalorder %s324, %s325
      %p334 = scmp.eq.s32.totalorder %s41, 0
      %p335 = por %p333, %p334
      %p336 = scmp.ne.s32.totalorder %s324, %s325
      %p337 = scmp.eq.s32.totalorder %s42, 1
      %p338 = por %p336, %p337
      %p340 = scmp.ne.s32.totalorder %s325, %s339
      %p341 = scmp.eq.s32.totalorder %s42, 0
      %p342 = por %p340, %p341
      %s344 = sadd.s32 %s343, 1
      %p347 = scmp.eq.s32.totalorder %s36, 1
      %p348 = scmp.ne.s32.totalorder %s343, %s345
      %p349 = scmp.eq.s32.totalorder %s36, 0
      %p350 = por %p348, %p349
      %p351 = scmp.ne.s32.totalorder %s343, %s345
      %p352 = scmp.eq.s32.totalorder %s41, 1
      %p353 = por %p351, %p352
      %p354 = scmp.ne.s32.totalorder %s345, %s346
      %p355 = scmp.eq.s32.totalorder %s41, 0
      %p356 = por %p354, %p355
      %p357 = scmp.ne.s32.totalorder %s345, %s346
      %p358 = scmp.eq.s32.totalorder %s42, 1
      %p359 = por %p357, %p358
      %p361 = scmp.ne.s32.totalorder %s346, %s360
      %p362 = scmp.eq.s32.totalorder %s42, 0
      %p363 = por %p361, %p362
      %s365 = sadd.s32 %s364, 1
      %p368 = scmp.eq.s32.totalorder %s36, 1
      %p369 = scmp.ne.s32.totalorder %s364, %s366
      %p370 = scmp.eq.s32.totalorder %s36, 0
      %p371 = por %p369, %p370
      %p372 = scmp.ne.s32.totalorder %s364, %s366
      %p373 = scmp.eq.s32.totalorder %s41, 1
      %p374 = por %p372, %p373
      %p375 = scmp.ne.s32.totalorder %s366, %s367
      %p376 = scmp.eq.s32.totalorder %s41, 0
      %p377 = por %p375, %p376
      %p378 = scmp.ne.s32.totalorder %s366, %s367
      %p379 = scmp.eq.s32.totalorder %s42, 1
      %p380 = por %p378, %p379
      %p382 = scmp.ne.s32.totalorder %s367, %s381
      %p383 = scmp.eq.s32.totalorder %s42, 0
      %p384 = por %p382, %p383
      %s386 = sadd.s32 %s385, 1
      %p389 = scmp.eq.s32.totalorder %s36, 1
      %p390 = scmp.ne.s32.totalorder %s385, %s387
      %p391 = scmp.eq.s32.totalorder %s36, 0
      %p392 = por %p390, %p391
      %p393 = scmp.ne.s32.totalorder %s385, %s387
      %p394 = scmp.eq.s32.totalorder %s41, 1
      %p395 = por %p393, %p394
      %p396 = scmp.ne.s32.totalorder %s387, %s388
      %p397 = scmp.eq.s32.totalorder %s41, 0
      %p398 = por %p396, %p397
      %p399 = scmp.ne.s32.totalorder %s387, %s388
      %p400 = scmp.eq.s32.totalorder %s42, 1
      %p401 = por %p399, %p400
      %p403 = scmp.ne.s32.totalorder %s388, %s402
      %p404 = scmp.eq.s32.totalorder %s42, 0
      %p405 = por %p403, %p404
      %s407 = sadd.s32 %s406, 1
      %p410 = scmp.eq.s32.totalorder %s36, 1
      %p411 = scmp.ne.s32.totalorder %s406, %s408
      %p412 = scmp.eq.s32.totalorder %s36, 0
      %p413 = por %p411, %p412
      %p414 = scmp.ne.s32.totalorder %s406, %s408
      %p415 = scmp.eq.s32.totalorder %s41, 1
      %p416 = por %p414, %p415
      %p417 = scmp.ne.s32.totalorder %s408, %s409
      %p418 = scmp.eq.s32.totalorder %s41, 0
      %p419 = por %p417, %p418
      %p420 = scmp.ne.s32.totalorder %s408, %s409
      %p421 = scmp.eq.s32.totalorder %s42, 1
      %p422 = por %p420, %p421
      %p424 = scmp.ne.s32.totalorder %s409, %s423
      %p425 = scmp.eq.s32.totalorder %s42, 0
      %p426 = por %p424, %p425
      %s428 = sadd.s32 %s427, 1
      %p431 = scmp.eq.s32.totalorder %s36, 1
      %p432 = scmp.ne.s32.totalorder %s427, %s429
      %p433 = scmp.eq.s32.totalorder %s36, 0
      %p434 = por %p432, %p433
      %p435 = scmp.ne.s32.totalorder %s427, %s429
      %p436 = scmp.eq.s32.totalorder %s41, 1
      %p437 = por %p435, %p436
      %p438 = scmp.ne.s32.totalorder %s429, %s430
      %p439 = scmp.eq.s32.totalorder %s41, 0
      %p440 = por %p438, %p439
      %p441 = scmp.ne.s32.totalorder %s429, %s430
      %p442 = scmp.eq.s32.totalorder %s42, 1
      %p443 = por %p441, %p442
      %p445 = scmp.ne.s32.totalorder %s430, %s444
      %p446 = scmp.eq.s32.totalorder %s42, 0
      %p447 = por %p445, %p446
      %s448 = ssub.s32 %s36, %s43
      %p449 = scmp.eq.s32.totalorder %s448, 0
      %s451 = sadd.s32 %s450, 1
      %s452 = scalar_select %p449, %s450, %s451
      %p455 = pneg %p449
      %p456 = scmp.eq.s32.totalorder %s36, 1
      %p457 = por %p455, %p456
      %p458 = scmp.ne.s32.totalorder %s450, %s453
      %p459 = scmp.eq.s32.totalorder %s36, 0
      %p460 = por %p458, %p459
      %p461 = scmp.ne.s32.totalorder %s450, %s453
      %p462 = scmp.eq.s32.totalorder %s41, 1
      %p463 = por %p461, %p462
      %p464 = scmp.ne.s32.totalorder %s453, %s454
      %p465 = scmp.eq.s32.totalorder %s41, 0
      %p466 = por %p464, %p465
      %p467 = scmp.ne.s32.totalorder %s453, %s454
      %p468 = scmp.eq.s32.totalorder %s42, 1
      %p469 = por %p467, %p468
      %p471 = scmp.ne.s32.totalorder %s454, %s470
      %p472 = scmp.eq.s32.totalorder %s42, 0
      %p473 = por %p471, %p472
      %p474 = scmp.le.s32.totalorder 1, %s36
      %p475 = scmp.lt.s32.totalorder %s36, 3
      %p476 = pnand %p474, %p475
      %p477 = pneg %p476
      // Predicated region
      $region9: #{tpu_custom_call.1} parent=5 // pred_check
        _
      $region10: #{tpu_custom_call.1} parent=5 // pred_check_branch
        %479 = sbr.rel (%p476) target = $region12
      $region11: #{tpu_custom_call.1} parent=5 // pred_region
        %s480 = ssub.s32 %s36, 1
        // Predicated region
        $region13: #{tpu_custom_call.1} parent=11 // pred_check
          %p481 = pneg %p83
        $region14: #{tpu_custom_call.1} parent=11 // pred_check_branch
          %483 = sbr.rel (%p481) target = $region16
        $region15: #{tpu_custom_call.1} parent=11 // pred_region
          %s485 = ssub.s32 8192, 8192
          %486 = vsyncadd [#allocation6], %s485
          %s487 = sshll.u32 [#allocation5], 4
          %s488 = int_to_ptr.vmem [resolvable:$true] %s487
          %493 = dma.hbm_to_vmem [thread:$0]  %s1, 8192, %s488, [#allocation6], 64, 64, 4
        $region16: #{tpu_custom_call.1} parent=11 // pred_fallthru
          _
        // Predicated region
        $region17: #{tpu_custom_call.1} parent=11 // pred_check
          %p494 = pneg %p104
        $region18: #{tpu_custom_call.1} parent=11 // pred_check_branch
          %496 = sbr.rel (%p494) target = $region20
        $region19: #{tpu_custom_call.1} parent=11 // pred_region
          _
        $region20: #{tpu_custom_call.1} parent=11 // pred_fallthru
          _
        // Predicated region
        $region21: #{tpu_custom_call.1} parent=11 // pred_check
          %p497 = pneg %p125
        $region22: #{tpu_custom_call.1} parent=11 // pred_check_branch
          %499 = sbr.rel (%p497) target = $region24
        $region23: #{tpu_custom_call.1} parent=11 // pred_region
          %s501 = ssub.s32 1024, 1024
          %502 = vsyncadd [#allocation6], %s501
          %s503 = sshll.u32 [#allocation7], 4
          %s504 = int_to_ptr.vmem [resolvable:$true] %s503
          %509 = dma.hbm_to_vmem [thread:$0]  %s3, 1024, %s504, [#allocation6], 64, 64, 4
        $region24: #{tpu_custom_call.1} parent=11 // pred_fallthru
          _
        // Predicated region
        $region25: #{tpu_custom_call.1} parent=11 // pred_check
          %p510 = pneg %p146
        $region26: #{tpu_custom_call.1} parent=11 // pred_check_branch
          %512 = sbr.rel (%p510) target = $region28
        $region27: #{tpu_custom_call.1} parent=11 // pred_region
          _
        $region28: #{tpu_custom_call.1} parent=11 // pred_fallthru
          _
        // Predicated region
        $region29: #{tpu_custom_call.1} parent=11 // pred_check
          %p513 = pneg %p167
        $region30: #{tpu_custom_call.1} parent=11 // pred_check_branch
          %515 = sbr.rel (%p513) target = $region32
        $region31: #{tpu_custom_call.1} parent=11 // pred_region
          %s517 = ssub.s32 1024, 1024
          %518 = vsyncadd [#allocation9], %s517
          %s519 = sshll.u32 [#allocation8], 4
          %s520 = int_to_ptr.vmem [resolvable:$true] %s519
          %525 = dma.hbm_to_vmem [thread:$0]  %s5, 1024, %s520, [#allocation9], 64, 64, 4
        $region32: #{tpu_custom_call.1} parent=11 // pred_fallthru
          _
        // Predicated region
        $region33: #{tpu_custom_call.1} parent=11 // pred_check
          %p526 = pneg %p188
        $region34: #{tpu_custom_call.1} parent=11 // pred_check_branch
          %528 = sbr.rel (%p526) target = $region36
        $region35: #{tpu_custom_call.1} parent=11 // pred_region
          _
        $region36: #{tpu_custom_call.1} parent=11 // pred_fallthru
          _
        // Predicated region
        $region37: #{tpu_custom_call.1} parent=11 // pred_check
          %p529 = pneg %p209
        $region38: #{tpu_custom_call.1} parent=11 // pred_check_branch
          %531 = sbr.rel (%p529) target = $region40
        $region39: #{tpu_custom_call.1} parent=11 // pred_region
          %s533 = ssub.s32 1024, 1024
          %534 = vsyncadd [#allocation9], %s533
          %s535 = sshll.u32 [#allocation10], 4
          %s536 = int_to_ptr.vmem [resolvable:$true] %s535
          %541 = dma.hbm_to_vmem [thread:$0]  %s7, 1024, %s536, [#allocation9], 64, 64, 4
        $region40: #{tpu_custom_call.1} parent=11 // pred_fallthru
          _
        // Predicated region
        $region41: #{tpu_custom_call.1} parent=11 // pred_check
          %p542 = pneg %p230
        $region42: #{tpu_custom_call.1} parent=11 // pred_check_branch
          %544 = sbr.rel (%p542) target = $region44
        $region43: #{tpu_custom_call.1} parent=11 // pred_region
          _
        $region44: #{tpu_custom_call.1} parent=11 // pred_fallthru
          _
        // Predicated region
        $region45: #{tpu_custom_call.1} parent=11 // pred_check
          %p545 = pneg %p251
        $region46: #{tpu_custom_call.1} parent=11 // pred_check_branch
          %547 = sbr.rel (%p545) target = $region48
        $region47: #{tpu_custom_call.1} parent=11 // pred_region
          %s549 = ssub.s32 1024, 1024
          %550 = vsyncadd [#allocation12], %s549
          %s551 = sshll.u32 [#allocation11], 4
          %s552 = int_to_ptr.vmem [resolvable:$true] %s551
          %557 = dma.hbm_to_vmem [thread:$0]  %s9, 1024, %s552, [#allocation12], 64, 64, 4
        $region48: #{tpu_custom_call.1} parent=11 // pred_fallthru
          _
        // Predicated region
        $region49: #{tpu_custom_call.1} parent=11 // pred_check
          %p558 = pneg %p272
        $region50: #{tpu_custom_call.1} parent=11 // pred_check_branch
          %560 = sbr.rel (%p558) target = $region52
        $region51: #{tpu_custom_call.1} parent=11 // pred_region
          _
        $region52: #{tpu_custom_call.1} parent=11 // pred_fallthru
          _
        // Predicated region
        $region53: #{tpu_custom_call.1} parent=11 // pred_check
          %p561 = pneg %p293
        $region54: #{tpu_custom_call.1} parent=11 // pred_check_branch
          %563 = sbr.rel (%p561) target = $region56
        $region55: #{tpu_custom_call.1} parent=11 // pred_region
          %s565 = ssub.s32 1024, 1024
          %566 = vsyncadd [#allocation12], %s565
          %s567 = sshll.u32 [#allocation13], 4
          %s568 = int_to_ptr.vmem [resolvable:$true] %s567
          %573 = dma.hbm_to_vmem [thread:$0]  %s11, 1024, %s568, [#allocation12], 64, 64, 4
        $region56: #{tpu_custom_call.1} parent=11 // pred_fallthru
          _
        // Predicated region
        $region57: #{tpu_custom_call.1} parent=11 // pred_check
          %p574 = pneg %p314
        $region58: #{tpu_custom_call.1} parent=11 // pred_check_branch
          %576 = sbr.rel (%p574) target = $region60
        $region59: #{tpu_custom_call.1} parent=11 // pred_region
          _
        $region60: #{tpu_custom_call.1} parent=11 // pred_fallthru
          _
        // Predicated region
        $region61: #{tpu_custom_call.1} parent=11 // pred_check
          %p577 = pneg %p335
        $region62: #{tpu_custom_call.1} parent=11 // pred_check_branch
          %579 = sbr.rel (%p577) target = $region64
        $region63: #{tpu_custom_call.1} parent=11 // pred_region
          %s581 = ssub.s32 1024, 1024
          %582 = vsyncadd [#allocation15], %s581
          %s583 = sshll.u32 [#allocation14], 4
          %s584 = int_to_ptr.vmem [resolvable:$true] %s583
          %589 = dma.hbm_to_vmem [thread:$0]  %s13, 1024, %s584, [#allocation15], 64, 64, 4
        $region64: #{tpu_custom_call.1} parent=11 // pred_fallthru
          _
        // Predicated region
        $region65: #{tpu_custom_call.1} parent=11 // pred_check
          %p590 = pneg %p356
        $region66: #{tpu_custom_call.1} parent=11 // pred_check_branch
          %592 = sbr.rel (%p590) target = $region68
        $region67: #{tpu_custom_call.1} parent=11 // pred_region
          _
        $region68: #{tpu_custom_call.1} parent=11 // pred_fallthru
          _
        // Predicated region
        $region69: #{tpu_custom_call.1} parent=11 // pred_check
          %p593 = pneg %p377
        $region70: #{tpu_custom_call.1} parent=11 // pred_check_branch
          %595 = sbr.rel (%p593) target = $region72
        $region71: #{tpu_custom_call.1} parent=11 // pred_region
          %s597 = ssub.s32 1024, 1024
          %598 = vsyncadd [#allocation15], %s597
          %s599 = sshll.u32 [#allocation16], 4
          %s600 = int_to_ptr.vmem [resolvable:$true] %s599
          %605 = dma.hbm_to_vmem [thread:$0]  %s15, 1024, %s600, [#allocation15], 64, 64, 4
        $region72: #{tpu_custom_call.1} parent=11 // pred_fallthru
          _
        // Predicated region
        $region73: #{tpu_custom_call.1} parent=11 // pred_check
          %p606 = pneg %p398
        $region74: #{tpu_custom_call.1} parent=11 // pred_check_branch
          %608 = sbr.rel (%p606) target = $region76
        $region75: #{tpu_custom_call.1} parent=11 // pred_region
          _
        $region76: #{tpu_custom_call.1} parent=11 // pred_fallthru
          _
        // Predicated region
        $region77: #{tpu_custom_call.1} parent=11 // pred_check
          %p609 = pneg %p419
        $region78: #{tpu_custom_call.1} parent=11 // pred_check_branch
          %611 = sbr.rel (%p609) target = $region80
        $region79: #{tpu_custom_call.1} parent=11 // pred_region
          %s613 = ssub.s32 8192, 8192
          %614 = vsyncadd [#allocation18], %s613
          %s615 = sshll.u32 [#allocation17], 4
          %s616 = int_to_ptr.vmem [resolvable:$true] %s615
          %621 = dma.hbm_to_vmem [thread:$0]  %s17, 8192, %s616, [#allocation18], 512, 512, 32
        $region80: #{tpu_custom_call.1} parent=11 // pred_fallthru
          _
        // Predicated region
        $region81: #{tpu_custom_call.1} parent=11 // pred_check
          %p622 = pneg %p440
        $region82: #{tpu_custom_call.1} parent=11 // pred_check_branch
          %624 = sbr.rel (%p622) target = $region84
        $region83: #{tpu_custom_call.1} parent=11 // pred_region
          _
        $region84: #{tpu_custom_call.1} parent=11 // pred_fallthru
          _
      $region12: #{tpu_custom_call.1} parent=5 // pred_fallthru
        _
      %p625 = scmp.lt.s32.totalorder %s36, 2
      // Predicated region
      $region85: #{tpu_custom_call.1} parent=5 // pred_check
        %p626 = pneg %p625
      $region86: #{tpu_custom_call.1} parent=5 // pred_check_branch
        %628 = sbr.rel (%p626) target = $region88
      $region87: #{tpu_custom_call.1} parent=5 // pred_region
        // Predicated region
        $region89: #{tpu_custom_call.1} parent=87 // pred_check
          %p629 = pneg %p56
        $region90: #{tpu_custom_call.1} parent=87 // pred_check_branch
          %631 = sbr.rel (%p629) target = $region92
        $region91: #{tpu_custom_call.1} parent=87 // pred_region
          %s632 = sand.u32 %s46, 1
          %s633 = scalar_lea.sflag [#allocation3], %s632
          %s634 = sand.u32 %s46, 1
          %s635 = smul.addr %s634, 64
          %s636 = scalar_lea.vmem [#allocation2], %s635
          %s638 = ssub.s32 1024, 1024
          %639 = vsyncadd %s633, %s638
          %s640 = smul.addr %s36, 8
          %s641 = smul.addr %s640, 128
          %s642 = scalar_lea.hbm %s0, %s641
          %s644 = sshll.u32 %s636, 4
          %s645 = int_to_ptr.vmem [resolvable:$true] %s644
          %647 = dma.hbm_to_vmem [thread:$0]  %s642, 1024, %s645, %s633
        $region92: #{tpu_custom_call.1} parent=87 // pred_fallthru
          _
      $region88: #{tpu_custom_call.1} parent=5 // pred_fallthru
        _
      %p648 = scmp.le.s32.totalorder 1, %s36
      %p649 = scmp.lt.s32.totalorder %s36, 3
      %p650 = pnand %p648, %p649
      %p651 = pneg %p650
      // Predicated region
      $region93: #{tpu_custom_call.1} parent=5 // pred_check
        _
      $region94: #{tpu_custom_call.1} parent=5 // pred_check_branch
        %653 = sbr.rel (%p650) target = $region96
      $region95: #{tpu_custom_call.1} parent=5 // pred_region
        %s654 = ssub.s32 %s36, 1
        %s655 = sand.u32 %s49, 1
        %s656 = scalar_lea.sflag [#allocation3], %s655
        %s657 = sand.u32 %s49, 1
        %s658 = smul.addr %s657, 64
        %s659 = scalar_lea.vmem [#allocation2], %s658
        // Predicated region
        $region97: #{tpu_custom_call.1} parent=95 // pred_check
          %p660 = pneg %p62
        $region98: #{tpu_custom_call.1} parent=95 // pred_check_branch
          %662 = sbr.rel (%p660) target = $region100
        $region99: #{tpu_custom_call.1} parent=95 // pred_region
          %663 = dma.done %s656, 1024
        $region100: #{tpu_custom_call.1} parent=95 // pred_fallthru
          _
        // Predicated region
        $region101: #{tpu_custom_call.1} parent=95 // pred_check
          %p664 = pneg %p83
        $region102: #{tpu_custom_call.1} parent=95 // pred_check_branch
          %666 = sbr.rel (%p664) target = $region104
        $region103: #{tpu_custom_call.1} parent=95 // pred_region
          %667 = dma.done [#allocation6], 8192
        $region104: #{tpu_custom_call.1} parent=95 // pred_fallthru
          _
        // Predicated region
        $region105: #{tpu_custom_call.1} parent=95 // pred_check
          %p668 = pneg %p125
        $region106: #{tpu_custom_call.1} parent=95 // pred_check_branch
          %670 = sbr.rel (%p668) target = $region108
        $region107: #{tpu_custom_call.1} parent=95 // pred_region
          %671 = dma.done [#allocation6], 1024
        $region108: #{tpu_custom_call.1} parent=95 // pred_fallthru
          _
        // Predicated region
        $region109: #{tpu_custom_call.1} parent=95 // pred_check
          %p672 = pneg %p167
        $region110: #{tpu_custom_call.1} parent=95 // pred_check_branch
          %674 = sbr.rel (%p672) target = $region112
        $region111: #{tpu_custom_call.1} parent=95 // pred_region
          %675 = dma.done [#allocation9], 1024
        $region112: #{tpu_custom_call.1} parent=95 // pred_fallthru
          _
        // Predicated region
        $region113: #{tpu_custom_call.1} parent=95 // pred_check
          %p676 = pneg %p209
        $region114: #{tpu_custom_call.1} parent=95 // pred_check_branch
          %678 = sbr.rel (%p676) target = $region116
        $region115: #{tpu_custom_call.1} parent=95 // pred_region
          %679 = dma.done [#allocation9], 1024
        $region116: #{tpu_custom_call.1} parent=95 // pred_fallthru
          _
        // Predicated region
        $region117: #{tpu_custom_call.1} parent=95 // pred_check
          %p680 = pneg %p251
        $region118: #{tpu_custom_call.1} parent=95 // pred_check_branch
          %682 = sbr.rel (%p680) target = $region120
        $region119: #{tpu_custom_call.1} parent=95 // pred_region
          %683 = dma.done [#allocation12], 1024
        $region120: #{tpu_custom_call.1} parent=95 // pred_fallthru
          _
        // Predicated region
        $region121: #{tpu_custom_call.1} parent=95 // pred_check
          %p684 = pneg %p293
        $region122: #{tpu_custom_call.1} parent=95 // pred_check_branch
          %686 = sbr.rel (%p684) target = $region124
        $region123: #{tpu_custom_call.1} parent=95 // pred_region
          %687 = dma.done [#allocation12], 1024
        $region124: #{tpu_custom_call.1} parent=95 // pred_fallthru
          _
        // Predicated region
        $region125: #{tpu_custom_call.1} parent=95 // pred_check
          %p688 = pneg %p335
        $region126: #{tpu_custom_call.1} parent=95 // pred_check_branch
          %690 = sbr.rel (%p688) target = $region128
        $region127: #{tpu_custom_call.1} parent=95 // pred_region
          %691 = dma.done [#allocation15], 1024
        $region128: #{tpu_custom_call.1} parent=95 // pred_fallthru
          _
        // Predicated region
        $region129: #{tpu_custom_call.1} parent=95 // pred_check
          %p692 = pneg %p377
        $region130: #{tpu_custom_call.1} parent=95 // pred_check_branch
          %694 = sbr.rel (%p692) target = $region132
        $region131: #{tpu_custom_call.1} parent=95 // pred_region
          %695 = dma.done [#allocation15], 1024
        $region132: #{tpu_custom_call.1} parent=95 // pred_fallthru
          _
        // Predicated region
        $region133: #{tpu_custom_call.1} parent=95 // pred_check
          %p696 = pneg %p419
        $region134: #{tpu_custom_call.1} parent=95 // pred_check_branch
          %698 = sbr.rel (%p696) target = $region136
        $region135: #{tpu_custom_call.1} parent=95 // pred_region
          %699 = dma.done [#allocation18], 8192
        $region136: #{tpu_custom_call.1} parent=95 // pred_fallthru
          _
        %s700 = sand.u32 %s49, 1
        %s701 = scalar_lea.sflag [#allocation3], %s700
        %s702 = sand.u32 %s49, 1
        %s703 = smul.addr %s702, 64
        %s704 = scalar_lea.vmem [#allocation2], %s703
        %p705 = pneg %p62
        %p706 = pneg %p59
        %p707 = pneg %p83
        %p708 = pneg %p80
        %p709 = pneg %p104
        %p710 = pneg %p101
        %p711 = pneg %p125
        %p712 = pneg %p122
        %p713 = pneg %p146
        %p714 = pneg %p143
        %p715 = pneg %p167
        %p716 = pneg %p164
        %p717 = pneg %p188
        %p718 = pneg %p185
        %p719 = pneg %p209
        %p720 = pneg %p206
        %p721 = pneg %p230
        %p722 = pneg %p227
        %p723 = pneg %p251
        %p724 = pneg %p248
        %p725 = pneg %p272
        %p726 = pneg %p269
        %p727 = pneg %p293
        %p728 = pneg %p290
        %p729 = pneg %p314
        %p730 = pneg %p311
        %p731 = pneg %p335
        %p732 = pneg %p332
        %p733 = pneg %p356
        %p734 = pneg %p353
        %p735 = pneg %p377
        %p736 = pneg %p374
        %p737 = pneg %p398
        %p738 = pneg %p395
        %p739 = pneg %p419
        %p740 = pneg %p416
        %p741 = pneg %p440
        %p742 = pneg %p437
        %p743 = pneg %p466
        %p744 = pneg %p463
        %s745 = sand.u32 %s453, 1
        %s746 = scalar_lea.sflag [#allocation4], %s745
        %s747 = sand.u32 %s453, 1
        %s748 = smul.addr %s747, 64
        %s749 = scalar_lea.vmem [#allocation19], %s748
        %v751 = vld [vmem:[%s659] sm:$0xff]
        %v752 = vld [vmem:[%s659 + $0x8] sm:$0xff]
        %v753 = vld [vmem:[%s659 + $0x10] sm:$0xff]
        %v754 = vld [vmem:[%s659 + $0x18] sm:$0xff]
        %v755 = vld [vmem:[%s659 + $0x20] sm:$0xff]
        %v756 = vld [vmem:[%s659 + $0x28] sm:$0xff]
        %v757 = vld [vmem:[%s659 + $0x30] sm:$0xff]
        %v758 = vld [vmem:[%s659 + $0x38] sm:$0xff]
        %v759 = vld [vmem:[#allocation5] sm:$0xf]
        %v760 = vld [vmem:[#allocation5 + $0x4] sm:$0xf]
        %v761 = vld [vmem:[#allocation5 + $0x8] sm:$0xf]
        %v762 = vld [vmem:[#allocation5 + $0xc] sm:$0xf]
        %v763 = vld [vmem:[#allocation5 + $0x10] sm:$0xf]
        %v764 = vld [vmem:[#allocation5 + $0x14] sm:$0xf]
        %v765 = vld [vmem:[#allocation5 + $0x18] sm:$0xf]
        %v766 = vld [vmem:[#allocation5 + $0x1c] sm:$0xf]
        %v767 = vld [vmem:[#allocation5 + $0x20] sm:$0xf]
        %v768 = vld [vmem:[#allocation5 + $0x24] sm:$0xf]
        %v769 = vld [vmem:[#allocation5 + $0x28] sm:$0xf]
        %v770 = vld [vmem:[#allocation5 + $0x2c] sm:$0xf]
        %v771 = vld [vmem:[#allocation5 + $0x30] sm:$0xf]
        %v772 = vld [vmem:[#allocation5 + $0x34] sm:$0xf]
        %v773 = vld [vmem:[#allocation5 + $0x38] sm:$0xf]
        %v774 = vld [vmem:[#allocation5 + $0x3c] sm:$0xf]
        %v775 = vld [vmem:[#allocation5 + $0x40] sm:$0xf]
        %v776 = vld [vmem:[#allocation5 + $0x44] sm:$0xf]
        %v777 = vld [vmem:[#allocation5 + $0x48] sm:$0xf]
        %v778 = vld [vmem:[#allocation5 + $0x4c] sm:$0xf]
        %v779 = vld [vmem:[#allocation5 + $0x50] sm:$0xf]
        %v780 = vld [vmem:[#allocation5 + $0x54] sm:$0xf]
        %v781 = vld [vmem:[#allocation5 + $0x58] sm:$0xf]
        %v782 = vld [vmem:[#allocation5 + $0x5c] sm:$0xf]
        %v783 = vld [vmem:[#allocation5 + $0x60] sm:$0xf]
        %v784 = vld [vmem:[#allocation5 + $0x64] sm:$0xf]
        %v785 = vld [vmem:[#allocation5 + $0x68] sm:$0xf]
        %v786 = vld [vmem:[#allocation5 + $0x6c] sm:$0xf]
        %v787 = vld [vmem:[#allocation5 + $0x70] sm:$0xf]
        %v788 = vld [vmem:[#allocation5 + $0x74] sm:$0xf]
        %v789 = vld [vmem:[#allocation5 + $0x78] sm:$0xf]
        %v790 = vld [vmem:[#allocation5 + $0x7c] sm:$0xf]
        %v791 = vld [vmem:[#allocation5 + $0x80] sm:$0xf]
        %v792 = vld [vmem:[#allocation5 + $0x84] sm:$0xf]
        %v793 = vld [vmem:[#allocation5 + $0x88] sm:$0xf]
        %v794 = vld [vmem:[#allocation5 + $0x8c] sm:$0xf]
        %v795 = vld [vmem:[#allocation5 + $0x90] sm:$0xf]
        %v796 = vld [vmem:[#allocation5 + $0x94] sm:$0xf]
        %v797 = vld [vmem:[#allocation5 + $0x98] sm:$0xf]
        %v798 = vld [vmem:[#allocation5 + $0x9c] sm:$0xf]
        %v799 = vld [vmem:[#allocation5 + $0xa0] sm:$0xf]
        %v800 = vld [vmem:[#allocation5 + $0xa4] sm:$0xf]
        %v801 = vld [vmem:[#allocation5 + $0xa8] sm:$0xf]
        %v802 = vld [vmem:[#allocation5 + $0xac] sm:$0xf]
        %v803 = vld [vmem:[#allocation5 + $0xb0] sm:$0xf]
        %v804 = vld [vmem:[#allocation5 + $0xb4] sm:$0xf]
        %v805 = vld [vmem:[#allocation5 + $0xb8] sm:$0xf]
        %v806 = vld [vmem:[#allocation5 + $0xbc] sm:$0xf]
        %v807 = vld [vmem:[#allocation5 + $0xc0] sm:$0xf]
        %v808 = vld [vmem:[#allocation5 + $0xc4] sm:$0xf]
        %v809 = vld [vmem:[#allocation5 + $0xc8] sm:$0xf]
        %v810 = vld [vmem:[#allocation5 + $0xcc] sm:$0xf]
        %v811 = vld [vmem:[#allocation5 + $0xd0] sm:$0xf]
        %v812 = vld [vmem:[#allocation5 + $0xd4] sm:$0xf]
        %v813 = vld [vmem:[#allocation5 + $0xd8] sm:$0xf]
        %v814 = vld [vmem:[#allocation5 + $0xdc] sm:$0xf]
        %v815 = vld [vmem:[#allocation5 + $0xe0] sm:$0xf]
        %v816 = vld [vmem:[#allocation5 + $0xe4] sm:$0xf]
        %v817 = vld [vmem:[#allocation5 + $0xe8] sm:$0xf]
        %v818 = vld [vmem:[#allocation5 + $0xec] sm:$0xf]
        %v819 = vld [vmem:[#allocation5 + $0xf0] sm:$0xf]
        %v820 = vld [vmem:[#allocation5 + $0xf4] sm:$0xf]
        %v821 = vld [vmem:[#allocation5 + $0xf8] sm:$0xf]
        %v822 = vld [vmem:[#allocation5 + $0xfc] sm:$0xf]
        %v823 = vld [vmem:[#allocation5 + $0x100] sm:$0xf]
        %v824 = vld [vmem:[#allocation5 + $0x104] sm:$0xf]
        %v825 = vld [vmem:[#allocation5 + $0x108] sm:$0xf]
        %v826 = vld [vmem:[#allocation5 + $0x10c] sm:$0xf]
        %v827 = vld [vmem:[#allocation5 + $0x110] sm:$0xf]
        %v828 = vld [vmem:[#allocation5 + $0x114] sm:$0xf]
        %v829 = vld [vmem:[#allocation5 + $0x118] sm:$0xf]
        %v830 = vld [vmem:[#allocation5 + $0x11c] sm:$0xf]
        %v831 = vld [vmem:[#allocation5 + $0x120] sm:$0xf]
        %v832 = vld [vmem:[#allocation5 + $0x124] sm:$0xf]
        %v833 = vld [vmem:[#allocation5 + $0x128] sm:$0xf]
        %v834 = vld [vmem:[#allocation5 + $0x12c] sm:$0xf]
        %v835 = vld [vmem:[#allocation5 + $0x130] sm:$0xf]
        %v836 = vld [vmem:[#allocation5 + $0x134] sm:$0xf]
        %v837 = vld [vmem:[#allocation5 + $0x138] sm:$0xf]
        %v838 = vld [vmem:[#allocation5 + $0x13c] sm:$0xf]
        %v839 = vld [vmem:[#allocation5 + $0x140] sm:$0xf]
        %v840 = vld [vmem:[#allocation5 + $0x144] sm:$0xf]
        %v841 = vld [vmem:[#allocation5 + $0x148] sm:$0xf]
        %v842 = vld [vmem:[#allocation5 + $0x14c] sm:$0xf]
        %v843 = vld [vmem:[#allocation5 + $0x150] sm:$0xf]
        %v844 = vld [vmem:[#allocation5 + $0x154] sm:$0xf]
        %v845 = vld [vmem:[#allocation5 + $0x158] sm:$0xf]
        %v846 = vld [vmem:[#allocation5 + $0x15c] sm:$0xf]
        %v847 = vld [vmem:[#allocation5 + $0x160] sm:$0xf]
        %v848 = vld [vmem:[#allocation5 + $0x164] sm:$0xf]
        %v849 = vld [vmem:[#allocation5 + $0x168] sm:$0xf]
        %v850 = vld [vmem:[#allocation5 + $0x16c] sm:$0xf]
        %v851 = vld [vmem:[#allocation5 + $0x170] sm:$0xf]
        %v852 = vld [vmem:[#allocation5 + $0x174] sm:$0xf]
        %v853 = vld [vmem:[#allocation5 + $0x178] sm:$0xf]
        %v854 = vld [vmem:[#allocation5 + $0x17c] sm:$0xf]
        %v855 = vld [vmem:[#allocation5 + $0x180] sm:$0xf]
        %v856 = vld [vmem:[#allocation5 + $0x184] sm:$0xf]
        %v857 = vld [vmem:[#allocation5 + $0x188] sm:$0xf]
        %v858 = vld [vmem:[#allocation5 + $0x18c] sm:$0xf]
        %v859 = vld [vmem:[#allocation5 + $0x190] sm:$0xf]
        %v860 = vld [vmem:[#allocation5 + $0x194] sm:$0xf]
        %v861 = vld [vmem:[#allocation5 + $0x198] sm:$0xf]
        %v862 = vld [vmem:[#allocation5 + $0x19c] sm:$0xf]
        %v863 = vld [vmem:[#allocation5 + $0x1a0] sm:$0xf]
        %v864 = vld [vmem:[#allocation5 + $0x1a4] sm:$0xf]
        %v865 = vld [vmem:[#allocation5 + $0x1a8] sm:$0xf]
        %v866 = vld [vmem:[#allocation5 + $0x1ac] sm:$0xf]
        %v867 = vld [vmem:[#allocation5 + $0x1b0] sm:$0xf]
        %v868 = vld [vmem:[#allocation5 + $0x1b4] sm:$0xf]
        %v869 = vld [vmem:[#allocation5 + $0x1b8] sm:$0xf]
        %v870 = vld [vmem:[#allocation5 + $0x1bc] sm:$0xf]
        %v871 = vld [vmem:[#allocation5 + $0x1c0] sm:$0xf]
        %v872 = vld [vmem:[#allocation5 + $0x1c4] sm:$0xf]
        %v873 = vld [vmem:[#allocation5 + $0x1c8] sm:$0xf]
        %v874 = vld [vmem:[#allocation5 + $0x1cc] sm:$0xf]
        %v875 = vld [vmem:[#allocation5 + $0x1d0] sm:$0xf]
        %v876 = vld [vmem:[#allocation5 + $0x1d4] sm:$0xf]
        %v877 = vld [vmem:[#allocation5 + $0x1d8] sm:$0xf]
        %v878 = vld [vmem:[#allocation5 + $0x1dc] sm:$0xf]
        %v879 = vld [vmem:[#allocation5 + $0x1e0] sm:$0xf]
        %v880 = vld [vmem:[#allocation5 + $0x1e4] sm:$0xf]
        %v881 = vld [vmem:[#allocation5 + $0x1e8] sm:$0xf]
        %v882 = vld [vmem:[#allocation5 + $0x1ec] sm:$0xf]
        %v883 = vld [vmem:[#allocation5 + $0x1f0] sm:$0xf]
        %v884 = vld [vmem:[#allocation5 + $0x1f4] sm:$0xf]
        %v885 = vld [vmem:[#allocation5 + $0x1f8] sm:$0xf]
        %v886 = vld [vmem:[#allocation5 + $0x1fc] sm:$0xf]
        %v887 = vld [vmem:[%s2] sm:$0x1]
        %v888 = vpack.c.bf16 %v751, %v751
        %v889 = vpack.c.bf16 %v752, %v752
        %v890 = vpack.c.bf16 %v753, %v753
        %v891 = vpack.c.bf16 %v754, %v754
        %v892 = vpack.c.bf16 %v755, %v755
        %v893 = vpack.c.bf16 %v756, %v756
        %v894 = vpack.c.bf16 %v757, %v757
        %v895 = vpack.c.bf16 %v758, %v758
        %v897 = vlaneseq
        %v898 = vshrl.u32 %v897, 7
        %v899 = vsub.s32 0, %v898
        %v900 = vrot.slane %v887, %v899
        %v1030 = vunpack.c.l.b16 %v759
        %v1031 = vunpack.c.l.b16 %v760
        %v1032 = vunpack.c.l.b16 %v761
        %v1033 = vunpack.c.l.b16 %v762
        %v1034 = vunpack.c.l.b16 %v763
        %v1035 = vunpack.c.l.b16 %v764
        %v1036 = vunpack.c.l.b16 %v765
        %v1037 = vunpack.c.l.b16 %v766
        %v1038 = vunpack.c.l.b16 %v767
        %v1039 = vunpack.c.l.b16 %v768
        %v1040 = vunpack.c.l.b16 %v769
        %v1041 = vunpack.c.l.b16 %v770
        %v1042 = vunpack.c.l.b16 %v771
        %v1043 = vunpack.c.l.b16 %v772
        %v1044 = vunpack.c.l.b16 %v773
        %v1045 = vunpack.c.l.b16 %v774
        %v1046 = vunpack.c.l.b16 %v775
        %v1047 = vunpack.c.l.b16 %v776
        %v1048 = vunpack.c.l.b16 %v777
        %v1049 = vunpack.c.l.b16 %v778
        %v1050 = vunpack.c.l.b16 %v779
        %v1051 = vunpack.c.l.b16 %v780
        %v1052 = vunpack.c.l.b16 %v781
        %v1053 = vunpack.c.l.b16 %v782
        %v1054 = vunpack.c.l.b16 %v783
        %v1055 = vunpack.c.l.b16 %v784
        %v1056 = vunpack.c.l.b16 %v785
        %v1057 = vunpack.c.l.b16 %v786
        %v1058 = vunpack.c.l.b16 %v787
        %v1059 = vunpack.c.l.b16 %v788
        %v1060 = vunpack.c.l.b16 %v789
        %v1061 = vunpack.c.l.b16 %v790
        %v1062 = vunpack.c.l.b16 %v791
        %v1063 = vunpack.c.l.b16 %v792
        %v1064 = vunpack.c.l.b16 %v793
        %v1065 = vunpack.c.l.b16 %v794
        %v1066 = vunpack.c.l.b16 %v795
        %v1067 = vunpack.c.l.b16 %v796
        %v1068 = vunpack.c.l.b16 %v797
        %v1069 = vunpack.c.l.b16 %v798
        %v1070 = vunpack.c.l.b16 %v799
        %v1071 = vunpack.c.l.b16 %v800
        %v1072 = vunpack.c.l.b16 %v801
        %v1073 = vunpack.c.l.b16 %v802
        %v1074 = vunpack.c.l.b16 %v803
        %v1075 = vunpack.c.l.b16 %v804
        %v1076 = vunpack.c.l.b16 %v805
        %v1077 = vunpack.c.l.b16 %v806
        %v1078 = vunpack.c.l.b16 %v807
        %v1079 = vunpack.c.l.b16 %v808
        %v1080 = vunpack.c.l.b16 %v809
        %v1081 = vunpack.c.l.b16 %v810
        %v1082 = vunpack.c.l.b16 %v811
        %v1083 = vunpack.c.l.b16 %v812
        %v1084 = vunpack.c.l.b16 %v813
        %v1085 = vunpack.c.l.b16 %v814
        %v1086 = vunpack.c.l.b16 %v815
        %v1087 = vunpack.c.l.b16 %v816
        %v1088 = vunpack.c.l.b16 %v817
        %v1089 = vunpack.c.l.b16 %v818
        %v1090 = vunpack.c.l.b16 %v819
        %v1091 = vunpack.c.l.b16 %v820
        %v1092 = vunpack.c.l.b16 %v821
        %v1093 = vunpack.c.l.b16 %v822
        %v1094 = vunpack.c.l.b16 %v823
        %v1095 = vunpack.c.l.b16 %v824
        %v1096 = vunpack.c.l.b16 %v825
        %v1097 = vunpack.c.l.b16 %v826
        %v1098 = vunpack.c.l.b16 %v827
        %v1099 = vunpack.c.l.b16 %v828
        %v1100 = vunpack.c.l.b16 %v829
        %v1101 = vunpack.c.l.b16 %v830
        %v1102 = vunpack.c.l.b16 %v831
        %v1103 = vunpack.c.l.b16 %v832
        %v1104 = vunpack.c.l.b16 %v833
        %v1105 = vunpack.c.l.b16 %v834
        %v1106 = vunpack.c.l.b16 %v835
        %v1107 = vunpack.c.l.b16 %v836
        %v1108 = vunpack.c.l.b16 %v837
        %v1109 = vunpack.c.l.b16 %v838
        %v1110 = vunpack.c.l.b16 %v839
        %v1111 = vunpack.c.l.b16 %v840
        %v1112 = vunpack.c.l.b16 %v841
        %v1113 = vunpack.c.l.b16 %v842
        %v1114 = vunpack.c.l.b16 %v843
        %v1115 = vunpack.c.l.b16 %v844
        %v1116 = vunpack.c.l.b16 %v845
        %v1117 = vunpack.c.l.b16 %v846
        %v1118 = vunpack.c.l.b16 %v847
        %v1119 = vunpack.c.l.b16 %v848
        %v1120 = vunpack.c.l.b16 %v849
        %v1121 = vunpack.c.l.b16 %v850
        %v1122 = vunpack.c.l.b16 %v851
        %v1123 = vunpack.c.l.b16 %v852
        %v1124 = vunpack.c.l.b16 %v853
        %v1125 = vunpack.c.l.b16 %v854
        %v1126 = vunpack.c.l.b16 %v855
        %v1127 = vunpack.c.l.b16 %v856
        %v1128 = vunpack.c.l.b16 %v857
        %v1129 = vunpack.c.l.b16 %v858
        %v1130 = vunpack.c.l.b16 %v859
        %v1131 = vunpack.c.l.b16 %v860
        %v1132 = vunpack.c.l.b16 %v861
        %v1133 = vunpack.c.l.b16 %v862
        %v1134 = vunpack.c.l.b16 %v863
        %v1135 = vunpack.c.l.b16 %v864
        %v1136 = vunpack.c.l.b16 %v865
        %v1137 = vunpack.c.l.b16 %v866
        %v1138 = vunpack.c.l.b16 %v867
        %v1139 = vunpack.c.l.b16 %v868
        %v1140 = vunpack.c.l.b16 %v869
        %v1141 = vunpack.c.l.b16 %v870
        %v1142 = vunpack.c.l.b16 %v871
        %v1143 = vunpack.c.l.b16 %v872
        %v1144 = vunpack.c.l.b16 %v873
        %v1145 = vunpack.c.l.b16 %v874
        %v1146 = vunpack.c.l.b16 %v875
        %v1147 = vunpack.c.l.b16 %v876
        %v1148 = vunpack.c.l.b16 %v877
        %v1149 = vunpack.c.l.b16 %v878
        %v1150 = vunpack.c.l.b16 %v879
        %v1151 = vunpack.c.l.b16 %v880
        %v1152 = vunpack.c.l.b16 %v881
        %v1153 = vunpack.c.l.b16 %v882
        %v1154 = vunpack.c.l.b16 %v883
        %v1155 = vunpack.c.l.b16 %v884
        %v1156 = vunpack.c.l.b16 %v885
        %v1157 = vunpack.c.l.b16 %v886
        %v1158 = vpack.c.b16 %v1031, %v1030
        %v1159 = vpack.c.b16 %v1033, %v1032
        %v1160 = vpack.c.b16 %v1035, %v1034
        %v1161 = vpack.c.b16 %v1037, %v1036
        %v1162 = vpack.c.b16 %v1039, %v1038
        %v1163 = vpack.c.b16 %v1041, %v1040
        %v1164 = vpack.c.b16 %v1043, %v1042
        %v1165 = vpack.c.b16 %v1045, %v1044
        %v1166 = vpack.c.b16 %v1047, %v1046
        %v1167 = vpack.c.b16 %v1049, %v1048
        %v1168 = vpack.c.b16 %v1051, %v1050
        %v1169 = vpack.c.b16 %v1053, %v1052
        %v1170 = vpack.c.b16 %v1055, %v1054
        %v1171 = vpack.c.b16 %v1057, %v1056
        %v1172 = vpack.c.b16 %v1059, %v1058
        %v1173 = vpack.c.b16 %v1061, %v1060
        %v1174 = vpack.c.b16 %v1063, %v1062
        %v1175 = vpack.c.b16 %v1065, %v1064
        %v1176 = vpack.c.b16 %v1067, %v1066
        %v1177 = vpack.c.b16 %v1069, %v1068
        %v1178 = vpack.c.b16 %v1071, %v1070
        %v1179 = vpack.c.b16 %v1073, %v1072
        %v1180 = vpack.c.b16 %v1075, %v1074
        %v1181 = vpack.c.b16 %v1077, %v1076
        %v1182 = vpack.c.b16 %v1079, %v1078
        %v1183 = vpack.c.b16 %v1081, %v1080
        %v1184 = vpack.c.b16 %v1083, %v1082
        %v1185 = vpack.c.b16 %v1085, %v1084
        %v1186 = vpack.c.b16 %v1087, %v1086
        %v1187 = vpack.c.b16 %v1089, %v1088
        %v1188 = vpack.c.b16 %v1091, %v1090
        %v1189 = vpack.c.b16 %v1093, %v1092
        %v1190 = vpack.c.b16 %v1095, %v1094
        %v1191 = vpack.c.b16 %v1097, %v1096
        %v1192 = vpack.c.b16 %v1099, %v1098
        %v1193 = vpack.c.b16 %v1101, %v1100
        %v1194 = vpack.c.b16 %v1103, %v1102
        %v1195 = vpack.c.b16 %v1105, %v1104
        %v1196 = vpack.c.b16 %v1107, %v1106
        %v1197 = vpack.c.b16 %v1109, %v1108
        %v1198 = vpack.c.b16 %v1111, %v1110
        %v1199 = vpack.c.b16 %v1113, %v1112
        %v1200 = vpack.c.b16 %v1115, %v1114
        %v1201 = vpack.c.b16 %v1117, %v1116
        %v1202 = vpack.c.b16 %v1119, %v1118
        %v1203 = vpack.c.b16 %v1121, %v1120
        %v1204 = vpack.c.b16 %v1123, %v1122
        %v1205 = vpack.c.b16 %v1125, %v1124
        %v1206 = vpack.c.b16 %v1127, %v1126
        %v1207 = vpack.c.b16 %v1129, %v1128
        %v1208 = vpack.c.b16 %v1131, %v1130
        %v1209 = vpack.c.b16 %v1133, %v1132
        %v1210 = vpack.c.b16 %v1135, %v1134
        %v1211 = vpack.c.b16 %v1137, %v1136
        %v1212 = vpack.c.b16 %v1139, %v1138
        %v1213 = vpack.c.b16 %v1141, %v1140
        %v1214 = vpack.c.b16 %v1143, %v1142
        %v1215 = vpack.c.b16 %v1145, %v1144
        %v1216 = vpack.c.b16 %v1147, %v1146
        %v1217 = vpack.c.b16 %v1149, %v1148
        %v1218 = vpack.c.b16 %v1151, %v1150
        %v1219 = vpack.c.b16 %v1153, %v1152
        %v1220 = vpack.c.b16 %v1155, %v1154
        %v1221 = vpack.c.b16 %v1157, %v1156
        %1286 = vmatprep.subr.bf16.mxu0 0
        %1287 = vmatpush1.bf16.msra.mxu0 %v1165
        %1288 = vmatprep.subr.bf16.mxu0 0
        %1289 = vmatpush1.bf16.msra.mxu0 %v1164
        %1290 = vmatprep.subr.bf16.mxu0 0
        %1291 = vmatpush1.bf16.msra.mxu0 %v1163
        %1292 = vmatprep.subr.bf16.mxu0 0
        %1293 = vmatpush1.bf16.msra.mxu0 %v1162
        %1294 = vmatprep.subr.bf16.mxu0 0
        %1295 = vmatpush1.bf16.msra.mxu0 %v1161
        %1296 = vmatprep.subr.bf16.mxu0 0
        %1297 = vmatpush1.bf16.msra.mxu0 %v1160
        %1298 = vmatprep.subr.bf16.mxu0 0
        %1299 = vmatpush1.bf16.msra.mxu0 %v1159
        %1300 = vmatprep.subr.bf16.mxu0 0
        %1301 = vmatpush1.bf16.msra.mxu0 %v1158
        %1302 = vmatprep.subr.bf16.mxu0 0
        %1303 = vmatpush2.bf16.msra.mxu0 %v1173
        %1304 = vmatprep.subr.bf16.mxu0 0
        %1305 = vmatpush2.bf16.msra.mxu0 %v1172
        %1306 = vmatprep.subr.bf16.mxu0 0
        %1307 = vmatpush2.bf16.msra.mxu0 %v1171
        %1308 = vmatprep.subr.bf16.mxu0 0
        %1309 = vmatpush2.bf16.msra.mxu0 %v1170
        %1310 = vmatprep.subr.bf16.mxu0 0
        %1311 = vmatpush2.bf16.msra.mxu0 %v1169
        %1312 = vmatprep.subr.bf16.mxu0 0
        %1313 = vmatpush2.bf16.msra.mxu0 %v1168
        %1314 = vmatprep.subr.bf16.mxu0 0
        %1315 = vmatpush2.bf16.msra.mxu0 %v1167
        %1316 = vmatprep.subr.bf16.mxu0 0
        %1317 = vmatpush2.bf16.msra.mxu0 %v1166
        %1318 = vmatprep.mubr.bf16.mxu0 %v889
        %1319 = vmatmul.mubr.bf16.gmra.mxu0 %v888
        %v1320 = vpop.f32.mrf.mxu0
        %v1321 = vadd.f32 %v900, %v1320
        %v1322 = vpop.f32.mrf.mxu0
        %v1323 = vpop.f32.mrf.mxu0
        %v1324 = vpop.f32.mrf.mxu0
        %1325 = vdwg.mxu0
        %1326 = vmatprep.subr.bf16.mxu0 0
        %1327 = vmatpush1.bf16.msra.mxu0 %v1181
        %1328 = vmatprep.subr.bf16.mxu0 0
        %1329 = vmatpush1.bf16.msra.mxu0 %v1180
        %1330 = vmatprep.subr.bf16.mxu0 0
        %1331 = vmatpush1.bf16.msra.mxu0 %v1179
        %1332 = vmatprep.subr.bf16.mxu0 0
        %1333 = vmatpush1.bf16.msra.mxu0 %v1178
        %1334 = vmatprep.subr.bf16.mxu0 0
        %1335 = vmatpush1.bf16.msra.mxu0 %v1177
        %1336 = vmatprep.subr.bf16.mxu0 0
        %1337 = vmatpush1.bf16.msra.mxu0 %v1176
        %1338 = vmatprep.subr.bf16.mxu0 0
        %1339 = vmatpush1.bf16.msra.mxu0 %v1175
        %1340 = vmatprep.subr.bf16.mxu0 0
        %1341 = vmatpush1.bf16.msra.mxu0 %v1174
        %1342 = vmatprep.subr.bf16.mxu0 0
        %1343 = vmatpush2.bf16.msra.mxu0 %v1189
        %1344 = vmatprep.subr.bf16.mxu0 0
        %1345 = vmatpush2.bf16.msra.mxu0 %v1188
        %1346 = vmatprep.subr.bf16.mxu0 0
        %1347 = vmatpush2.bf16.msra.mxu0 %v1187
        %1348 = vmatprep.subr.bf16.mxu0 0
        %1349 = vmatpush2.bf16.msra.mxu0 %v1186
        %1350 = vmatprep.subr.bf16.mxu0 0
        %1351 = vmatpush2.bf16.msra.mxu0 %v1185
        %1352 = vmatprep.subr.bf16.mxu0 0
        %1353 = vmatpush2.bf16.msra.mxu0 %v1184
        %1354 = vmatprep.subr.bf16.mxu0 0
        %1355 = vmatpush2.bf16.msra.mxu0 %v1183
        %1356 = vmatprep.subr.bf16.mxu0 0
        %1357 = vmatpush2.bf16.msra.mxu0 %v1182
        %1358 = vmatprep.mubr.bf16.mxu0 %v891
        %1359 = vmatmul.mubr.bf16.gmra.mxu0 %v890
        %v1360 = vpop.f32.mrf.mxu0
        %v1361 = vadd.f32 %v1321, %v1360
        %v1362 = vpop.f32.mrf.mxu0
        %v1363 = vpop.f32.mrf.mxu0
        %v1364 = vpop.f32.mrf.mxu0
        %1365 = vdwg.mxu0
        %1366 = vmatprep.subr.bf16.mxu0 0
        %1367 = vmatpush1.bf16.msra.mxu0 %v1197
        %1368 = vmatprep.subr.bf16.mxu0 0
        %1369 = vmatpush1.bf16.msra.mxu0 %v1196
        %1370 = vmatprep.subr.bf16.mxu0 0
        %1371 = vmatpush1.bf16.msra.mxu0 %v1195
        %1372 = vmatprep.subr.bf16.mxu0 0
        %1373 = vmatpush1.bf16.msra.mxu0 %v1194
        %1374 = vmatprep.subr.bf16.mxu0 0
        %1375 = vmatpush1.bf16.msra.mxu0 %v1193
        %1376 = vmatprep.subr.bf16.mxu0 0
        %1377 = vmatpush1.bf16.msra.mxu0 %v1192
        %1378 = vmatprep.subr.bf16.mxu0 0
        %1379 = vmatpush1.bf16.msra.mxu0 %v1191
        %1380 = vmatprep.subr.bf16.mxu0 0
        %1381 = vmatpush1.bf16.msra.mxu0 %v1190
        %1382 = vmatprep.subr.bf16.mxu0 0
        %1383 = vmatpush2.bf16.msra.mxu0 %v1205
        %1384 = vmatprep.subr.bf16.mxu0 0
        %1385 = vmatpush2.bf16.msra.mxu0 %v1204
        %1386 = vmatprep.subr.bf16.mxu0 0
        %1387 = vmatpush2.bf16.msra.mxu0 %v1203
        %1388 = vmatprep.subr.bf16.mxu0 0
        %1389 = vmatpush2.bf16.msra.mxu0 %v1202
        %1390 = vmatprep.subr.bf16.mxu0 0
        %1391 = vmatpush2.bf16.msra.mxu0 %v1201
        %1392 = vmatprep.subr.bf16.mxu0 0
        %1393 = vmatpush2.bf16.msra.mxu0 %v1200
        %1394 = vmatprep.subr.bf16.mxu0 0
        %1395 = vmatpush2.bf16.msra.mxu0 %v1199
        %1396 = vmatprep.subr.bf16.mxu0 0
        %1397 = vmatpush2.bf16.msra.mxu0 %v1198
        %1398 = vmatprep.mubr.bf16.mxu0 %v893
        %1399 = vmatmul.mubr.bf16.gmra.mxu0 %v892
        %v1400 = vpop.f32.mrf.mxu0
        %v1401 = vadd.f32 %v1361, %v1400
        %v1402 = vpop.f32.mrf.mxu0
        %v1403 = vpop.f32.mrf.mxu0
        %v1404 = vpop.f32.mrf.mxu0
        %1405 = vdwg.mxu0
        %1406 = vmatprep.subr.bf16.mxu0 0
        %1407 = vmatpush1.bf16.msra.mxu0 %v1213
        %1408 = vmatprep.subr.bf16.mxu0 0
        %1409 = vmatpush1.bf16.msra.mxu0 %v1212
        %1410 = vmatprep.subr.bf16.mxu0 0
        %1411 = vmatpush1.bf16.msra.mxu0 %v1211
        %1412 = vmatprep.subr.bf16.mxu0 0
        %1413 = vmatpush1.bf16.msra.mxu0 %v1210
        %1414 = vmatprep.subr.bf16.mxu0 0
        %1415 = vmatpush1.bf16.msra.mxu0 %v1209
        %1416 = vmatprep.subr.bf16.mxu0 0
        %1417 = vmatpush1.bf16.msra.mxu0 %v1208
        %1418 = vmatprep.subr.bf16.mxu0 0
        %1419 = vmatpush1.bf16.msra.mxu0 %v1207
        %1420 = vmatprep.subr.bf16.mxu0 0
        %1421 = vmatpush1.bf16.msra.mxu0 %v1206
        %1422 = vmatprep.subr.bf16.mxu0 0
        %1423 = vmatpush2.bf16.msra.mxu0 %v1221
        %1424 = vmatprep.subr.bf16.mxu0 0
        %1425 = vmatpush2.bf16.msra.mxu0 %v1220
        %1426 = vmatprep.subr.bf16.mxu0 0
        %1427 = vmatpush2.bf16.msra.mxu0 %v1219
        %1428 = vmatprep.subr.bf16.mxu0 0
        %1429 = vmatpush2.bf16.msra.mxu0 %v1218
        %1430 = vmatprep.subr.bf16.mxu0 0
        %1431 = vmatpush2.bf16.msra.mxu0 %v1217
        %1432 = vmatprep.subr.bf16.mxu0 0
        %1433 = vmatpush2.bf16.msra.mxu0 %v1216
        %1434 = vmatprep.subr.bf16.mxu0 0
        %1435 = vmatpush2.bf16.msra.mxu0 %v1215
        %1436 = vmatprep.subr.bf16.mxu0 0
        %1437 = vmatpush2.bf16.msra.mxu0 %v1214
        %1438 = vmatprep.mubr.bf16.mxu0 %v895
        %1439 = vmatmul.mubr.bf16.gmra.mxu0 %v894
        %v1440 = vpop.f32.mrf.mxu0
        %v1441 = vadd.f32 %v1401, %v1440
        %v1442 = vpop.f32.mrf.mxu0
        %v1443 = vpop.f32.mrf.mxu0
        %v1444 = vpop.f32.mrf.mxu0
        %1445 = vdwg.mxu0
        %v1446 = vmax.f32 %v1441, 0.0
        %v1447 = vld [vmem:[#allocation7] sm:$0xf]
        %v1448 = vld [vmem:[#allocation7 + $0x4] sm:$0xf]
        %v1449 = vld [vmem:[#allocation7 + $0x8] sm:$0xf]
        %v1450 = vld [vmem:[#allocation7 + $0xc] sm:$0xf]
        %v1451 = vld [vmem:[#allocation7 + $0x10] sm:$0xf]
        %v1452 = vld [vmem:[#allocation7 + $0x14] sm:$0xf]
        %v1453 = vld [vmem:[#allocation7 + $0x18] sm:$0xf]
        %v1454 = vld [vmem:[#allocation7 + $0x1c] sm:$0xf]
        %v1455 = vld [vmem:[#allocation7 + $0x20] sm:$0xf]
        %v1456 = vld [vmem:[#allocation7 + $0x24] sm:$0xf]
        %v1457 = vld [vmem:[#allocation7 + $0x28] sm:$0xf]
        %v1458 = vld [vmem:[#allocation7 + $0x2c] sm:$0xf]
        %v1459 = vld [vmem:[#allocation7 + $0x30] sm:$0xf]
        %v1460 = vld [vmem:[#allocation7 + $0x34] sm:$0xf]
        %v1461 = vld [vmem:[#allocation7 + $0x38] sm:$0xf]
        %v1462 = vld [vmem:[#allocation7 + $0x3c] sm:$0xf]
        %v1463 = vld [vmem:[%s4] sm:$0x1]
        %v1464 = vpack.c.bf16 %v1446, %v1446
        %v1466 = vlaneseq
        %v1467 = vshrl.u32 %v1466, 7
        %v1468 = vsub.s32 0, %v1467
        %v1469 = vrot.slane %v1463, %v1468
        %v1487 = vunpack.c.l.b16 %v1447
        %v1488 = vunpack.c.l.b16 %v1448
        %v1489 = vunpack.c.l.b16 %v1449
        %v1490 = vunpack.c.l.b16 %v1450
        %v1491 = vunpack.c.l.b16 %v1451
        %v1492 = vunpack.c.l.b16 %v1452
        %v1493 = vunpack.c.l.b16 %v1453
        %v1494 = vunpack.c.l.b16 %v1454
        %v1495 = vunpack.c.l.b16 %v1455
        %v1496 = vunpack.c.l.b16 %v1456
        %v1497 = vunpack.c.l.b16 %v1457
        %v1498 = vunpack.c.l.b16 %v1458
        %v1499 = vunpack.c.l.b16 %v1459
        %v1500 = vunpack.c.l.b16 %v1460
        %v1501 = vunpack.c.l.b16 %v1461
        %v1502 = vunpack.c.l.b16 %v1462
        %v1503 = vpack.c.b16 %v1488, %v1487
        %v1504 = vpack.c.b16 %v1490, %v1489
        %v1505 = vpack.c.b16 %v1492, %v1491
        %v1506 = vpack.c.b16 %v1494, %v1493
        %v1507 = vpack.c.b16 %v1496, %v1495
        %v1508 = vpack.c.b16 %v1498, %v1497
        %v1509 = vpack.c.b16 %v1500, %v1499
        %v1510 = vpack.c.b16 %v1502, %v1501
        %1519 = vmatprep.subr.bf16.mxu0 0
        %1520 = vmatpush1.bf16.msra.mxu0 %v1510
        %1521 = vmatprep.subr.bf16.mxu0 0
        %1522 = vmatpush1.bf16.msra.mxu0 %v1509
        %1523 = vmatprep.subr.bf16.mxu0 0
        %1524 = vmatpush1.bf16.msra.mxu0 %v1508
        %1525 = vmatprep.subr.bf16.mxu0 0
        %1526 = vmatpush1.bf16.msra.mxu0 %v1507
        %1527 = vmatprep.subr.bf16.mxu0 0
        %1528 = vmatpush1.bf16.msra.mxu0 %v1506
        %1529 = vmatprep.subr.bf16.mxu0 0
        %1530 = vmatpush1.bf16.msra.mxu0 %v1505
        %1531 = vmatprep.subr.bf16.mxu0 0
        %1532 = vmatpush1.bf16.msra.mxu0 %v1504
        %1533 = vmatprep.subr.bf16.mxu0 0
        %1534 = vmatpush1.bf16.msra.mxu0 %v1503
        %1535 = vmatprep.subr.bf16.mxu0 0
        %1536 = vmatpush2.bf16.msra.mxu0 0
        %1537 = vmatprep.subr.bf16.mxu0 0
        %1538 = vmatpush2.bf16.msra.mxu0 0
        %1539 = vmatprep.subr.bf16.mxu0 0
        %1540 = vmatpush2.bf16.msra.mxu0 0
        %1541 = vmatprep.subr.bf16.mxu0 0
        %1542 = vmatpush2.bf16.msra.mxu0 0
        %1543 = vmatprep.subr.bf16.mxu0 0
        %1544 = vmatpush2.bf16.msra.mxu0 0
        %1545 = vmatprep.subr.bf16.mxu0 0
        %1546 = vmatpush2.bf16.msra.mxu0 0
        %1547 = vmatprep.subr.bf16.mxu0 0
        %1548 = vmatpush2.bf16.msra.mxu0 0
        %1549 = vmatprep.subr.bf16.mxu0 0
        %1550 = vmatpush2.bf16.msra.mxu0 0
        %1551 = vmatprep.mubr.bf16.mxu0 0
        %1552 = vmatmul.mubr.bf16.gmra.mxu0 %v1464
        %v1553 = vpop.f32.mrf.mxu0
        %v1554 = vadd.f32 %v1469, %v1553
        %v1555 = vpop.f32.mrf.mxu0
        %v1556 = vpop.f32.mrf.mxu0
        %v1557 = vpop.f32.mrf.mxu0
        %1558 = vdwg.mxu0
        %v1559 = vmax.f32 %v1554, 0.0
        %v1560 = vld [vmem:[#allocation8] sm:$0xf]
        %v1561 = vld [vmem:[#allocation8 + $0x4] sm:$0xf]
        %v1562 = vld [vmem:[#allocation8 + $0x8] sm:$0xf]
        %v1563 = vld [vmem:[#allocation8 + $0xc] sm:$0xf]
        %v1564 = vld [vmem:[#allocation8 + $0x10] sm:$0xf]
        %v1565 = vld [vmem:[#allocation8 + $0x14] sm:$0xf]
        %v1566 = vld [vmem:[#allocation8 + $0x18] sm:$0xf]
        %v1567 = vld [vmem:[#allocation8 + $0x1c] sm:$0xf]
        %v1568 = vld [vmem:[#allocation8 + $0x20] sm:$0xf]
        %v1569 = vld [vmem:[#allocation8 + $0x24] sm:$0xf]
        %v1570 = vld [vmem:[#allocation8 + $0x28] sm:$0xf]
        %v1571 = vld [vmem:[#allocation8 + $0x2c] sm:$0xf]
        %v1572 = vld [vmem:[#allocation8 + $0x30] sm:$0xf]
        %v1573 = vld [vmem:[#allocation8 + $0x34] sm:$0xf]
        %v1574 = vld [vmem:[#allocation8 + $0x38] sm:$0xf]
        %v1575 = vld [vmem:[#allocation8 + $0x3c] sm:$0xf]
        %v1576 = vld [vmem:[%s6] sm:$0x1]
        %v1577 = vpack.c.bf16 %v1559, %v1559
        %v1579 = vlaneseq
        %v1580 = vshrl.u32 %v1579, 7
        %v1581 = vsub.s32 0, %v1580
        %v1582 = vrot.slane %v1576, %v1581
        %v1600 = vunpack.c.l.b16 %v1560
        %v1601 = vunpack.c.l.b16 %v1561
        %v1602 = vunpack.c.l.b16 %v1562
        %v1603 = vunpack.c.l.b16 %v1563
        %v1604 = vunpack.c.l.b16 %v1564
        %v1605 = vunpack.c.l.b16 %v1565
        %v1606 = vunpack.c.l.b16 %v1566
        %v1607 = vunpack.c.l.b16 %v1567
        %v1608 = vunpack.c.l.b16 %v1568
        %v1609 = vunpack.c.l.b16 %v1569
        %v1610 = vunpack.c.l.b16 %v1570
        %v1611 = vunpack.c.l.b16 %v1571
        %v1612 = vunpack.c.l.b16 %v1572
        %v1613 = vunpack.c.l.b16 %v1573
        %v1614 = vunpack.c.l.b16 %v1574
        %v1615 = vunpack.c.l.b16 %v1575
        %v1616 = vpack.c.b16 %v1601, %v1600
        %v1617 = vpack.c.b16 %v1603, %v1602
        %v1618 = vpack.c.b16 %v1605, %v1604
        %v1619 = vpack.c.b16 %v1607, %v1606
        %v1620 = vpack.c.b16 %v1609, %v1608
        %v1621 = vpack.c.b16 %v1611, %v1610
        %v1622 = vpack.c.b16 %v1613, %v1612
        %v1623 = vpack.c.b16 %v1615, %v1614
        %1632 = vmatprep.subr.bf16.mxu0 0
        %1633 = vmatpush1.bf16.msra.mxu0 %v1623
        %1634 = vmatprep.subr.bf16.mxu0 0
        %1635 = vmatpush1.bf16.msra.mxu0 %v1622
        %1636 = vmatprep.subr.bf16.mxu0 0
        %1637 = vmatpush1.bf16.msra.mxu0 %v1621
        %1638 = vmatprep.subr.bf16.mxu0 0
        %1639 = vmatpush1.bf16.msra.mxu0 %v1620
        %1640 = vmatprep.subr.bf16.mxu0 0
        %1641 = vmatpush1.bf16.msra.mxu0 %v1619
        %1642 = vmatprep.subr.bf16.mxu0 0
        %1643 = vmatpush1.bf16.msra.mxu0 %v1618
        %1644 = vmatprep.subr.bf16.mxu0 0
        %1645 = vmatpush1.bf16.msra.mxu0 %v1617
        %1646 = vmatprep.subr.bf16.mxu0 0
        %1647 = vmatpush1.bf16.msra.mxu0 %v1616
        %1648 = vmatprep.subr.bf16.mxu0 0
        %1649 = vmatpush2.bf16.msra.mxu0 0
        %1650 = vmatprep.subr.bf16.mxu0 0
        %1651 = vmatpush2.bf16.msra.mxu0 0
        %1652 = vmatprep.subr.bf16.mxu0 0
        %1653 = vmatpush2.bf16.msra.mxu0 0
        %1654 = vmatprep.subr.bf16.mxu0 0
        %1655 = vmatpush2.bf16.msra.mxu0 0
        %1656 = vmatprep.subr.bf16.mxu0 0
        %1657 = vmatpush2.bf16.msra.mxu0 0
        %1658 = vmatprep.subr.bf16.mxu0 0
        %1659 = vmatpush2.bf16.msra.mxu0 0
        %1660 = vmatprep.subr.bf16.mxu0 0
        %1661 = vmatpush2.bf16.msra.mxu0 0
        %1662 = vmatprep.subr.bf16.mxu0 0
        %1663 = vmatpush2.bf16.msra.mxu0 0
        %1664 = vmatprep.mubr.bf16.mxu0 0
        %1665 = vmatmul.mubr.bf16.gmra.mxu0 %v1577
        %v1666 = vpop.f32.mrf.mxu0
        %v1667 = vadd.f32 %v1582, %v1666
        %v1668 = vpop.f32.mrf.mxu0
        %v1669 = vpop.f32.mrf.mxu0
        %v1670 = vpop.f32.mrf.mxu0
        %1671 = vdwg.mxu0
        %v1672 = vmax.f32 %v1667, 0.0
        %v1673 = vld [vmem:[#allocation10] sm:$0xf]
        %v1674 = vld [vmem:[#allocation10 + $0x4] sm:$0xf]
        %v1675 = vld [vmem:[#allocation10 + $0x8] sm:$0xf]
        %v1676 = vld [vmem:[#allocation10 + $0xc] sm:$0xf]
        %v1677 = vld [vmem:[#allocation10 + $0x10] sm:$0xf]
        %v1678 = vld [vmem:[#allocation10 + $0x14] sm:$0xf]
        %v1679 = vld [vmem:[#allocation10 + $0x18] sm:$0xf]
        %v1680 = vld [vmem:[#allocation10 + $0x1c] sm:$0xf]
        %v1681 = vld [vmem:[#allocation10 + $0x20] sm:$0xf]
        %v1682 = vld [vmem:[#allocation10 + $0x24] sm:$0xf]
        %v1683 = vld [vmem:[#allocation10 + $0x28] sm:$0xf]
        %v1684 = vld [vmem:[#allocation10 + $0x2c] sm:$0xf]
        %v1685 = vld [vmem:[#allocation10 + $0x30] sm:$0xf]
        %v1686 = vld [vmem:[#allocation10 + $0x34] sm:$0xf]
        %v1687 = vld [vmem:[#allocation10 + $0x38] sm:$0xf]
        %v1688 = vld [vmem:[#allocation10 + $0x3c] sm:$0xf]
        %v1689 = vld [vmem:[%s8] sm:$0x1]
        %v1690 = vpack.c.bf16 %v1672, %v1672
        %v1692 = vlaneseq
        %v1693 = vshrl.u32 %v1692, 7
        %v1694 = vsub.s32 0, %v1693
        %v1695 = vrot.slane %v1689, %v1694
        %v1713 = vunpack.c.l.b16 %v1673
        %v1714 = vunpack.c.l.b16 %v1674
        %v1715 = vunpack.c.l.b16 %v1675
        %v1716 = vunpack.c.l.b16 %v1676
        %v1717 = vunpack.c.l.b16 %v1677
        %v1718 = vunpack.c.l.b16 %v1678
        %v1719 = vunpack.c.l.b16 %v1679
        %v1720 = vunpack.c.l.b16 %v1680
        %v1721 = vunpack.c.l.b16 %v1681
        %v1722 = vunpack.c.l.b16 %v1682
        %v1723 = vunpack.c.l.b16 %v1683
        %v1724 = vunpack.c.l.b16 %v1684
        %v1725 = vunpack.c.l.b16 %v1685
        %v1726 = vunpack.c.l.b16 %v1686
        %v1727 = vunpack.c.l.b16 %v1687
        %v1728 = vunpack.c.l.b16 %v1688
        %v1729 = vpack.c.b16 %v1714, %v1713
        %v1730 = vpack.c.b16 %v1716, %v1715
        %v1731 = vpack.c.b16 %v1718, %v1717
        %v1732 = vpack.c.b16 %v1720, %v1719
        %v1733 = vpack.c.b16 %v1722, %v1721
        %v1734 = vpack.c.b16 %v1724, %v1723
        %v1735 = vpack.c.b16 %v1726, %v1725
        %v1736 = vpack.c.b16 %v1728, %v1727
        %1745 = vmatprep.subr.bf16.mxu0 0
        %1746 = vmatpush1.bf16.msra.mxu0 %v1736
        %1747 = vmatprep.subr.bf16.mxu0 0
        %1748 = vmatpush1.bf16.msra.mxu0 %v1735
        %1749 = vmatprep.subr.bf16.mxu0 0
        %1750 = vmatpush1.bf16.msra.mxu0 %v1734
        %1751 = vmatprep.subr.bf16.mxu0 0
        %1752 = vmatpush1.bf16.msra.mxu0 %v1733
        %1753 = vmatprep.subr.bf16.mxu0 0
        %1754 = vmatpush1.bf16.msra.mxu0 %v1732
        %1755 = vmatprep.subr.bf16.mxu0 0
        %1756 = vmatpush1.bf16.msra.mxu0 %v1731
        %1757 = vmatprep.subr.bf16.mxu0 0
        %1758 = vmatpush1.bf16.msra.mxu0 %v1730
        %1759 = vmatprep.subr.bf16.mxu0 0
        %1760 = vmatpush1.bf16.msra.mxu0 %v1729
        %1761 = vmatprep.subr.bf16.mxu0 0
        %1762 = vmatpush2.bf16.msra.mxu0 0
        %1763 = vmatprep.subr.bf16.mxu0 0
        %1764 = vmatpush2.bf16.msra.mxu0 0
        %1765 = vmatprep.subr.bf16.mxu0 0
        %1766 = vmatpush2.bf16.msra.mxu0 0
        %1767 = vmatprep.subr.bf16.mxu0 0
        %1768 = vmatpush2.bf16.msra.mxu0 0
        %1769 = vmatprep.subr.bf16.mxu0 0
        %1770 = vmatpush2.bf16.msra.mxu0 0
        %1771 = vmatprep.subr.bf16.mxu0 0
        %1772 = vmatpush2.bf16.msra.mxu0 0
        %1773 = vmatprep.subr.bf16.mxu0 0
        %1774 = vmatpush2.bf16.msra.mxu0 0
        %1775 = vmatprep.subr.bf16.mxu0 0
        %1776 = vmatpush2.bf16.msra.mxu0 0
        %1777 = vmatprep.mubr.bf16.mxu0 0
        %1778 = vmatmul.mubr.bf16.gmra.mxu0 %v1690
        %v1779 = vpop.f32.mrf.mxu0
        %v1780 = vadd.f32 %v1695, %v1779
        %v1781 = vpop.f32.mrf.mxu0
        %v1782 = vpop.f32.mrf.mxu0
        %v1783 = vpop.f32.mrf.mxu0
        %1784 = vdwg.mxu0
        %v1785 = vmax.f32 %v1780, 0.0
        %v1786 = vld [vmem:[#allocation11] sm:$0xf]
        %v1787 = vld [vmem:[#allocation11 + $0x4] sm:$0xf]
        %v1788 = vld [vmem:[#allocation11 + $0x8] sm:$0xf]
        %v1789 = vld [vmem:[#allocation11 + $0xc] sm:$0xf]
        %v1790 = vld [vmem:[#allocation11 + $0x10] sm:$0xf]
        %v1791 = vld [vmem:[#allocation11 + $0x14] sm:$0xf]
        %v1792 = vld [vmem:[#allocation11 + $0x18] sm:$0xf]
        %v1793 = vld [vmem:[#allocation11 + $0x1c] sm:$0xf]
        %v1794 = vld [vmem:[#allocation11 + $0x20] sm:$0xf]
        %v1795 = vld [vmem:[#allocation11 + $0x24] sm:$0xf]
        %v1796 = vld [vmem:[#allocation11 + $0x28] sm:$0xf]
        %v1797 = vld [vmem:[#allocation11 + $0x2c] sm:$0xf]
        %v1798 = vld [vmem:[#allocation11 + $0x30] sm:$0xf]
        %v1799 = vld [vmem:[#allocation11 + $0x34] sm:$0xf]
        %v1800 = vld [vmem:[#allocation11 + $0x38] sm:$0xf]
        %v1801 = vld [vmem:[#allocation11 + $0x3c] sm:$0xf]
        %v1802 = vld [vmem:[%s10] sm:$0x1]
        %v1803 = vpack.c.bf16 %v1785, %v1785
        %v1805 = vlaneseq
        %v1806 = vshrl.u32 %v1805, 7
        %v1807 = vsub.s32 0, %v1806
        %v1808 = vrot.slane %v1802, %v1807
        %v1826 = vunpack.c.l.b16 %v1786
        %v1827 = vunpack.c.l.b16 %v1787
        %v1828 = vunpack.c.l.b16 %v1788
        %v1829 = vunpack.c.l.b16 %v1789
        %v1830 = vunpack.c.l.b16 %v1790
        %v1831 = vunpack.c.l.b16 %v1791
        %v1832 = vunpack.c.l.b16 %v1792
        %v1833 = vunpack.c.l.b16 %v1793
        %v1834 = vunpack.c.l.b16 %v1794
        %v1835 = vunpack.c.l.b16 %v1795
        %v1836 = vunpack.c.l.b16 %v1796
        %v1837 = vunpack.c.l.b16 %v1797
        %v1838 = vunpack.c.l.b16 %v1798
        %v1839 = vunpack.c.l.b16 %v1799
        %v1840 = vunpack.c.l.b16 %v1800
        %v1841 = vunpack.c.l.b16 %v1801
        %v1842 = vpack.c.b16 %v1827, %v1826
        %v1843 = vpack.c.b16 %v1829, %v1828
        %v1844 = vpack.c.b16 %v1831, %v1830
        %v1845 = vpack.c.b16 %v1833, %v1832
        %v1846 = vpack.c.b16 %v1835, %v1834
        %v1847 = vpack.c.b16 %v1837, %v1836
        %v1848 = vpack.c.b16 %v1839, %v1838
        %v1849 = vpack.c.b16 %v1841, %v1840
        %1858 = vmatprep.subr.bf16.mxu0 0
        %1859 = vmatpush1.bf16.msra.mxu0 %v1849
        %1860 = vmatprep.subr.bf16.mxu0 0
        %1861 = vmatpush1.bf16.msra.mxu0 %v1848
        %1862 = vmatprep.subr.bf16.mxu0 0
        %1863 = vmatpush1.bf16.msra.mxu0 %v1847
        %1864 = vmatprep.subr.bf16.mxu0 0
        %1865 = vmatpush1.bf16.msra.mxu0 %v1846
        %1866 = vmatprep.subr.bf16.mxu0 0
        %1867 = vmatpush1.bf16.msra.mxu0 %v1845
        %1868 = vmatprep.subr.bf16.mxu0 0
        %1869 = vmatpush1.bf16.msra.mxu0 %v1844
        %1870 = vmatprep.subr.bf16.mxu0 0
        %1871 = vmatpush1.bf16.msra.mxu0 %v1843
        %1872 = vmatprep.subr.bf16.mxu0 0
        %1873 = vmatpush1.bf16.msra.mxu0 %v1842
        %1874 = vmatprep.subr.bf16.mxu0 0
        %1875 = vmatpush2.bf16.msra.mxu0 0
        %1876 = vmatprep.subr.bf16.mxu0 0
        %1877 = vmatpush2.bf16.msra.mxu0 0
        %1878 = vmatprep.subr.bf16.mxu0 0
        %1879 = vmatpush2.bf16.msra.mxu0 0
        %1880 = vmatprep.subr.bf16.mxu0 0
        %1881 = vmatpush2.bf16.msra.mxu0 0
        %1882 = vmatprep.subr.bf16.mxu0 0
        %1883 = vmatpush2.bf16.msra.mxu0 0
        %1884 = vmatprep.subr.bf16.mxu0 0
        %1885 = vmatpush2.bf16.msra.mxu0 0
        %1886 = vmatprep.subr.bf16.mxu0 0
        %1887 = vmatpush2.bf16.msra.mxu0 0
        %1888 = vmatprep.subr.bf16.mxu0 0
        %1889 = vmatpush2.bf16.msra.mxu0 0
        %1890 = vmatprep.mubr.bf16.mxu0 0
        %1891 = vmatmul.mubr.bf16.gmra.mxu0 %v1803
        %v1892 = vpop.f32.mrf.mxu0
        %v1893 = vadd.f32 %v1808, %v1892
        %v1894 = vpop.f32.mrf.mxu0
        %v1895 = vpop.f32.mrf.mxu0
        %v1896 = vpop.f32.mrf.mxu0
        %1897 = vdwg.mxu0
        %v1898 = vmax.f32 %v1893, 0.0
        %v1899 = vld [vmem:[#allocation13] sm:$0xf]
        %v1900 = vld [vmem:[#allocation13 + $0x4] sm:$0xf]
        %v1901 = vld [vmem:[#allocation13 + $0x8] sm:$0xf]
        %v1902 = vld [vmem:[#allocation13 + $0xc] sm:$0xf]
        %v1903 = vld [vmem:[#allocation13 + $0x10] sm:$0xf]
        %v1904 = vld [vmem:[#allocation13 + $0x14] sm:$0xf]
        %v1905 = vld [vmem:[#allocation13 + $0x18] sm:$0xf]
        %v1906 = vld [vmem:[#allocation13 + $0x1c] sm:$0xf]
        %v1907 = vld [vmem:[#allocation13 + $0x20] sm:$0xf]
        %v1908 = vld [vmem:[#allocation13 + $0x24] sm:$0xf]
        %v1909 = vld [vmem:[#allocation13 + $0x28] sm:$0xf]
        %v1910 = vld [vmem:[#allocation13 + $0x2c] sm:$0xf]
        %v1911 = vld [vmem:[#allocation13 + $0x30] sm:$0xf]
        %v1912 = vld [vmem:[#allocation13 + $0x34] sm:$0xf]
        %v1913 = vld [vmem:[#allocation13 + $0x38] sm:$0xf]
        %v1914 = vld [vmem:[#allocation13 + $0x3c] sm:$0xf]
        %v1915 = vld [vmem:[%s12] sm:$0x1]
        %v1916 = vpack.c.bf16 %v1898, %v1898
        %v1918 = vlaneseq
        %v1919 = vshrl.u32 %v1918, 7
        %v1920 = vsub.s32 0, %v1919
        %v1921 = vrot.slane %v1915, %v1920
        %v1939 = vunpack.c.l.b16 %v1899
        %v1940 = vunpack.c.l.b16 %v1900
        %v1941 = vunpack.c.l.b16 %v1901
        %v1942 = vunpack.c.l.b16 %v1902
        %v1943 = vunpack.c.l.b16 %v1903
        %v1944 = vunpack.c.l.b16 %v1904
        %v1945 = vunpack.c.l.b16 %v1905
        %v1946 = vunpack.c.l.b16 %v1906
        %v1947 = vunpack.c.l.b16 %v1907
        %v1948 = vunpack.c.l.b16 %v1908
        %v1949 = vunpack.c.l.b16 %v1909
        %v1950 = vunpack.c.l.b16 %v1910
        %v1951 = vunpack.c.l.b16 %v1911
        %v1952 = vunpack.c.l.b16 %v1912
        %v1953 = vunpack.c.l.b16 %v1913
        %v1954 = vunpack.c.l.b16 %v1914
        %v1955 = vpack.c.b16 %v1940, %v1939
        %v1956 = vpack.c.b16 %v1942, %v1941
        %v1957 = vpack.c.b16 %v1944, %v1943
        %v1958 = vpack.c.b16 %v1946, %v1945
        %v1959 = vpack.c.b16 %v1948, %v1947
        %v1960 = vpack.c.b16 %v1950, %v1949
        %v1961 = vpack.c.b16 %v1952, %v1951
        %v1962 = vpack.c.b16 %v1954, %v1953
        %1971 = vmatprep.subr.bf16.mxu0 0
        %1972 = vmatpush1.bf16.msra.mxu0 %v1962
        %1973 = vmatprep.subr.bf16.mxu0 0
        %1974 = vmatpush1.bf16.msra.mxu0 %v1961
        %1975 = vmatprep.subr.bf16.mxu0 0
        %1976 = vmatpush1.bf16.msra.mxu0 %v1960
        %1977 = vmatprep.subr.bf16.mxu0 0
        %1978 = vmatpush1.bf16.msra.mxu0 %v1959
        %1979 = vmatprep.subr.bf16.mxu0 0
        %1980 = vmatpush1.bf16.msra.mxu0 %v1958
        %1981 = vmatprep.subr.bf16.mxu0 0
        %1982 = vmatpush1.bf16.msra.mxu0 %v1957
        %1983 = vmatprep.subr.bf16.mxu0 0
        %1984 = vmatpush1.bf16.msra.mxu0 %v1956
        %1985 = vmatprep.subr.bf16.mxu0 0
        %1986 = vmatpush1.bf16.msra.mxu0 %v1955
        %1987 = vmatprep.subr.bf16.mxu0 0
        %1988 = vmatpush2.bf16.msra.mxu0 0
        %1989 = vmatprep.subr.bf16.mxu0 0
        %1990 = vmatpush2.bf16.msra.mxu0 0
        %1991 = vmatprep.subr.bf16.mxu0 0
        %1992 = vmatpush2.bf16.msra.mxu0 0
        %1993 = vmatprep.subr.bf16.mxu0 0
        %1994 = vmatpush2.bf16.msra.mxu0 0
        %1995 = vmatprep.subr.bf16.mxu0 0
        %1996 = vmatpush2.bf16.msra.mxu0 0
        %1997 = vmatprep.subr.bf16.mxu0 0
        %1998 = vmatpush2.bf16.msra.mxu0 0
        %1999 = vmatprep.subr.bf16.mxu0 0
        %2000 = vmatpush2.bf16.msra.mxu0 0
        %2001 = vmatprep.subr.bf16.mxu0 0
        %2002 = vmatpush2.bf16.msra.mxu0 0
        %2003 = vmatprep.mubr.bf16.mxu0 0
        %2004 = vmatmul.mubr.bf16.gmra.mxu0 %v1916
        %v2005 = vpop.f32.mrf.mxu0
        %v2006 = vadd.f32 %v1921, %v2005
        %v2007 = vpop.f32.mrf.mxu0
        %v2008 = vpop.f32.mrf.mxu0
        %v2009 = vpop.f32.mrf.mxu0
        %2010 = vdwg.mxu0
        %v2011 = vmax.f32 %v2006, 0.0
        %v2012 = vld [vmem:[#allocation14] sm:$0xf]
        %v2013 = vld [vmem:[#allocation14 + $0x4] sm:$0xf]
        %v2014 = vld [vmem:[#allocation14 + $0x8] sm:$0xf]
        %v2015 = vld [vmem:[#allocation14 + $0xc] sm:$0xf]
        %v2016 = vld [vmem:[#allocation14 + $0x10] sm:$0xf]
        %v2017 = vld [vmem:[#allocation14 + $0x14] sm:$0xf]
        %v2018 = vld [vmem:[#allocation14 + $0x18] sm:$0xf]
        %v2019 = vld [vmem:[#allocation14 + $0x1c] sm:$0xf]
        %v2020 = vld [vmem:[#allocation14 + $0x20] sm:$0xf]
        %v2021 = vld [vmem:[#allocation14 + $0x24] sm:$0xf]
        %v2022 = vld [vmem:[#allocation14 + $0x28] sm:$0xf]
        %v2023 = vld [vmem:[#allocation14 + $0x2c] sm:$0xf]
        %v2024 = vld [vmem:[#allocation14 + $0x30] sm:$0xf]
        %v2025 = vld [vmem:[#allocation14 + $0x34] sm:$0xf]
        %v2026 = vld [vmem:[#allocation14 + $0x38] sm:$0xf]
        %v2027 = vld [vmem:[#allocation14 + $0x3c] sm:$0xf]
        %v2028 = vld [vmem:[%s14] sm:$0x1]
        %v2029 = vpack.c.bf16 %v2011, %v2011
        %v2031 = vlaneseq
        %v2032 = vshrl.u32 %v2031, 7
        %v2033 = vsub.s32 0, %v2032
        %v2034 = vrot.slane %v2028, %v2033
        %v2052 = vunpack.c.l.b16 %v2012
        %v2053 = vunpack.c.l.b16 %v2013
        %v2054 = vunpack.c.l.b16 %v2014
        %v2055 = vunpack.c.l.b16 %v2015
        %v2056 = vunpack.c.l.b16 %v2016
        %v2057 = vunpack.c.l.b16 %v2017
        %v2058 = vunpack.c.l.b16 %v2018
        %v2059 = vunpack.c.l.b16 %v2019
        %v2060 = vunpack.c.l.b16 %v2020
        %v2061 = vunpack.c.l.b16 %v2021
        %v2062 = vunpack.c.l.b16 %v2022
        %v2063 = vunpack.c.l.b16 %v2023
        %v2064 = vunpack.c.l.b16 %v2024
        %v2065 = vunpack.c.l.b16 %v2025
        %v2066 = vunpack.c.l.b16 %v2026
        %v2067 = vunpack.c.l.b16 %v2027
        %v2068 = vpack.c.b16 %v2053, %v2052
        %v2069 = vpack.c.b16 %v2055, %v2054
        %v2070 = vpack.c.b16 %v2057, %v2056
        %v2071 = vpack.c.b16 %v2059, %v2058
        %v2072 = vpack.c.b16 %v2061, %v2060
        %v2073 = vpack.c.b16 %v2063, %v2062
        %v2074 = vpack.c.b16 %v2065, %v2064
        %v2075 = vpack.c.b16 %v2067, %v2066
        %2084 = vmatprep.subr.bf16.mxu0 0
        %2085 = vmatpush1.bf16.msra.mxu0 %v2075
        %2086 = vmatprep.subr.bf16.mxu0 0
        %2087 = vmatpush1.bf16.msra.mxu0 %v2074
        %2088 = vmatprep.subr.bf16.mxu0 0
        %2089 = vmatpush1.bf16.msra.mxu0 %v2073
        %2090 = vmatprep.subr.bf16.mxu0 0
        %2091 = vmatpush1.bf16.msra.mxu0 %v2072
        %2092 = vmatprep.subr.bf16.mxu0 0
        %2093 = vmatpush1.bf16.msra.mxu0 %v2071
        %2094 = vmatprep.subr.bf16.mxu0 0
        %2095 = vmatpush1.bf16.msra.mxu0 %v2070
        %2096 = vmatprep.subr.bf16.mxu0 0
        %2097 = vmatpush1.bf16.msra.mxu0 %v2069
        %2098 = vmatprep.subr.bf16.mxu0 0
        %2099 = vmatpush1.bf16.msra.mxu0 %v2068
        %2100 = vmatprep.subr.bf16.mxu0 0
        %2101 = vmatpush2.bf16.msra.mxu0 0
        %2102 = vmatprep.subr.bf16.mxu0 0
        %2103 = vmatpush2.bf16.msra.mxu0 0
        %2104 = vmatprep.subr.bf16.mxu0 0
        %2105 = vmatpush2.bf16.msra.mxu0 0
        %2106 = vmatprep.subr.bf16.mxu0 0
        %2107 = vmatpush2.bf16.msra.mxu0 0
        %2108 = vmatprep.subr.bf16.mxu0 0
        %2109 = vmatpush2.bf16.msra.mxu0 0
        %2110 = vmatprep.subr.bf16.mxu0 0
        %2111 = vmatpush2.bf16.msra.mxu0 0
        %2112 = vmatprep.subr.bf16.mxu0 0
        %2113 = vmatpush2.bf16.msra.mxu0 0
        %2114 = vmatprep.subr.bf16.mxu0 0
        %2115 = vmatpush2.bf16.msra.mxu0 0
        %2116 = vmatprep.mubr.bf16.mxu0 0
        %2117 = vmatmul.mubr.bf16.gmra.mxu0 %v2029
        %v2118 = vpop.f32.mrf.mxu0
        %v2119 = vadd.f32 %v2034, %v2118
        %v2120 = vpop.f32.mrf.mxu0
        %v2121 = vpop.f32.mrf.mxu0
        %v2122 = vpop.f32.mrf.mxu0
        %2123 = vdwg.mxu0
        %v2124 = vmax.f32 %v2119, 0.0
        %v2125 = vld [vmem:[#allocation16] sm:$0xf]
        %v2126 = vld [vmem:[#allocation16 + $0x4] sm:$0xf]
        %v2127 = vld [vmem:[#allocation16 + $0x8] sm:$0xf]
        %v2128 = vld [vmem:[#allocation16 + $0xc] sm:$0xf]
        %v2129 = vld [vmem:[#allocation16 + $0x10] sm:$0xf]
        %v2130 = vld [vmem:[#allocation16 + $0x14] sm:$0xf]
        %v2131 = vld [vmem:[#allocation16 + $0x18] sm:$0xf]
        %v2132 = vld [vmem:[#allocation16 + $0x1c] sm:$0xf]
        %v2133 = vld [vmem:[#allocation16 + $0x20] sm:$0xf]
        %v2134 = vld [vmem:[#allocation16 + $0x24] sm:$0xf]
        %v2135 = vld [vmem:[#allocation16 + $0x28] sm:$0xf]
        %v2136 = vld [vmem:[#allocation16 + $0x2c] sm:$0xf]
        %v2137 = vld [vmem:[#allocation16 + $0x30] sm:$0xf]
        %v2138 = vld [vmem:[#allocation16 + $0x34] sm:$0xf]
        %v2139 = vld [vmem:[#allocation16 + $0x38] sm:$0xf]
        %v2140 = vld [vmem:[#allocation16 + $0x3c] sm:$0xf]
        %v2141 = vld [vmem:[%s16] sm:$0x1]
        %v2142 = vpack.c.bf16 %v2124, %v2124
        %v2144 = vlaneseq
        %v2145 = vshrl.u32 %v2144, 7
        %v2146 = vsub.s32 0, %v2145
        %v2147 = vrot.slane %v2141, %v2146
        %v2165 = vunpack.c.l.b16 %v2125
        %v2166 = vunpack.c.l.b16 %v2126
        %v2167 = vunpack.c.l.b16 %v2127
        %v2168 = vunpack.c.l.b16 %v2128
        %v2169 = vunpack.c.l.b16 %v2129
        %v2170 = vunpack.c.l.b16 %v2130
        %v2171 = vunpack.c.l.b16 %v2131
        %v2172 = vunpack.c.l.b16 %v2132
        %v2173 = vunpack.c.l.b16 %v2133
        %v2174 = vunpack.c.l.b16 %v2134
        %v2175 = vunpack.c.l.b16 %v2135
        %v2176 = vunpack.c.l.b16 %v2136
        %v2177 = vunpack.c.l.b16 %v2137
        %v2178 = vunpack.c.l.b16 %v2138
        %v2179 = vunpack.c.l.b16 %v2139
        %v2180 = vunpack.c.l.b16 %v2140
        %v2181 = vpack.c.b16 %v2166, %v2165
        %v2182 = vpack.c.b16 %v2168, %v2167
        %v2183 = vpack.c.b16 %v2170, %v2169
        %v2184 = vpack.c.b16 %v2172, %v2171
        %v2185 = vpack.c.b16 %v2174, %v2173
        %v2186 = vpack.c.b16 %v2176, %v2175
        %v2187 = vpack.c.b16 %v2178, %v2177
        %v2188 = vpack.c.b16 %v2180, %v2179
        %2197 = vmatprep.subr.bf16.mxu0 0
        %2198 = vmatpush1.bf16.msra.mxu0 %v2188
        %2199 = vmatprep.subr.bf16.mxu0 0
        %2200 = vmatpush1.bf16.msra.mxu0 %v2187
        %2201 = vmatprep.subr.bf16.mxu0 0
        %2202 = vmatpush1.bf16.msra.mxu0 %v2186
        %2203 = vmatprep.subr.bf16.mxu0 0
        %2204 = vmatpush1.bf16.msra.mxu0 %v2185
        %2205 = vmatprep.subr.bf16.mxu0 0
        %2206 = vmatpush1.bf16.msra.mxu0 %v2184
        %2207 = vmatprep.subr.bf16.mxu0 0
        %2208 = vmatpush1.bf16.msra.mxu0 %v2183
        %2209 = vmatprep.subr.bf16.mxu0 0
        %2210 = vmatpush1.bf16.msra.mxu0 %v2182
        %2211 = vmatprep.subr.bf16.mxu0 0
        %2212 = vmatpush1.bf16.msra.mxu0 %v2181
        %2213 = vmatprep.subr.bf16.mxu0 0
        %2214 = vmatpush2.bf16.msra.mxu0 0
        %2215 = vmatprep.subr.bf16.mxu0 0
        %2216 = vmatpush2.bf16.msra.mxu0 0
        %2217 = vmatprep.subr.bf16.mxu0 0
        %2218 = vmatpush2.bf16.msra.mxu0 0
        %2219 = vmatprep.subr.bf16.mxu0 0
        %2220 = vmatpush2.bf16.msra.mxu0 0
        %2221 = vmatprep.subr.bf16.mxu0 0
        %2222 = vmatpush2.bf16.msra.mxu0 0
        %2223 = vmatprep.subr.bf16.mxu0 0
        %2224 = vmatpush2.bf16.msra.mxu0 0
        %2225 = vmatprep.subr.bf16.mxu0 0
        %2226 = vmatpush2.bf16.msra.mxu0 0
        %2227 = vmatprep.subr.bf16.mxu0 0
        %2228 = vmatpush2.bf16.msra.mxu0 0
        %2229 = vmatprep.mubr.bf16.mxu0 0
        %2230 = vmatmul.mubr.bf16.gmra.mxu0 %v2142
        %v2231 = vpop.f32.mrf.mxu0
        %v2232 = vadd.f32 %v2147, %v2231
        %v2233 = vpop.f32.mrf.mxu0
        %v2234 = vpop.f32.mrf.mxu0
        %v2235 = vpop.f32.mrf.mxu0
        %2236 = vdwg.mxu0
        %v2237 = vmax.f32 %v2232, 0.0
        %v2238 = vld [vmem:[#allocation17] sm:$0xff]
        %v2239 = vld [vmem:[#allocation17 + $0x8] sm:$0xff]
        %v2240 = vld [vmem:[#allocation17 + $0x10] sm:$0xff]
        %v2241 = vld [vmem:[#allocation17 + $0x18] sm:$0xff]
        %v2242 = vld [vmem:[#allocation17 + $0x20] sm:$0xff]
        %v2243 = vld [vmem:[#allocation17 + $0x28] sm:$0xff]
        %v2244 = vld [vmem:[#allocation17 + $0x30] sm:$0xff]
        %v2245 = vld [vmem:[#allocation17 + $0x38] sm:$0xff]
        %v2246 = vld [vmem:[#allocation17 + $0x40] sm:$0xff]
        %v2247 = vld [vmem:[#allocation17 + $0x48] sm:$0xff]
        %v2248 = vld [vmem:[#allocation17 + $0x50] sm:$0xff]
        %v2249 = vld [vmem:[#allocation17 + $0x58] sm:$0xff]
        %v2250 = vld [vmem:[#allocation17 + $0x60] sm:$0xff]
        %v2251 = vld [vmem:[#allocation17 + $0x68] sm:$0xff]
        %v2252 = vld [vmem:[#allocation17 + $0x70] sm:$0xff]
        %v2253 = vld [vmem:[#allocation17 + $0x78] sm:$0xff]
        %v2254 = vld [vmem:[#allocation17 + $0x80] sm:$0xff]
        %v2255 = vld [vmem:[#allocation17 + $0x88] sm:$0xff]
        %v2256 = vld [vmem:[#allocation17 + $0x90] sm:$0xff]
        %v2257 = vld [vmem:[#allocation17 + $0x98] sm:$0xff]
        %v2258 = vld [vmem:[#allocation17 + $0xa0] sm:$0xff]
        %v2259 = vld [vmem:[#allocation17 + $0xa8] sm:$0xff]
        %v2260 = vld [vmem:[#allocation17 + $0xb0] sm:$0xff]
        %v2261 = vld [vmem:[#allocation17 + $0xb8] sm:$0xff]
        %v2262 = vld [vmem:[#allocation17 + $0xc0] sm:$0xff]
        %v2263 = vld [vmem:[#allocation17 + $0xc8] sm:$0xff]
        %v2264 = vld [vmem:[#allocation17 + $0xd0] sm:$0xff]
        %v2265 = vld [vmem:[#allocation17 + $0xd8] sm:$0xff]
        %v2266 = vld [vmem:[#allocation17 + $0xe0] sm:$0xff]
        %v2267 = vld [vmem:[#allocation17 + $0xe8] sm:$0xff]
        %v2268 = vld [vmem:[#allocation17 + $0xf0] sm:$0xff]
        %v2269 = vld [vmem:[#allocation17 + $0xf8] sm:$0xff]
        %v2270 = vld [vmem:[#allocation17 + $0x100] sm:$0xff]
        %v2271 = vld [vmem:[#allocation17 + $0x108] sm:$0xff]
        %v2272 = vld [vmem:[#allocation17 + $0x110] sm:$0xff]
        %v2273 = vld [vmem:[#allocation17 + $0x118] sm:$0xff]
        %v2274 = vld [vmem:[#allocation17 + $0x120] sm:$0xff]
        %v2275 = vld [vmem:[#allocation17 + $0x128] sm:$0xff]
        %v2276 = vld [vmem:[#allocation17 + $0x130] sm:$0xff]
        %v2277 = vld [vmem:[#allocation17 + $0x138] sm:$0xff]
        %v2278 = vld [vmem:[#allocation17 + $0x140] sm:$0xff]
        %v2279 = vld [vmem:[#allocation17 + $0x148] sm:$0xff]
        %v2280 = vld [vmem:[#allocation17 + $0x150] sm:$0xff]
        %v2281 = vld [vmem:[#allocation17 + $0x158] sm:$0xff]
        %v2282 = vld [vmem:[#allocation17 + $0x160] sm:$0xff]
        %v2283 = vld [vmem:[#allocation17 + $0x168] sm:$0xff]
        %v2284 = vld [vmem:[#allocation17 + $0x170] sm:$0xff]
        %v2285 = vld [vmem:[#allocation17 + $0x178] sm:$0xff]
        %v2286 = vld [vmem:[#allocation17 + $0x180] sm:$0xff]
        %v2287 = vld [vmem:[#allocation17 + $0x188] sm:$0xff]
        %v2288 = vld [vmem:[#allocation17 + $0x190] sm:$0xff]
        %v2289 = vld [vmem:[#allocation17 + $0x198] sm:$0xff]
        %v2290 = vld [vmem:[#allocation17 + $0x1a0] sm:$0xff]
        %v2291 = vld [vmem:[#allocation17 + $0x1a8] sm:$0xff]
        %v2292 = vld [vmem:[#allocation17 + $0x1b0] sm:$0xff]
        %v2293 = vld [vmem:[#allocation17 + $0x1b8] sm:$0xff]
        %v2294 = vld [vmem:[#allocation17 + $0x1c0] sm:$0xff]
        %v2295 = vld [vmem:[#allocation17 + $0x1c8] sm:$0xff]
        %v2296 = vld [vmem:[#allocation17 + $0x1d0] sm:$0xff]
        %v2297 = vld [vmem:[#allocation17 + $0x1d8] sm:$0xff]
        %v2298 = vld [vmem:[#allocation17 + $0x1e0] sm:$0xff]
        %v2299 = vld [vmem:[#allocation17 + $0x1e8] sm:$0xff]
        %v2300 = vld [vmem:[#allocation17 + $0x1f0] sm:$0xff]
        %v2301 = vld [vmem:[#allocation17 + $0x1f8] sm:$0xff]
        %v2302 = vld [vmem:[%s18] sm:$0xff]
        %v2303 = vpack.c.bf16 %v2237, %v2237
        %v2305 = vlaneseq
        %v2306 = vshrl.u32 %v2305, 7
        %v2307 = vsub.s32 0, %v2306
        %v2308 = vrot.slane %v2302, %v2307
        %v2309 = vlaneseq
        %v2310 = vshrl.u32 %v2309, 7
        %v2311 = vsub.s32 1, %v2310
        %v2312 = vrot.slane %v2302, %v2311
        %v2313 = vlaneseq
        %v2314 = vshrl.u32 %v2313, 7
        %v2315 = vsub.s32 2, %v2314
        %v2316 = vrot.slane %v2302, %v2315
        %v2317 = vlaneseq
        %v2318 = vshrl.u32 %v2317, 7
        %v2319 = vsub.s32 3, %v2318
        %v2320 = vrot.slane %v2302, %v2319
        %v2321 = vlaneseq
        %v2322 = vshrl.u32 %v2321, 7
        %v2323 = vsub.s32 4, %v2322
        %v2324 = vrot.slane %v2302, %v2323
        %v2325 = vlaneseq
        %v2326 = vshrl.u32 %v2325, 7
        %v2327 = vsub.s32 5, %v2326
        %v2328 = vrot.slane %v2302, %v2327
        %v2329 = vlaneseq
        %v2330 = vshrl.u32 %v2329, 7
        %v2331 = vsub.s32 6, %v2330
        %v2332 = vrot.slane %v2302, %v2331
        %v2333 = vlaneseq
        %v2334 = vshrl.u32 %v2333, 7
        %v2335 = vsub.s32 7, %v2334
        %v2336 = vrot.slane %v2302, %v2335
        %v2409 = vunpack.c.l.b16 %v2238
        %v2410 = vunpack.c.h.b16 %v2238
        %v2411 = vunpack.c.l.b16 %v2239
        %v2412 = vunpack.c.h.b16 %v2239
        %v2413 = vunpack.c.l.b16 %v2240
        %v2414 = vunpack.c.h.b16 %v2240
        %v2415 = vunpack.c.l.b16 %v2241
        %v2416 = vunpack.c.h.b16 %v2241
        %v2417 = vunpack.c.l.b16 %v2242
        %v2418 = vunpack.c.h.b16 %v2242
        %v2419 = vunpack.c.l.b16 %v2243
        %v2420 = vunpack.c.h.b16 %v2243
        %v2421 = vunpack.c.l.b16 %v2244
        %v2422 = vunpack.c.h.b16 %v2244
        %v2423 = vunpack.c.l.b16 %v2245
        %v2424 = vunpack.c.h.b16 %v2245
        %v2425 = vunpack.c.l.b16 %v2246
        %v2426 = vunpack.c.h.b16 %v2246
        %v2427 = vunpack.c.l.b16 %v2247
        %v2428 = vunpack.c.h.b16 %v2247
        %v2429 = vunpack.c.l.b16 %v2248
        %v2430 = vunpack.c.h.b16 %v2248
        %v2431 = vunpack.c.l.b16 %v2249
        %v2432 = vunpack.c.h.b16 %v2249
        %v2433 = vunpack.c.l.b16 %v2250
        %v2434 = vunpack.c.h.b16 %v2250
        %v2435 = vunpack.c.l.b16 %v2251
        %v2436 = vunpack.c.h.b16 %v2251
        %v2437 = vunpack.c.l.b16 %v2252
        %v2438 = vunpack.c.h.b16 %v2252
        %v2439 = vunpack.c.l.b16 %v2253
        %v2440 = vunpack.c.h.b16 %v2253
        %v2441 = vunpack.c.l.b16 %v2254
        %v2442 = vunpack.c.h.b16 %v2254
        %v2443 = vunpack.c.l.b16 %v2255
        %v2444 = vunpack.c.h.b16 %v2255
        %v2445 = vunpack.c.l.b16 %v2256
        %v2446 = vunpack.c.h.b16 %v2256
        %v2447 = vunpack.c.l.b16 %v2257
        %v2448 = vunpack.c.h.b16 %v2257
        %v2449 = vunpack.c.l.b16 %v2258
        %v2450 = vunpack.c.h.b16 %v2258
        %v2451 = vunpack.c.l.b16 %v2259
        %v2452 = vunpack.c.h.b16 %v2259
        %v2453 = vunpack.c.l.b16 %v2260
        %v2454 = vunpack.c.h.b16 %v2260
        %v2455 = vunpack.c.l.b16 %v2261
        %v2456 = vunpack.c.h.b16 %v2261
        %v2457 = vunpack.c.l.b16 %v2262
        %v2458 = vunpack.c.h.b16 %v2262
        %v2459 = vunpack.c.l.b16 %v2263
        %v2460 = vunpack.c.h.b16 %v2263
        %v2461 = vunpack.c.l.b16 %v2264
        %v2462 = vunpack.c.h.b16 %v2264
        %v2463 = vunpack.c.l.b16 %v2265
        %v2464 = vunpack.c.h.b16 %v2265
        %v2465 = vunpack.c.l.b16 %v2266
        %v2466 = vunpack.c.h.b16 %v2266
        %v2467 = vunpack.c.l.b16 %v2267
        %v2468 = vunpack.c.h.b16 %v2267
        %v2469 = vunpack.c.l.b16 %v2268
        %v2470 = vunpack.c.h.b16 %v2268
        %v2471 = vunpack.c.l.b16 %v2269
        %v2472 = vunpack.c.h.b16 %v2269
        %v2473 = vunpack.c.l.b16 %v2270
        %v2474 = vunpack.c.h.b16 %v2270
        %v2475 = vunpack.c.l.b16 %v2271
        %v2476 = vunpack.c.h.b16 %v2271
        %v2477 = vunpack.c.l.b16 %v2272
        %v2478 = vunpack.c.h.b16 %v2272
        %v2479 = vunpack.c.l.b16 %v2273
        %v2480 = vunpack.c.h.b16 %v2273
        %v2481 = vunpack.c.l.b16 %v2274
        %v2482 = vunpack.c.h.b16 %v2274
        %v2483 = vunpack.c.l.b16 %v2275
        %v2484 = vunpack.c.h.b16 %v2275
        %v2485 = vunpack.c.l.b16 %v2276
        %v2486 = vunpack.c.h.b16 %v2276
        %v2487 = vunpack.c.l.b16 %v2277
        %v2488 = vunpack.c.h.b16 %v2277
        %v2489 = vunpack.c.l.b16 %v2278
        %v2490 = vunpack.c.h.b16 %v2278
        %v2491 = vunpack.c.l.b16 %v2279
        %v2492 = vunpack.c.h.b16 %v2279
        %v2493 = vunpack.c.l.b16 %v2280
        %v2494 = vunpack.c.h.b16 %v2280
        %v2495 = vunpack.c.l.b16 %v2281
        %v2496 = vunpack.c.h.b16 %v2281
        %v2497 = vunpack.c.l.b16 %v2282
        %v2498 = vunpack.c.h.b16 %v2282
        %v2499 = vunpack.c.l.b16 %v2283
        %v2500 = vunpack.c.h.b16 %v2283
        %v2501 = vunpack.c.l.b16 %v2284
        %v2502 = vunpack.c.h.b16 %v2284
        %v2503 = vunpack.c.l.b16 %v2285
        %v2504 = vunpack.c.h.b16 %v2285
        %v2505 = vunpack.c.l.b16 %v2286
        %v2506 = vunpack.c.h.b16 %v2286
        %v2507 = vunpack.c.l.b16 %v2287
        %v2508 = vunpack.c.h.b16 %v2287
        %v2509 = vunpack.c.l.b16 %v2288
        %v2510 = vunpack.c.h.b16 %v2288
        %v2511 = vunpack.c.l.b16 %v2289
        %v2512 = vunpack.c.h.b16 %v2289
        %v2513 = vunpack.c.l.b16 %v2290
        %v2514 = vunpack.c.h.b16 %v2290
        %v2515 = vunpack.c.l.b16 %v2291
        %v2516 = vunpack.c.h.b16 %v2291
        %v2517 = vunpack.c.l.b16 %v2292
        %v2518 = vunpack.c.h.b16 %v2292
        %v2519 = vunpack.c.l.b16 %v2293
        %v2520 = vunpack.c.h.b16 %v2293
        %v2521 = vunpack.c.l.b16 %v2294
        %v2522 = vunpack.c.h.b16 %v2294
        %v2523 = vunpack.c.l.b16 %v2295
        %v2524 = vunpack.c.h.b16 %v2295
        %v2525 = vunpack.c.l.b16 %v2296
        %v2526 = vunpack.c.h.b16 %v2296
        %v2527 = vunpack.c.l.b16 %v2297
        %v2528 = vunpack.c.h.b16 %v2297
        %v2529 = vunpack.c.l.b16 %v2298
        %v2530 = vunpack.c.h.b16 %v2298
        %v2531 = vunpack.c.l.b16 %v2299
        %v2532 = vunpack.c.h.b16 %v2299
        %v2533 = vunpack.c.l.b16 %v2300
        %v2534 = vunpack.c.h.b16 %v2300
        %v2535 = vunpack.c.l.b16 %v2301
        %v2536 = vunpack.c.h.b16 %v2301
        %v2537 = vpack.c.b16 %v2417, %v2409
        %v2538 = vpack.c.b16 %v2418, %v2410
        %v2539 = vpack.c.b16 %v2419, %v2411
        %v2540 = vpack.c.b16 %v2420, %v2412
        %v2541 = vpack.c.b16 %v2421, %v2413
        %v2542 = vpack.c.b16 %v2422, %v2414
        %v2543 = vpack.c.b16 %v2423, %v2415
        %v2544 = vpack.c.b16 %v2424, %v2416
        %v2545 = vpack.c.b16 %v2433, %v2425
        %v2546 = vpack.c.b16 %v2434, %v2426
        %v2547 = vpack.c.b16 %v2435, %v2427
        %v2548 = vpack.c.b16 %v2436, %v2428
        %v2549 = vpack.c.b16 %v2437, %v2429
        %v2550 = vpack.c.b16 %v2438, %v2430
        %v2551 = vpack.c.b16 %v2439, %v2431
        %v2552 = vpack.c.b16 %v2440, %v2432
        %v2553 = vpack.c.b16 %v2449, %v2441
        %v2554 = vpack.c.b16 %v2450, %v2442
        %v2555 = vpack.c.b16 %v2451, %v2443
        %v2556 = vpack.c.b16 %v2452, %v2444
        %v2557 = vpack.c.b16 %v2453, %v2445
        %v2558 = vpack.c.b16 %v2454, %v2446
        %v2559 = vpack.c.b16 %v2455, %v2447
        %v2560 = vpack.c.b16 %v2456, %v2448
        %v2561 = vpack.c.b16 %v2465, %v2457
        %v2562 = vpack.c.b16 %v2466, %v2458
        %v2563 = vpack.c.b16 %v2467, %v2459
        %v2564 = vpack.c.b16 %v2468, %v2460
        %v2565 = vpack.c.b16 %v2469, %v2461
        %v2566 = vpack.c.b16 %v2470, %v2462
        %v2567 = vpack.c.b16 %v2471, %v2463
        %v2568 = vpack.c.b16 %v2472, %v2464
        %v2569 = vpack.c.b16 %v2481, %v2473
        %v2570 = vpack.c.b16 %v2482, %v2474
        %v2571 = vpack.c.b16 %v2483, %v2475
        %v2572 = vpack.c.b16 %v2484, %v2476
        %v2573 = vpack.c.b16 %v2485, %v2477
        %v2574 = vpack.c.b16 %v2486, %v2478
        %v2575 = vpack.c.b16 %v2487, %v2479
        %v2576 = vpack.c.b16 %v2488, %v2480
        %v2577 = vpack.c.b16 %v2497, %v2489
        %v2578 = vpack.c.b16 %v2498, %v2490
        %v2579 = vpack.c.b16 %v2499, %v2491
        %v2580 = vpack.c.b16 %v2500, %v2492
        %v2581 = vpack.c.b16 %v2501, %v2493
        %v2582 = vpack.c.b16 %v2502, %v2494
        %v2583 = vpack.c.b16 %v2503, %v2495
        %v2584 = vpack.c.b16 %v2504, %v2496
        %v2585 = vpack.c.b16 %v2513, %v2505
        %v2586 = vpack.c.b16 %v2514, %v2506
        %v2587 = vpack.c.b16 %v2515, %v2507
        %v2588 = vpack.c.b16 %v2516, %v2508
        %v2589 = vpack.c.b16 %v2517, %v2509
        %v2590 = vpack.c.b16 %v2518, %v2510
        %v2591 = vpack.c.b16 %v2519, %v2511
        %v2592 = vpack.c.b16 %v2520, %v2512
        %v2593 = vpack.c.b16 %v2529, %v2521
        %v2594 = vpack.c.b16 %v2530, %v2522
        %v2595 = vpack.c.b16 %v2531, %v2523
        %v2596 = vpack.c.b16 %v2532, %v2524
        %v2597 = vpack.c.b16 %v2533, %v2525
        %v2598 = vpack.c.b16 %v2534, %v2526
        %v2599 = vpack.c.b16 %v2535, %v2527
        %v2600 = vpack.c.b16 %v2536, %v2528
        %2665 = vmatprep.subr.bf16.mxu0 %v2594
        %2666 = vmatpush1.bf16.msra.mxu0 %v2593
        %2667 = vmatprep.subr.bf16.mxu0 %v2586
        %2668 = vmatpush1.bf16.msra.mxu0 %v2585
        %2669 = vmatprep.subr.bf16.mxu0 %v2578
        %2670 = vmatpush1.bf16.msra.mxu0 %v2577
        %2671 = vmatprep.subr.bf16.mxu0 %v2570
        %2672 = vmatpush1.bf16.msra.mxu0 %v2569
        %2673 = vmatprep.subr.bf16.mxu0 %v2562
        %2674 = vmatpush1.bf16.msra.mxu0 %v2561
        %2675 = vmatprep.subr.bf16.mxu0 %v2554
        %2676 = vmatpush1.bf16.msra.mxu0 %v2553
        %2677 = vmatprep.subr.bf16.mxu0 %v2546
        %2678 = vmatpush1.bf16.msra.mxu0 %v2545
        %2679 = vmatprep.subr.bf16.mxu0 %v2538
        %2680 = vmatpush1.bf16.msra.mxu0 %v2537
        %2681 = vmatprep.subr.bf16.mxu0 0
        %2682 = vmatpush2.bf16.msra.mxu0 0
        %2683 = vmatprep.subr.bf16.mxu0 0
        %2684 = vmatpush2.bf16.msra.mxu0 0
        %2685 = vmatprep.subr.bf16.mxu0 0
        %2686 = vmatpush2.bf16.msra.mxu0 0
        %2687 = vmatprep.subr.bf16.mxu0 0
        %2688 = vmatpush2.bf16.msra.mxu0 0
        %2689 = vmatprep.subr.bf16.mxu0 0
        %2690 = vmatpush2.bf16.msra.mxu0 0
        %2691 = vmatprep.subr.bf16.mxu0 0
        %2692 = vmatpush2.bf16.msra.mxu0 0
        %2693 = vmatprep.subr.bf16.mxu0 0
        %2694 = vmatpush2.bf16.msra.mxu0 0
        %2695 = vmatprep.subr.bf16.mxu0 0
        %2696 = vmatpush2.bf16.msra.mxu0 0
        %2697 = vmatprep.mubr.bf16.mxu0 0
        %2698 = vmatmul.mubr.bf16.gmra.mxu0 %v2303
        %v2699 = vpop.f32.mrf.mxu0
        %v2700 = vadd.f32 %v2308, %v2699
        %v2701 = vpop.f32.mrf.mxu0
        %v2702 = vadd.f32 %v2312, %v2701
        %v2703 = vpop.f32.mrf.mxu0
        %v2704 = vpop.f32.mrf.mxu0
        %2705 = vdwg.mxu0
        %2706 = vmatprep.subr.bf16.mxu0 %v2596
        %2707 = vmatpush1.bf16.msra.mxu0 %v2595
        %2708 = vmatprep.subr.bf16.mxu0 %v2588
        %2709 = vmatpush1.bf16.msra.mxu0 %v2587
        %2710 = vmatprep.subr.bf16.mxu0 %v2580
        %2711 = vmatpush1.bf16.msra.mxu0 %v2579
        %2712 = vmatprep.subr.bf16.mxu0 %v2572
        %2713 = vmatpush1.bf16.msra.mxu0 %v2571
        %2714 = vmatprep.subr.bf16.mxu0 %v2564
        %2715 = vmatpush1.bf16.msra.mxu0 %v2563
        %2716 = vmatprep.subr.bf16.mxu0 %v2556
        %2717 = vmatpush1.bf16.msra.mxu0 %v2555
        %2718 = vmatprep.subr.bf16.mxu0 %v2548
        %2719 = vmatpush1.bf16.msra.mxu0 %v2547
        %2720 = vmatprep.subr.bf16.mxu0 %v2540
        %2721 = vmatpush1.bf16.msra.mxu0 %v2539
        %2722 = vmatprep.subr.bf16.mxu0 0
        %2723 = vmatpush2.bf16.msra.mxu0 0
        %2724 = vmatprep.subr.bf16.mxu0 0
        %2725 = vmatpush2.bf16.msra.mxu0 0
        %2726 = vmatprep.subr.bf16.mxu0 0
        %2727 = vmatpush2.bf16.msra.mxu0 0
        %2728 = vmatprep.subr.bf16.mxu0 0
        %2729 = vmatpush2.bf16.msra.mxu0 0
        %2730 = vmatprep.subr.bf16.mxu0 0
        %2731 = vmatpush2.bf16.msra.mxu0 0
        %2732 = vmatprep.subr.bf16.mxu0 0
        %2733 = vmatpush2.bf16.msra.mxu0 0
        %2734 = vmatprep.subr.bf16.mxu0 0
        %2735 = vmatpush2.bf16.msra.mxu0 0
        %2736 = vmatprep.subr.bf16.mxu0 0
        %2737 = vmatpush2.bf16.msra.mxu0 0
        %2738 = vmatprep.mubr.bf16.mxu0 0
        %2739 = vmatmul.mubr.bf16.gmra.mxu0 %v2303
        %v2740 = vpop.f32.mrf.mxu0
        %v2741 = vadd.f32 %v2316, %v2740
        %v2742 = vpop.f32.mrf.mxu0
        %v2743 = vadd.f32 %v2320, %v2742
        %v2744 = vpop.f32.mrf.mxu0
        %v2745 = vpop.f32.mrf.mxu0
        %2746 = vdwg.mxu0
        %2747 = vmatprep.subr.bf16.mxu0 %v2598
        %2748 = vmatpush1.bf16.msra.mxu0 %v2597
        %2749 = vmatprep.subr.bf16.mxu0 %v2590
        %2750 = vmatpush1.bf16.msra.mxu0 %v2589
        %2751 = vmatprep.subr.bf16.mxu0 %v2582
        %2752 = vmatpush1.bf16.msra.mxu0 %v2581
        %2753 = vmatprep.subr.bf16.mxu0 %v2574
        %2754 = vmatpush1.bf16.msra.mxu0 %v2573
        %2755 = vmatprep.subr.bf16.mxu0 %v2566
        %2756 = vmatpush1.bf16.msra.mxu0 %v2565
        %2757 = vmatprep.subr.bf16.mxu0 %v2558
        %2758 = vmatpush1.bf16.msra.mxu0 %v2557
        %2759 = vmatprep.subr.bf16.mxu0 %v2550
        %2760 = vmatpush1.bf16.msra.mxu0 %v2549
        %2761 = vmatprep.subr.bf16.mxu0 %v2542
        %2762 = vmatpush1.bf16.msra.mxu0 %v2541
        %2763 = vmatprep.subr.bf16.mxu0 0
        %2764 = vmatpush2.bf16.msra.mxu0 0
        %2765 = vmatprep.subr.bf16.mxu0 0
        %2766 = vmatpush2.bf16.msra.mxu0 0
        %2767 = vmatprep.subr.bf16.mxu0 0
        %2768 = vmatpush2.bf16.msra.mxu0 0
        %2769 = vmatprep.subr.bf16.mxu0 0
        %2770 = vmatpush2.bf16.msra.mxu0 0
        %2771 = vmatprep.subr.bf16.mxu0 0
        %2772 = vmatpush2.bf16.msra.mxu0 0
        %2773 = vmatprep.subr.bf16.mxu0 0
        %2774 = vmatpush2.bf16.msra.mxu0 0
        %2775 = vmatprep.subr.bf16.mxu0 0
        %2776 = vmatpush2.bf16.msra.mxu0 0
        %2777 = vmatprep.subr.bf16.mxu0 0
        %2778 = vmatpush2.bf16.msra.mxu0 0
        %2779 = vmatprep.mubr.bf16.mxu0 0
        %2780 = vmatmul.mubr.bf16.gmra.mxu0 %v2303
        %v2781 = vpop.f32.mrf.mxu0
        %v2782 = vadd.f32 %v2324, %v2781
        %v2783 = vpop.f32.mrf.mxu0
        %v2784 = vadd.f32 %v2328, %v2783
        %v2785 = vpop.f32.mrf.mxu0
        %v2786 = vpop.f32.mrf.mxu0
        %2787 = vdwg.mxu0
        %2788 = vmatprep.subr.bf16.mxu0 %v2600
        %2789 = vmatpush1.bf16.msra.mxu0 %v2599
        %2790 = vmatprep.subr.bf16.mxu0 %v2592
        %2791 = vmatpush1.bf16.msra.mxu0 %v2591
        %2792 = vmatprep.subr.bf16.mxu0 %v2584
        %2793 = vmatpush1.bf16.msra.mxu0 %v2583
        %2794 = vmatprep.subr.bf16.mxu0 %v2576
        %2795 = vmatpush1.bf16.msra.mxu0 %v2575
        %2796 = vmatprep.subr.bf16.mxu0 %v2568
        %2797 = vmatpush1.bf16.msra.mxu0 %v2567
        %2798 = vmatprep.subr.bf16.mxu0 %v2560
        %2799 = vmatpush1.bf16.msra.mxu0 %v2559
        %2800 = vmatprep.subr.bf16.mxu0 %v2552
        %2801 = vmatpush1.bf16.msra.mxu0 %v2551
        %2802 = vmatprep.subr.bf16.mxu0 %v2544
        %2803 = vmatpush1.bf16.msra.mxu0 %v2543
        %2804 = vmatprep.subr.bf16.mxu0 0
        %2805 = vmatpush2.bf16.msra.mxu0 0
        %2806 = vmatprep.subr.bf16.mxu0 0
        %2807 = vmatpush2.bf16.msra.mxu0 0
        %2808 = vmatprep.subr.bf16.mxu0 0
        %2809 = vmatpush2.bf16.msra.mxu0 0
        %2810 = vmatprep.subr.bf16.mxu0 0
        %2811 = vmatpush2.bf16.msra.mxu0 0
        %2812 = vmatprep.subr.bf16.mxu0 0
        %2813 = vmatpush2.bf16.msra.mxu0 0
        %2814 = vmatprep.subr.bf16.mxu0 0
        %2815 = vmatpush2.bf16.msra.mxu0 0
        %2816 = vmatprep.subr.bf16.mxu0 0
        %2817 = vmatpush2.bf16.msra.mxu0 0
        %2818 = vmatprep.subr.bf16.mxu0 0
        %2819 = vmatpush2.bf16.msra.mxu0 0
        %2820 = vmatprep.mubr.bf16.mxu0 0
        %2821 = vmatmul.mubr.bf16.gmra.mxu0 %v2303
        %v2822 = vpop.f32.mrf.mxu0
        %v2823 = vadd.f32 %v2332, %v2822
        %v2824 = vpop.f32.mrf.mxu0
        %v2825 = vadd.f32 %v2336, %v2824
        %v2826 = vpop.f32.mrf.mxu0
        %v2827 = vpop.f32.mrf.mxu0
        %2828 = vdwg.mxu0
        %v2829 = vxor.u32 %v2700, 2147483648
        %v2830 = vxor.u32 %v2702, 2147483648
        %v2831 = vxor.u32 %v2741, 2147483648
        %v2832 = vxor.u32 %v2743, 2147483648
        %v2833 = vxor.u32 %v2782, 2147483648
        %v2834 = vxor.u32 %v2784, 2147483648
        %v2835 = vxor.u32 %v2823, 2147483648
        %v2836 = vxor.u32 %v2825, 2147483648
        %v2837 = vmul.f32 %v2829, 1.442695
        %v2838 = vpow.pop %v2837
        %v2839 = vmul.f32 %v2830, 1.442695
        %v2840 = vpow.pop %v2839
        %v2841 = vmul.f32 %v2831, 1.442695
        %v2842 = vpow.pop %v2841
        %v2843 = vmul.f32 %v2832, 1.442695
        %v2844 = vpow.pop %v2843
        %v2845 = vmul.f32 %v2833, 1.442695
        %v2846 = vpow.pop %v2845
        %v2847 = vmul.f32 %v2834, 1.442695
        %v2848 = vpow.pop %v2847
        %v2849 = vmul.f32 %v2835, 1.442695
        %v2850 = vpow.pop %v2849
        %v2851 = vmul.f32 %v2836, 1.442695
        %v2852 = vpow.pop %v2851
        %v2853 = vadd.f32 %v2838, 1.0
        %v2854 = vadd.f32 %v2840, 1.0
        %v2855 = vadd.f32 %v2842, 1.0
        %v2856 = vadd.f32 %v2844, 1.0
        %v2857 = vadd.f32 %v2846, 1.0
        %v2858 = vadd.f32 %v2848, 1.0
        %v2859 = vadd.f32 %v2850, 1.0
        %v2860 = vadd.f32 %v2852, 1.0
        %v2861 = vrcp.pop %v2853
        %v2862 = vmul.f32 1.0, %v2861
        %v2863 = vrcp.pop %v2854
        %v2864 = vmul.f32 1.0, %v2863
        %v2865 = vrcp.pop %v2855
        %v2866 = vmul.f32 1.0, %v2865
        %v2867 = vrcp.pop %v2856
        %v2868 = vmul.f32 1.0, %v2867
        %v2869 = vrcp.pop %v2857
        %v2870 = vmul.f32 1.0, %v2869
        %v2871 = vrcp.pop %v2858
        %v2872 = vmul.f32 1.0, %v2871
        %v2873 = vrcp.pop %v2859
        %v2874 = vmul.f32 1.0, %v2873
        %v2875 = vrcp.pop %v2860
        %v2876 = vmul.f32 1.0, %v2875
        %2877 = vst [vmem:[%s749] sm:$0xff] %v2862
        %2878 = vst [vmem:[%s749 + $0x8] sm:$0xff] %v2864
        %2879 = vst [vmem:[%s749 + $0x10] sm:$0xff] %v2866
        %2880 = vst [vmem:[%s749 + $0x18] sm:$0xff] %v2868
        %2881 = vst [vmem:[%s749 + $0x20] sm:$0xff] %v2870
        %2882 = vst [vmem:[%s749 + $0x28] sm:$0xff] %v2872
        %2883 = vst [vmem:[%s749 + $0x30] sm:$0xff] %v2874
        %2884 = vst [vmem:[%s749 + $0x38] sm:$0xff] %v2876
        %s2885 = sand.u32 %s453, 1
        %s2886 = scalar_lea.sflag [#allocation4], %s2885
        %s2887 = sand.u32 %s453, 1
        %s2888 = smul.addr %s2887, 64
        %s2889 = scalar_lea.vmem [#allocation19], %s2888
        // Predicated region
        $region137: #{tpu_custom_call.1} parent=95 // pred_check
          %p2890 = pneg %p463
        $region138: #{tpu_custom_call.1} parent=95 // pred_check_branch
          %2892 = sbr.rel (%p2890) target = $region140
        $region139: #{tpu_custom_call.1} parent=95 // pred_region
          %s2894 = ssub.s32 1024, 1024
          %2895 = vsyncadd %s2886, %s2894
          %s2896 = smul.addr %s41, 8
          %s2897 = smul.addr %s2896, 128
          %s2898 = scalar_lea.hbm %s19, %s2897
          %s2900 = sshll.u32 %s2889, 4
          %s2901 = int_to_ptr.vmem [resolvable:$true] %s2900
          %2903 = dma.vmem_to_hbm [thread:$0]  %s2901, 1024, %s2898, %s2886
        $region140: #{tpu_custom_call.1} parent=95 // pred_fallthru
          _
      $region96: #{tpu_custom_call.1} parent=5 // pred_fallthru
        _
      %p2904 = scmp.le.s32.totalorder 2, %s36
      // Predicated region
      $region141: #{tpu_custom_call.1} parent=5 // pred_check
        %p2905 = pneg %p2904
      $region142: #{tpu_custom_call.1} parent=5 // pred_check_branch
        %2907 = sbr.rel (%p2905) target = $region144
      $region143: #{tpu_custom_call.1} parent=5 // pred_region
        %s2908 = ssub.s32 %s36, 2
        // Predicated region
        $region145: #{tpu_custom_call.1} parent=143 // pred_check
          %p2909 = pneg %p469
        $region146: #{tpu_custom_call.1} parent=143 // pred_check_branch
          %2911 = sbr.rel (%p2909) target = $region148
        $region147: #{tpu_custom_call.1} parent=143 // pred_region
          %s2912 = sand.u32 %s454, 1
          %s2913 = scalar_lea.sflag [#allocation4], %s2912
          %s2914 = sand.u32 %s454, 1
          %s2915 = smul.addr %s2914, 64
          %s2916 = scalar_lea.vmem [#allocation19], %s2915
          %2917 = dma.done %s2913, 1024
        $region148: #{tpu_custom_call.1} parent=143 // pred_fallthru
          _
      $region144: #{tpu_custom_call.1} parent=5 // pred_fallthru
        _
    $region6: #{tpu_custom_call.1} parent=1 // loop_footer
      %s40 = sadd.s32 1, %s36
    $region7: #{tpu_custom_call.1} parent=1 // loop_footer_branch
      %35 = sbr.rel target = $region3
    $region8: #{tpu_custom_call.1} parent=1 // loop_exit
      _
    %2918 = vsyncpa [#allocation3], 1
    %s2919 = scalar_lea.sflag [#allocation3], 1
    %2920 = vsyncpa %s2919, 1
    %2921 = vsyncpa [#allocation6], 1
    %2922 = vsyncpa [#allocation9], 1
    %2923 = vsyncpa [#allocation12], 1
    %2924 = vsyncpa [#allocation15], 1
    %2925 = vsyncpa [#allocation18], 1
    %2926 = vsyncpa [#allocation4], 1
    %s2927 = scalar_lea.sflag [#allocation4], 1
    %2928 = vsyncpa %s2927, 1

// kernel: tpu_custom_call.1
$region0: #{tpu_custom_call.1}
  #allocation0 [shape = 'u32[]', space=smem, size = 0x4, offset = 0x4, fixed_abs, tag = 'smem constant byte address 0x4 - core index']
  #allocation1 [shape = 'u32[144,128]{1,0:T(1,128)}', space=vmem, size = 0x12000, scoped, tag = 'internal scratch']
  %s0 = inlined_call_operand.hbm [shape: f32[12,1024], index: 0, kind: input, shape index: {}]
  %s1 = inlined_call_operand.hbm [shape: bf16[1024,128], index: 1, kind: input, shape index: {}]
  %s2 = inlined_call_operand.vmem [shape: f32[1,128], index: 2, kind: input, shape index: {}]
  %s3 = inlined_call_operand.hbm [shape: bf16[128,128], index: 3, kind: input, shape index: {}]
  %s4 = inlined_call_operand.vmem [shape: f32[1,128], index: 4, kind: input, shape index: {}]
  %s5 = inlined_call_operand.hbm [shape: bf16[128,128], index: 5, kind: input, shape index: {}]
  %s6 = inlined_call_operand.vmem [shape: f32[1,128], index: 6, kind: input, shape index: {}]
  %s7 = inlined_call_operand.hbm [shape: bf16[128,128], index: 7, kind: input, shape index: {}]
  %s8 = inlined_call_operand.vmem [shape: f32[1,128], index: 8, kind: input, shape index: {}]
  %s9 = inlined_call_operand.hbm [shape: bf16[128,128], index: 9, kind: input, shape index: {}]
  %s10 = inlined_call_operand.vmem [shape: f32[1,128], index: 10, kind: input, shape index: {}]
  %s11 = inlined_call_operand.hbm [shape: bf16[128,128], index: 11, kind: input, shape index: {}]
  %s12 = inlined_call_operand.vmem [shape: f32[1,128], index: 12, kind: input, shape index: {}]
  %s13 = inlined_call_operand.hbm [shape: bf16[128,128], index: 13, kind: input, shape index: {}]
  %s14 = inlined_call_operand.vmem [shape: f32[1,128], index: 14, kind: input, shape index: {}]
  %s15 = inlined_call_operand.hbm [shape: bf16[128,128], index: 15, kind: input, shape index: {}]
  %s16 = inlined_call_operand.vmem [shape: f32[1,128], index: 16, kind: input, shape index: {}]
  %s17 = inlined_call_operand.hbm [shape: bf16[128,1024], index: 17, kind: input, shape index: {}]
  %s18 = inlined_call_operand.vmem [shape: f32[1,1024], index: 18, kind: input, shape index: {}]
  %s19 = inlined_call_operand.hbm [shape: f32[12,1024], index: 19, kind: output, shape index: {}]
  %s20 = sld [smem:[#allocation0]]
  $region149: #{tpu_custom_call.1} parent=0
    _
  %s22 = ssub.s32 1, %s20
  %s23 = scalar_select 0, %s22, %s20
  $region1: #{tpu_custom_call.1} parent=0
    #allocation2 [shape = 'u8[65536]{0}', space=vmem, size = 0x10000, scoped, tag = 'input window, operand 0']
    #allocation3 [shape = 's32[2]{0}', space=sflag, size = 0x8, scoped, tag = 'scoped memory for tpu_custom_call.1']
    #allocation4 [shape = 's32[2]{0}', space=sflag, size = 0x8, scoped, tag = 'scoped memory for tpu_custom_call.1']
    #allocation5 [shape = 'u8[262144]{0}', space=vmem, size = 0x40000, scoped, tag = 'input window, operand 1, single buffered']
    #allocation6 [shape = 's32[1]{0}', space=sflag, size = 0x4, scoped, tag = 'scoped memory for tpu_custom_call.1']
    #allocation7 [shape = 'u8[32768]{0}', space=vmem, size = 0x8000, scoped, tag = 'input window, operand 3, single buffered']
    #allocation8 [shape = 'u8[32768]{0}', space=vmem, size = 0x8000, scoped, tag = 'input window, operand 5, single buffered']
    #allocation9 [shape = 's32[1]{0}', space=sflag, size = 0x4, scoped, tag = 'scoped memory for tpu_custom_call.1']
    #allocation10 [shape = 'u8[32768]{0}', space=vmem, size = 0x8000, scoped, tag = 'input window, operand 7, single buffered']
    #allocation11 [shape = 'u8[32768]{0}', space=vmem, size = 0x8000, scoped, tag = 'input window, operand 9, single buffered']
    #allocation12 [shape = 's32[1]{0}', space=sflag, size = 0x4, scoped, tag = 'scoped memory for tpu_custom_call.1']
    #allocation13 [shape = 'u8[32768]{0}', space=vmem, size = 0x8000, scoped, tag = 'input window, operand 11, single buffered']
    #allocation14 [shape = 'u8[32768]{0}', space=vmem, size = 0x8000, scoped, tag = 'input window, operand 13, single buffered']
    #allocation15 [shape = 's32[1]{0}', space=sflag, size = 0x4, scoped, tag = 'scoped memory for tpu_custom_call.1']
    #allocation16 [shape = 'u8[32768]{0}', space=vmem, size = 0x8000, scoped, tag = 'input window, operand 15, single buffered']
    #allocation17 [shape = 'u8[262144]{0}', space=vmem, size = 0x40000, scoped, tag = 'input window, operand 17, single buffered']
    #allocation18 [shape = 's32[1]{0}', space=sflag, size = 0x4, scoped, tag = 'scoped memory for tpu_custom_call.1']
    #allocation19 [shape = 'u8[65536]{0}', space=vmem, size = 0x10000, scoped, tag = 'output window, operand 0']
    %24 = vsyncpa [#allocation3], 0
    %s25 = scalar_lea.sflag [#allocation3], 1
    %26 = vsyncpa %s25, 0
    %27 = vsyncpa [#allocation6], 0
    %28 = vsyncpa [#allocation9], 0
    %29 = vsyncpa [#allocation12], 0
    %30 = vsyncpa [#allocation15], 0
    %31 = vsyncpa [#allocation18], 0
    %32 = vsyncpa [#allocation4], 0
    %s33 = scalar_lea.sflag [#allocation4], 1
    %34 = vsyncpa %s33, 0
    loop: start=0, step=1, limit=4
    $region2: #{tpu_custom_call.1} parent=1 // loop_pre_header
      _
    $region3: #{tpu_custom_call.1} parent=1 // loop_header
      %s36 = sphi 0, %s40
      %p37 = scmp.ge.s32.totalorder %s36, 4
      %s46 = sphi 0, %s48
      %s49 = sphi 0, %s46
      %s50 = sphi 0, %s49
      %s66 = sphi 0, %s50
      %s70 = sphi 0, %s70
      %s72 = sphi 0, %s70
      %s73 = sphi 0, %s72
      %s87 = sphi 0, %s73
      %s91 = sphi 0, %s91
      %s93 = sphi 0, %s91
      %s94 = sphi 0, %s93
      %s108 = sphi 0, %s94
      %s112 = sphi 0, %s112
      %s114 = sphi 0, %s112
      %s115 = sphi 0, %s114
      %s129 = sphi 0, %s115
      %s133 = sphi 0, %s133
      %s135 = sphi 0, %s133
      %s136 = sphi 0, %s135
      %s150 = sphi 0, %s136
      %s154 = sphi 0, %s154
      %s156 = sphi 0, %s154
      %s157 = sphi 0, %s156
      %s171 = sphi 0, %s157
      %s175 = sphi 0, %s175
      %s177 = sphi 0, %s175
      %s178 = sphi 0, %s177
      %s192 = sphi 0, %s178
      %s196 = sphi 0, %s196
      %s198 = sphi 0, %s196
      %s199 = sphi 0, %s198
      %s213 = sphi 0, %s199
      %s217 = sphi 0, %s217
      %s219 = sphi 0, %s217
      %s220 = sphi 0, %s219
      %s234 = sphi 0, %s220
      %s238 = sphi 0, %s238
      %s240 = sphi 0, %s238
      %s241 = sphi 0, %s240
      %s255 = sphi 0, %s241
      %s259 = sphi 0, %s259
      %s261 = sphi 0, %s259
      %s262 = sphi 0, %s261
      %s276 = sphi 0, %s262
      %s280 = sphi 0, %s280
      %s282 = sphi 0, %s280
      %s283 = sphi 0, %s282
      %s297 = sphi 0, %s283
      %s301 = sphi 0, %s301
      %s303 = sphi 0, %s301
      %s304 = sphi 0, %s303
      %s318 = sphi 0, %s304
      %s322 = sphi 0, %s322
      %s324 = sphi 0, %s322
      %s325 = sphi 0, %s324
      %s339 = sphi 0, %s325
      %s343 = sphi 0, %s343
      %s345 = sphi 0, %s343
      %s346 = sphi 0, %s345
      %s360 = sphi 0, %s346
      %s364 = sphi 0, %s364
      %s366 = sphi 0, %s364
      %s367 = sphi 0, %s366
      %s381 = sphi 0, %s367
      %s385 = sphi 0, %s385
      %s387 = sphi 0, %s385
      %s388 = sphi 0, %s387
      %s402 = sphi 0, %s388
      %s406 = sphi 0, %s406
      %s408 = sphi 0, %s406
      %s409 = sphi 0, %s408
      %s423 = sphi 0, %s409
      %s427 = sphi 0, %s427
      %s429 = sphi 0, %s427
      %s430 = sphi 0, %s429
      %s444 = sphi 0, %s430
      %s450 = sphi 0, %s452
      %s453 = sphi 0, %s450
      %s454 = sphi 0, %s453
      %s470 = sphi 0, %s454
    $region4: #{tpu_custom_call.1} parent=1 // loop_header_branch
      %39 = sbr.rel (%p37) target = $region8
    $region5: #{tpu_custom_call.1} parent=1 // loop_body
      %s41 = ssub.s32 %s36, 1
      %s42 = ssub.s32 %s36, 2
      %s43 = sadd.s32 %s36, 1
      %s44 = ssub.s32 %s36, %s43
      %p45 = scmp.eq.s32.totalorder %s44, 0
      %s47 = sadd.s32 %s46, 1
      %s48 = scalar_select %p45, %s46, %s47
      %p51 = pneg %p45
      %p52 = scmp.eq.s32.totalorder %s36, 1
      %p53 = por %p51, %p52
      %p54 = scmp.ne.s32.totalorder %s46, %s49
      %p55 = scmp.eq.s32.totalorder %s36, 0
      %p56 = por %p54, %p55
      %p57 = scmp.ne.s32.totalorder %s46, %s49
      %p58 = scmp.eq.s32.totalorder %s41, 1
      %p59 = por %p57, %p58
      %p60 = scmp.ne.s32.totalorder %s49, %s50
      %p61 = scmp.eq.s32.totalorder %s41, 0
      %p62 = por %p60, %p61
      %p63 = scmp.ne.s32.totalorder %s49, %s50
      %p64 = scmp.eq.s32.totalorder %s42, 1
      %p65 = por %p63, %p64
      %p67 = scmp.ne.s32.totalorder %s50, %s66
      %p68 = scmp.eq.s32.totalorder %s42, 0
      %p69 = por %p67, %p68
      %s71 = sadd.s32 %s70, 1
      %p74 = scmp.eq.s32.totalorder %s36, 1
      %p75 = scmp.ne.s32.totalorder %s70, %s72
      %p76 = scmp.eq.s32.totalorder %s36, 0
      %p77 = por %p75, %p76
      %p78 = scmp.ne.s32.totalorder %s70, %s72
      %p79 = scmp.eq.s32.totalorder %s41, 1
      %p80 = por %p78, %p79
      %p81 = scmp.ne.s32.totalorder %s72, %s73
      %p82 = scmp.eq.s32.totalorder %s41, 0
      %p83 = por %p81, %p82
      %p84 = scmp.ne.s32.totalorder %s72, %s73
      %p85 = scmp.eq.s32.totalorder %s42, 1
      %p86 = por %p84, %p85
      %p88 = scmp.ne.s32.totalorder %s73, %s87
      %p89 = scmp.eq.s32.totalorder %s42, 0
      %p90 = por %p88, %p89
      %s92 = sadd.s32 %s91, 1
      %p95 = scmp.eq.s32.totalorder %s36, 1
      %p96 = scmp.ne.s32.totalorder %s91, %s93
      %p97 = scmp.eq.s32.totalorder %s36, 0
      %p98 = por %p96, %p97
      %p99 = scmp.ne.s32.totalorder %s91, %s93
      %p100 = scmp.eq.s32.totalorder %s41, 1
      %p101 = por %p99, %p100
      %p102 = scmp.ne.s32.totalorder %s93, %s94
      %p103 = scmp.eq.s32.totalorder %s41, 0
      %p104 = por %p102, %p103
      %p105 = scmp.ne.s32.totalorder %s93, %s94
      %p106 = scmp.eq.s32.totalorder %s42, 1
      %p107 = por %p105, %p106
      %p109 = scmp.ne.s32.totalorder %s94, %s108
      %p110 = scmp.eq.s32.totalorder %s42, 0
      %p111 = por %p109, %p110
      %s113 = sadd.s32 %s112, 1
      %p116 = scmp.eq.s32.totalorder %s36, 1
      %p117 = scmp.ne.s32.totalorder %s112, %s114
      %p118 = scmp.eq.s32.totalorder %s36, 0
      %p119 = por %p117, %p118
      %p120 = scmp.ne.s32.totalorder %s112, %s114
      %p121 = scmp.eq.s32.totalorder %s41, 1
      %p122 = por %p120, %p121
      %p123 = scmp.ne.s32.totalorder %s114, %s115
      %p124 = scmp.eq.s32.totalorder %s41, 0
      %p125 = por %p123, %p124
      %p126 = scmp.ne.s32.totalorder %s114, %s115
      %p127 = scmp.eq.s32.totalorder %s42, 1
      %p128 = por %p126, %p127
      %p130 = scmp.ne.s32.totalorder %s115, %s129
      %p131 = scmp.eq.s32.totalorder %s42, 0
      %p132 = por %p130, %p131
      %s134 = sadd.s32 %s133, 1
      %p137 = scmp.eq.s32.totalorder %s36, 1
      %p138 = scmp.ne.s32.totalorder %s133, %s135
      %p139 = scmp.eq.s32.totalorder %s36, 0
      %p140 = por %p138, %p139
      %p141 = scmp.ne.s32.totalorder %s133, %s135
      %p142 = scmp.eq.s32.totalorder %s41, 1
      %p143 = por %p141, %p142
      %p144 = scmp.ne.s32.totalorder %s135, %s136
      %p145 = scmp.eq.s32.totalorder %s41, 0
      %p146 = por %p144, %p145
      %p147 = scmp.ne.s32.totalorder %s135, %s136
      %p148 = scmp.eq.s32.totalorder %s42, 1
      %p149 = por %p147, %p148
      %p151 = scmp.ne.s32.totalorder %s136, %s150
      %p152 = scmp.eq.s32.totalorder %s42, 0
      %p153 = por %p151, %p152
      %s155 = sadd.s32 %s154, 1
      %p158 = scmp.eq.s32.totalorder %s36, 1
      %p159 = scmp.ne.s32.totalorder %s154, %s156
      %p160 = scmp.eq.s32.totalorder %s36, 0
      %p161 = por %p159, %p160
      %p162 = scmp.ne.s32.totalorder %s154, %s156
      %p163 = scmp.eq.s32.totalorder %s41, 1
      %p164 = por %p162, %p163
      %p165 = scmp.ne.s32.totalorder %s156, %s157
      %p166 = scmp.eq.s32.totalorder %s41, 0
      %p167 = por %p165, %p166
      %p168 = scmp.ne.s32.totalorder %s156, %s157
      %p169 = scmp.eq.s32.totalorder %s42, 1
      %p170 = por %p168, %p169
      %p172 = scmp.ne.s32.totalorder %s157, %s171
      %p173 = scmp.eq.s32.totalorder %s42, 0
      %p174 = por %p172, %p173
      %s176 = sadd.s32 %s175, 1
      %p179 = scmp.eq.s32.totalorder %s36, 1
      %p180 = scmp.ne.s32.totalorder %s175, %s177
      %p181 = scmp.eq.s32.totalorder %s36, 0
      %p182 = por %p180, %p181
      %p183 = scmp.ne.s32.totalorder %s175, %s177
      %p184 = scmp.eq.s32.totalorder %s41, 1
      %p185 = por %p183, %p184
      %p186 = scmp.ne.s32.totalorder %s177, %s178
      %p187 = scmp.eq.s32.totalorder %s41, 0
      %p188 = por %p186, %p187
      %p189 = scmp.ne.s32.totalorder %s177, %s178
      %p190 = scmp.eq.s32.totalorder %s42, 1
      %p191 = por %p189, %p190
      %p193 = scmp.ne.s32.totalorder %s178, %s192
      %p194 = scmp.eq.s32.totalorder %s42, 0
      %p195 = por %p193, %p194
      %s197 = sadd.s32 %s196, 1
      %p200 = scmp.eq.s32.totalorder %s36, 1
      %p201 = scmp.ne.s32.totalorder %s196, %s198
      %p202 = scmp.eq.s32.totalorder %s36, 0
      %p203 = por %p201, %p202
      %p204 = scmp.ne.s32.totalorder %s196, %s198
      %p205 = scmp.eq.s32.totalorder %s41, 1
      %p206 = por %p204, %p205
      %p207 = scmp.ne.s32.totalorder %s198, %s199
      %p208 = scmp.eq.s32.totalorder %s41, 0
      %p209 = por %p207, %p208
      %p210 = scmp.ne.s32.totalorder %s198, %s199
      %p211 = scmp.eq.s32.totalorder %s42, 1
      %p212 = por %p210, %p211
      %p214 = scmp.ne.s32.totalorder %s199, %s213
      %p215 = scmp.eq.s32.totalorder %s42, 0
      %p216 = por %p214, %p215
      %s218 = sadd.s32 %s217, 1
      %p221 = scmp.eq.s32.totalorder %s36, 1
      %p222 = scmp.ne.s32.totalorder %s217, %s219
      %p223 = scmp.eq.s32.totalorder %s36, 0
      %p224 = por %p222, %p223
      %p225 = scmp.ne.s32.totalorder %s217, %s219
      %p226 = scmp.eq.s32.totalorder %s41, 1
      %p227 = por %p225, %p226
      %p228 = scmp.ne.s32.totalorder %s219, %s220
      %p229 = scmp.eq.s32.totalorder %s41, 0
      %p230 = por %p228, %p229
      %p231 = scmp.ne.s32.totalorder %s219, %s220
      %p232 = scmp.eq.s32.totalorder %s42, 1
      %p233 = por %p231, %p232
      %p235 = scmp.ne.s32.totalorder %s220, %s234
      %p236 = scmp.eq.s32.totalorder %s42, 0
      %p237 = por %p235, %p236
      %s239 = sadd.s32 %s238, 1
      %p242 = scmp.eq.s32.totalorder %s36, 1
      %p243 = scmp.ne.s32.totalorder %s238, %s240
      %p244 = scmp.eq.s32.totalorder %s36, 0
      %p245 = por %p243, %p244
      %p246 = scmp.ne.s32.totalorder %s238, %s240
      %p247 = scmp.eq.s32.totalorder %s41, 1
      %p248 = por %p246, %p247
      %p249 = scmp.ne.s32.totalorder %s240, %s241
      %p250 = scmp.eq.s32.totalorder %s41, 0
      %p251 = por %p249, %p250
      %p252 = scmp.ne.s32.totalorder %s240, %s241
      %p253 = scmp.eq.s32.totalorder %s42, 1
      %p254 = por %p252, %p253
      %p256 = scmp.ne.s32.totalorder %s241, %s255
      %p257 = scmp.eq.s32.totalorder %s42, 0
      %p258 = por %p256, %p257
      %s260 = sadd.s32 %s259, 1
      %p263 = scmp.eq.s32.totalorder %s36, 1
      %p264 = scmp.ne.s32.totalorder %s259, %s261
      %p265 = scmp.eq.s32.totalorder %s36, 0
      %p266 = por %p264, %p265
      %p267 = scmp.ne.s32.totalorder %s259, %s261
      %p268 = scmp.eq.s32.totalorder %s41, 1
      %p269 = por %p267, %p268
      %p270 = scmp.ne.s32.totalorder %s261, %s262
      %p271 = scmp.eq.s32.totalorder %s41, 0
      %p272 = por %p270, %p271
      %p273 = scmp.ne.s32.totalorder %s261, %s262
      %p274 = scmp.eq.s32.totalorder %s42, 1
      %p275 = por %p273, %p274
      %p277 = scmp.ne.s32.totalorder %s262, %s276
      %p278 = scmp.eq.s32.totalorder %s42, 0
      %p279 = por %p277, %p278
      %s281 = sadd.s32 %s280, 1
      %p284 = scmp.eq.s32.totalorder %s36, 1
      %p285 = scmp.ne.s32.totalorder %s280, %s282
      %p286 = scmp.eq.s32.totalorder %s36, 0
      %p287 = por %p285, %p286
      %p288 = scmp.ne.s32.totalorder %s280, %s282
      %p289 = scmp.eq.s32.totalorder %s41, 1
      %p290 = por %p288, %p289
      %p291 = scmp.ne.s32.totalorder %s282, %s283
      %p292 = scmp.eq.s32.totalorder %s41, 0
      %p293 = por %p291, %p292
      %p294 = scmp.ne.s32.totalorder %s282, %s283
      %p295 = scmp.eq.s32.totalorder %s42, 1
      %p296 = por %p294, %p295
      %p298 = scmp.ne.s32.totalorder %s283, %s297
      %p299 = scmp.eq.s32.totalorder %s42, 0
      %p300 = por %p298, %p299
      %s302 = sadd.s32 %s301, 1
      %p305 = scmp.eq.s32.totalorder %s36, 1
      %p306 = scmp.ne.s32.totalorder %s301, %s303
      %p307 = scmp.eq.s32.totalorder %s36, 0
      %p308 = por %p306, %p307
      %p309 = scmp.ne.s32.totalorder %s301, %s303
      %p310 = scmp.eq.s32.totalorder %s41, 1
      %p311 = por %p309, %p310
      %p312 = scmp.ne.s32.totalorder %s303, %s304
      %p313 = scmp.eq.s32.totalorder %s41, 0
      %p314 = por %p312, %p313
      %p315 = scmp.ne.s32.totalorder %s303, %s304
      %p316 = scmp.eq.s32.totalorder %s42, 1
      %p317 = por %p315, %p316
      %p319 = scmp.ne.s32.totalorder %s304, %s318
      %p320 = scmp.eq.s32.totalorder %s42, 0
      %p321 = por %p319, %p320
      %s323 = sadd.s32 %s322, 1
      %p326 = scmp.eq.s32.totalorder %s36, 1
      %p327 = scmp.ne.s32.totalorder %s322, %s324
      %p328 = scmp.eq.s32.totalorder %s36, 0
      %p329 = por %p327, %p328
      %p330 = scmp.ne.s32.totalorder %s322, %s324
      %p331 = scmp.eq.s32.totalorder %s41, 1
      %p332 = por %p330, %p331
      %p333 = scmp.ne.s32.totalorder %s324, %s325
      %p334 = scmp.eq.s32.totalorder %s41, 0
      %p335 = por %p333, %p334
      %p336 = scmp.ne.s32.totalorder %s324, %s325
      %p337 = scmp.eq.s32.totalorder %s42, 1
      %p338 = por %p336, %p337
      %p340 = scmp.ne.s32.totalorder %s325, %s339
      %p341 = scmp.eq.s32.totalorder %s42, 0
      %p342 = por %p340, %p341
      %s344 = sadd.s32 %s343, 1
      %p347 = scmp.eq.s32.totalorder %s36, 1
      %p348 = scmp.ne.s32.totalorder %s343, %s345
      %p349 = scmp.eq.s32.totalorder %s36, 0
      %p350 = por %p348, %p349
      %p351 = scmp.ne.s32.totalorder %s343, %s345
      %p352 = scmp.eq.s32.totalorder %s41, 1
      %p353 = por %p351, %p352
      %p354 = scmp.ne.s32.totalorder %s345, %s346
      %p355 = scmp.eq.s32.totalorder %s41, 0
      %p356 = por %p354, %p355
      %p357 = scmp.ne.s32.totalorder %s345, %s346
      %p358 = scmp.eq.s32.totalorder %s42, 1
      %p359 = por %p357, %p358
      %p361 = scmp.ne.s32.totalorder %s346, %s360
      %p362 = scmp.eq.s32.totalorder %s42, 0
      %p363 = por %p361, %p362
      %s365 = sadd.s32 %s364, 1
      %p368 = scmp.eq.s32.totalorder %s36, 1
      %p369 = scmp.ne.s32.totalorder %s364, %s366
      %p370 = scmp.eq.s32.totalorder %s36, 0
      %p371 = por %p369, %p370
      %p372 = scmp.ne.s32.totalorder %s364, %s366
      %p373 = scmp.eq.s32.totalorder %s41, 1
      %p374 = por %p372, %p373
      %p375 = scmp.ne.s32.totalorder %s366, %s367
      %p376 = scmp.eq.s32.totalorder %s41, 0
      %p377 = por %p375, %p376
      %p378 = scmp.ne.s32.totalorder %s366, %s367
      %p379 = scmp.eq.s32.totalorder %s42, 1
      %p380 = por %p378, %p379
      %p382 = scmp.ne.s32.totalorder %s367, %s381
      %p383 = scmp.eq.s32.totalorder %s42, 0
      %p384 = por %p382, %p383
      %s386 = sadd.s32 %s385, 1
      %p389 = scmp.eq.s32.totalorder %s36, 1
      %p390 = scmp.ne.s32.totalorder %s385, %s387
      %p391 = scmp.eq.s32.totalorder %s36, 0
      %p392 = por %p390, %p391
      %p393 = scmp.ne.s32.totalorder %s385, %s387
      %p394 = scmp.eq.s32.totalorder %s41, 1
      %p395 = por %p393, %p394
      %p396 = scmp.ne.s32.totalorder %s387, %s388
      %p397 = scmp.eq.s32.totalorder %s41, 0
      %p398 = por %p396, %p397
      %p399 = scmp.ne.s32.totalorder %s387, %s388
      %p400 = scmp.eq.s32.totalorder %s42, 1
      %p401 = por %p399, %p400
      %p403 = scmp.ne.s32.totalorder %s388, %s402
      %p404 = scmp.eq.s32.totalorder %s42, 0
      %p405 = por %p403, %p404
      %s407 = sadd.s32 %s406, 1
      %p410 = scmp.eq.s32.totalorder %s36, 1
      %p411 = scmp.ne.s32.totalorder %s406, %s408
      %p412 = scmp.eq.s32.totalorder %s36, 0
      %p413 = por %p411, %p412
      %p414 = scmp.ne.s32.totalorder %s406, %s408
      %p415 = scmp.eq.s32.totalorder %s41, 1
      %p416 = por %p414, %p415
      %p417 = scmp.ne.s32.totalorder %s408, %s409
      %p418 = scmp.eq.s32.totalorder %s41, 0
      %p419 = por %p417, %p418
      %p420 = scmp.ne.s32.totalorder %s408, %s409
      %p421 = scmp.eq.s32.totalorder %s42, 1
      %p422 = por %p420, %p421
      %p424 = scmp.ne.s32.totalorder %s409, %s423
      %p425 = scmp.eq.s32.totalorder %s42, 0
      %p426 = por %p424, %p425
      %s428 = sadd.s32 %s427, 1
      %p431 = scmp.eq.s32.totalorder %s36, 1
      %p432 = scmp.ne.s32.totalorder %s427, %s429
      %p433 = scmp.eq.s32.totalorder %s36, 0
      %p434 = por %p432, %p433
      %p435 = scmp.ne.s32.totalorder %s427, %s429
      %p436 = scmp.eq.s32.totalorder %s41, 1
      %p437 = por %p435, %p436
      %p438 = scmp.ne.s32.totalorder %s429, %s430
      %p439 = scmp.eq.s32.totalorder %s41, 0
      %p440 = por %p438, %p439
      %p441 = scmp.ne.s32.totalorder %s429, %s430
      %p442 = scmp.eq.s32.totalorder %s42, 1
      %p443 = por %p441, %p442
      %p445 = scmp.ne.s32.totalorder %s430, %s444
      %p446 = scmp.eq.s32.totalorder %s42, 0
      %p447 = por %p445, %p446
      %s448 = ssub.s32 %s36, %s43
      %p449 = scmp.eq.s32.totalorder %s448, 0
      %s451 = sadd.s32 %s450, 1
      %s452 = scalar_select %p449, %s450, %s451
      %p455 = pneg %p449
      %p456 = scmp.eq.s32.totalorder %s36, 1
      %p457 = por %p455, %p456
      %p458 = scmp.ne.s32.totalorder %s450, %s453
      %p459 = scmp.eq.s32.totalorder %s36, 0
      %p460 = por %p458, %p459
      %p461 = scmp.ne.s32.totalorder %s450, %s453
      %p462 = scmp.eq.s32.totalorder %s41, 1
      %p463 = por %p461, %p462
      %p464 = scmp.ne.s32.totalorder %s453, %s454
      %p465 = scmp.eq.s32.totalorder %s41, 0
      %p466 = por %p464, %p465
      %p467 = scmp.ne.s32.totalorder %s453, %s454
      %p468 = scmp.eq.s32.totalorder %s42, 1
      %p469 = por %p467, %p468
      %p471 = scmp.ne.s32.totalorder %s454, %s470
      %p472 = scmp.eq.s32.totalorder %s42, 0
      %p473 = por %p471, %p472
      %p474 = scmp.le.s32.totalorder 1, %s36
      %p475 = scmp.lt.s32.totalorder %s36, 3
      %p476 = pnand %p474, %p475
      %p477 = pneg %p476
      // Predicated region
      $region9: #{tpu_custom_call.1} parent=5 // pred_check
        _
      $region10: #{tpu_custom_call.1} parent=5 // pred_check_branch
        %479 = sbr.rel (%p476) target = $region12
      $region11: #{tpu_custom_call.1} parent=5 // pred_region
        %s480 = ssub.s32 %s36, 1
        // Predicated region
        $region13: #{tpu_custom_call.1} parent=11 // pred_check
          %p481 = pneg %p83
        $region14: #{tpu_custom_call.1} parent=11 // pred_check_branch
          %483 = sbr.rel (%p481) target = $region16
        $region15: #{tpu_custom_call.1} parent=11 // pred_region
          %s485 = ssub.s32 8192, 8192
          %486 = vsyncadd [#allocation6], %s485
          %s487 = sshll.u32 [#allocation5], 4
          %s488 = int_to_ptr.vmem [resolvable:$true] %s487
          %493 = dma.hbm_to_vmem [thread:$0]  %s1, 8192, %s488, [#allocation6], 64, 64, 4
        $region16: #{tpu_custom_call.1} parent=11 // pred_fallthru
          _
        // Predicated region
        $region17: #{tpu_custom_call.1} parent=11 // pred_check
          %p494 = pneg %p104
        $region18: #{tpu_custom_call.1} parent=11 // pred_check_branch
          %496 = sbr.rel (%p494) target = $region20
        $region19: #{tpu_custom_call.1} parent=11 // pred_region
          _
        $region20: #{tpu_custom_call.1} parent=11 // pred_fallthru
          _
        // Predicated region
        $region21: #{tpu_custom_call.1} parent=11 // pred_check
          %p497 = pneg %p125
        $region22: #{tpu_custom_call.1} parent=11 // pred_check_branch
          %499 = sbr.rel (%p497) target = $region24
        $region23: #{tpu_custom_call.1} parent=11 // pred_region
          %s501 = ssub.s32 1024, 1024
          %502 = vsyncadd [#allocation6], %s501
          %s503 = sshll.u32 [#allocation7], 4
          %s504 = int_to_ptr.vmem [resolvable:$true] %s503
          %509 = dma.hbm_to_vmem [thread:$0]  %s3, 1024, %s504, [#allocation6], 64, 64, 4
        $region24: #{tpu_custom_call.1} parent=11 // pred_fallthru
          _
        // Predicated region
        $region25: #{tpu_custom_call.1} parent=11 // pred_check
          %p510 = pneg %p146
        $region26: #{tpu_custom_call.1} parent=11 // pred_check_branch
          %512 = sbr.rel (%p510) target = $region28
        $region27: #{tpu_custom_call.1} parent=11 // pred_region
          _
        $region28: #{tpu_custom_call.1} parent=11 // pred_fallthru
          _
        // Predicated region
        $region29: #{tpu_custom_call.1} parent=11 // pred_check
          %p513 = pneg %p167
        $region30: #{tpu_custom_call.1} parent=11 // pred_check_branch
          %515 = sbr.rel (%p513) target = $region32
        $region31: #{tpu_custom_call.1} parent=11 // pred_region
          %s517 = ssub.s32 1024, 1024
          %518 = vsyncadd [#allocation9], %s517
          %s519 = sshll.u32 [#allocation8], 4
          %s520 = int_to_ptr.vmem [resolvable:$true] %s519
          %525 = dma.hbm_to_vmem [thread:$0]  %s5, 1024, %s520, [#allocation9], 64, 64, 4
        $region32: #{tpu_custom_call.1} parent=11 // pred_fallthru
          _
        // Predicated region
        $region33: #{tpu_custom_call.1} parent=11 // pred_check
          %p526 = pneg %p188
        $region34: #{tpu_custom_call.1} parent=11 // pred_check_branch
          %528 = sbr.rel (%p526) target = $region36
        $region35: #{tpu_custom_call.1} parent=11 // pred_region
          _
        $region36: #{tpu_custom_call.1} parent=11 // pred_fallthru
          _
        // Predicated region
        $region37: #{tpu_custom_call.1} parent=11 // pred_check
          %p529 = pneg %p209
        $region38: #{tpu_custom_call.1} parent=11 // pred_check_branch
          %531 = sbr.rel (%p529) target = $region40
        $region39: #{tpu_custom_call.1} parent=11 // pred_region
          %s533 = ssub.s32 1024, 1024
          %534 = vsyncadd [#allocation9], %s533
          %s535 = sshll.u32 [#allocation10], 4
          %s536 = int_to_ptr.vmem [resolvable:$true] %s535
          %541 = dma.hbm_to_vmem [thread:$0]  %s7, 1024, %s536, [#allocation9], 64, 64, 4
        $region40: #{tpu_custom_call.1} parent=11 // pred_fallthru
          _
        // Predicated region
        $region41: #{tpu_custom_call.1} parent=11 // pred_check
          %p542 = pneg %p230
        $region42: #{tpu_custom_call.1} parent=11 // pred_check_branch
          %544 = sbr.rel (%p542) target = $region44
        $region43: #{tpu_custom_call.1} parent=11 // pred_region
          _
        $region44: #{tpu_custom_call.1} parent=11 // pred_fallthru
          _
        // Predicated region
        $region45: #{tpu_custom_call.1} parent=11 // pred_check
          %p545 = pneg %p251
        $region46: #{tpu_custom_call.1} parent=11 // pred_check_branch
          %547 = sbr.rel (%p545) target = $region48
        $region47: #{tpu_custom_call.1} parent=11 // pred_region
          %s549 = ssub.s32 1024, 1024
          %550 = vsyncadd [#allocation12], %s549
          %s551 = sshll.u32 [#allocation11], 4
          %s552 = int_to_ptr.vmem [resolvable:$true] %s551
          %557 = dma.hbm_to_vmem [thread:$0]  %s9, 1024, %s552, [#allocation12], 64, 64, 4
        $region48: #{tpu_custom_call.1} parent=11 // pred_fallthru
          _
        // Predicated region
        $region49: #{tpu_custom_call.1} parent=11 // pred_check
          %p558 = pneg %p272
        $region50: #{tpu_custom_call.1} parent=11 // pred_check_branch
          %560 = sbr.rel (%p558) target = $region52
        $region51: #{tpu_custom_call.1} parent=11 // pred_region
          _
        $region52: #{tpu_custom_call.1} parent=11 // pred_fallthru
          _
        // Predicated region
        $region53: #{tpu_custom_call.1} parent=11 // pred_check
          %p561 = pneg %p293
        $region54: #{tpu_custom_call.1} parent=11 // pred_check_branch
          %563 = sbr.rel (%p561) target = $region56
        $region55: #{tpu_custom_call.1} parent=11 // pred_region
          %s565 = ssub.s32 1024, 1024
          %566 = vsyncadd [#allocation12], %s565
          %s567 = sshll.u32 [#allocation13], 4
          %s568 = int_to_ptr.vmem [resolvable:$true] %s567
          %573 = dma.hbm_to_vmem [thread:$0]  %s11, 1024, %s568, [#allocation12], 64, 64, 4
        $region56: #{tpu_custom_call.1} parent=11 // pred_fallthru
          _
        // Predicated region
        $region57: #{tpu_custom_call.1} parent=11 // pred_check
          %p574 = pneg %p314
        $region58: #{tpu_custom_call.1} parent=11 // pred_check_branch
          %576 = sbr.rel (%p574) target = $region60
        $region59: #{tpu_custom_call.1} parent=11 // pred_region
          _
        $region60: #{tpu_custom_call.1} parent=11 // pred_fallthru
          _
        // Predicated region
        $region61: #{tpu_custom_call.1} parent=11 // pred_check
          %p577 = pneg %p335
        $region62: #{tpu_custom_call.1} parent=11 // pred_check_branch
          %579 = sbr.rel (%p577) target = $region64
        $region63: #{tpu_custom_call.1} parent=11 // pred_region
          %s581 = ssub.s32 1024, 1024
          %582 = vsyncadd [#allocation15], %s581
          %s583 = sshll.u32 [#allocation14], 4
          %s584 = int_to_ptr.vmem [resolvable:$true] %s583
          %589 = dma.hbm_to_vmem [thread:$0]  %s13, 1024, %s584, [#allocation15], 64, 64, 4
        $region64: #{tpu_custom_call.1} parent=11 // pred_fallthru
          _
        // Predicated region
        $region65: #{tpu_custom_call.1} parent=11 // pred_check
          %p590 = pneg %p356
        $region66: #{tpu_custom_call.1} parent=11 // pred_check_branch
          %592 = sbr.rel (%p590) target = $region68
        $region67: #{tpu_custom_call.1} parent=11 // pred_region
          _
        $region68: #{tpu_custom_call.1} parent=11 // pred_fallthru
          _
        // Predicated region
        $region69: #{tpu_custom_call.1} parent=11 // pred_check
          %p593 = pneg %p377
        $region70: #{tpu_custom_call.1} parent=11 // pred_check_branch
          %595 = sbr.rel (%p593) target = $region72
        $region71: #{tpu_custom_call.1} parent=11 // pred_region
          %s597 = ssub.s32 1024, 1024
          %598 = vsyncadd [#allocation15], %s597
          %s599 = sshll.u32 [#allocation16], 4
          %s600 = int_to_ptr.vmem [resolvable:$true] %s599
          %605 = dma.hbm_to_vmem [thread:$0]  %s15, 1024, %s600, [#allocation15], 64, 64, 4
        $region72: #{tpu_custom_call.1} parent=11 // pred_fallthru
          _
        // Predicated region
        $region73: #{tpu_custom_call.1} parent=11 // pred_check
          %p606 = pneg %p398
        $region74: #{tpu_custom_call.1} parent=11 // pred_check_branch
          %608 = sbr.rel (%p606) target = $region76
        $region75: #{tpu_custom_call.1} parent=11 // pred_region
          _
        $region76: #{tpu_custom_call.1} parent=11 // pred_fallthru
          _
        // Predicated region
        $region77: #{tpu_custom_call.1} parent=11 // pred_check
          %p609 = pneg %p419
        $region78: #{tpu_custom_call.1} parent=11 // pred_check_branch
          %611 = sbr.rel (%p609) target = $region80
        $region79: #{tpu_custom_call.1} parent=11 // pred_region
          %s613 = ssub.s32 8192, 8192
          %614 = vsyncadd [#allocation18], %s613
          %s615 = sshll.u32 [#allocation17], 4
          %s616 = int_to_ptr.vmem [resolvable:$true] %s615
          %621 = dma.hbm_to_vmem [thread:$0]  %s17, 8192, %s616, [#allocation18], 512, 512, 32
        $region80: #{tpu_custom_call.1} parent=11 // pred_fallthru
          _
        // Predicated region
        $region81: #{tpu_custom_call.1} parent=11 // pred_check
          %p622 = pneg %p440
        $region82: #{tpu_custom_call.1} parent=11 // pred_check_branch
          %624 = sbr.rel (%p622) target = $region84
        $region83: #{tpu_custom_call.1} parent=11 // pred_region
          _
        $region84: #{tpu_custom_call.1} parent=11 // pred_fallthru
          _
      $region12: #{tpu_custom_call.1} parent=5 // pred_fallthru
        _
      %p625 = scmp.lt.s32.totalorder %s36, 2
      // Predicated region
      $region85: #{tpu_custom_call.1} parent=5 // pred_check
        %p626 = pneg %p625
      $region86: #{tpu_custom_call.1} parent=5 // pred_check_branch
        %628 = sbr.rel (%p626) target = $region88
      $region87: #{tpu_custom_call.1} parent=5 // pred_region
        // Predicated region
        $region89: #{tpu_custom_call.1} parent=87 // pred_check
          %p629 = pneg %p56
        $region90: #{tpu_custom_call.1} parent=87 // pred_check_branch
          %631 = sbr.rel (%p629) target = $region92
        $region91: #{tpu_custom_call.1} parent=87 // pred_region
          %s632 = sand.u32 %s46, 1
          %s633 = scalar_lea.sflag [#allocation3], %s632
          %s634 = sand.u32 %s46, 1
          %s635 = smul.addr %s634, 64
          %s636 = scalar_lea.vmem [#allocation2], %s635
          %s638 = ssub.s32 1024, 1024
          %639 = vsyncadd %s633, %s638
          %s640 = smul.addr %s36, 8
          %s641 = smul.addr %s640, 128
          %s642 = scalar_lea.hbm %s0, %s641
          %s644 = sshll.u32 %s636, 4
          %s645 = int_to_ptr.vmem [resolvable:$true] %s644
          %647 = dma.hbm_to_vmem [thread:$0]  %s642, 1024, %s645, %s633
        $region92: #{tpu_custom_call.1} parent=87 // pred_fallthru
          _
      $region88: #{tpu_custom_call.1} parent=5 // pred_fallthru
        _
      %p648 = scmp.le.s32.totalorder 1, %s36
      %p649 = scmp.lt.s32.totalorder %s36, 3
      %p650 = pnand %p648, %p649
      %p651 = pneg %p650
      // Predicated region
      $region93: #{tpu_custom_call.1} parent=5 // pred_check
        _
      $region94: #{tpu_custom_call.1} parent=5 // pred_check_branch
        %653 = sbr.rel (%p650) target = $region96
      $region95: #{tpu_custom_call.1} parent=5 // pred_region
        %s654 = ssub.s32 %s36, 1
        %s655 = sand.u32 %s49, 1
        %s656 = scalar_lea.sflag [#allocation3], %s655
        %s657 = sand.u32 %s49, 1
        %s658 = smul.addr %s657, 64
        %s659 = scalar_lea.vmem [#allocation2], %s658
        // Predicated region
        $region97: #{tpu_custom_call.1} parent=95 // pred_check
          %p660 = pneg %p62
        $region98: #{tpu_custom_call.1} parent=95 // pred_check_branch
          %662 = sbr.rel (%p660) target = $region100
        $region99: #{tpu_custom_call.1} parent=95 // pred_region
          %663 = dma.done %s656, 1024
        $region100: #{tpu_custom_call.1} parent=95 // pred_fallthru
          _
        // Predicated region
        $region101: #{tpu_custom_call.1} parent=95 // pred_check
          %p664 = pneg %p83
        $region102: #{tpu_custom_call.1} parent=95 // pred_check_branch
          %666 = sbr.rel (%p664) target = $region104
        $region103: #{tpu_custom_call.1} parent=95 // pred_region
          %667 = dma.done [#allocation6], 8192
        $region104: #{tpu_custom_call.1} parent=95 // pred_fallthru
          _
        // Predicated region
        $region105: #{tpu_custom_call.1} parent=95 // pred_check
          %p668 = pneg %p125
        $region106: #{tpu_custom_call.1} parent=95 // pred_check_branch
          %670 = sbr.rel (%p668) target = $region108
        $region107: #{tpu_custom_call.1} parent=95 // pred_region
          %671 = dma.done [#allocation6], 1024
        $region108: #{tpu_custom_call.1} parent=95 // pred_fallthru
          _
        // Predicated region
        $region109: #{tpu_custom_call.1} parent=95 // pred_check
          %p672 = pneg %p167
        $region110: #{tpu_custom_call.1} parent=95 // pred_check_branch
          %674 = sbr.rel (%p672) target = $region112
        $region111: #{tpu_custom_call.1} parent=95 // pred_region
          %675 = dma.done [#allocation9], 1024
        $region112: #{tpu_custom_call.1} parent=95 // pred_fallthru
          _
        // Predicated region
        $region113: #{tpu_custom_call.1} parent=95 // pred_check
          %p676 = pneg %p209
        $region114: #{tpu_custom_call.1} parent=95 // pred_check_branch
          %678 = sbr.rel (%p676) target = $region116
        $region115: #{tpu_custom_call.1} parent=95 // pred_region
          %679 = dma.done [#allocation9], 1024
        $region116: #{tpu_custom_call.1} parent=95 // pred_fallthru
          _
        // Predicated region
        $region117: #{tpu_custom_call.1} parent=95 // pred_check
          %p680 = pneg %p251
        $region118: #{tpu_custom_call.1} parent=95 // pred_check_branch
          %682 = sbr.rel (%p680) target = $region120
        $region119: #{tpu_custom_call.1} parent=95 // pred_region
          %683 = dma.done [#allocation12], 1024
        $region120: #{tpu_custom_call.1} parent=95 // pred_fallthru
          _
        // Predicated region
        $region121: #{tpu_custom_call.1} parent=95 // pred_check
          %p684 = pneg %p293
        $region122: #{tpu_custom_call.1} parent=95 // pred_check_branch
          %686 = sbr.rel (%p684) target = $region124
        $region123: #{tpu_custom_call.1} parent=95 // pred_region
          %687 = dma.done [#allocation12], 1024
        $region124: #{tpu_custom_call.1} parent=95 // pred_fallthru
          _
        // Predicated region
        $region125: #{tpu_custom_call.1} parent=95 // pred_check
          %p688 = pneg %p335
        $region126: #{tpu_custom_call.1} parent=95 // pred_check_branch
          %690 = sbr.rel (%p688) target = $region128
        $region127: #{tpu_custom_call.1} parent=95 // pred_region
          %691 = dma.done [#allocation15], 1024
        $region128: #{tpu_custom_call.1} parent=95 // pred_fallthru
          _
        // Predicated region
        $region129: #{tpu_custom_call.1} parent=95 // pred_check
          %p692 = pneg %p377
        $region130: #{tpu_custom_call.1} parent=95 // pred_check_branch
          %694 = sbr.rel (%p692) target = $region132
        $region131: #{tpu_custom_call.1} parent=95 // pred_region
          %695 = dma.done [#allocation15], 1024
        $region132: #{tpu_custom_call.1} parent=95 // pred_fallthru
          _
        // Predicated region
        $region133: #{tpu_custom_call.1} parent=95 // pred_check
          %p696 = pneg %p419
        $region134: #{tpu_custom_call.1} parent=95 // pred_check_branch
          %698 = sbr.rel (%p696) target = $region136
        $region135: #{tpu_custom_call.1} parent=95 // pred_region
          %699 = dma.done [#allocation18], 8192
        $region136: #{tpu_custom_call.1} parent=95 // pred_fallthru
          _
        %s700 = sand.u32 %s49, 1
        %s701 = scalar_lea.sflag [#allocation3], %s700
        %s702 = sand.u32 %s49, 1
        %s703 = smul.addr %s702, 64
        %s704 = scalar_lea.vmem [#allocation2], %s703
        %p705 = pneg %p62
        %p706 = pneg %p59
        %p707 = pneg %p83
        %p708 = pneg %p80
        %p709 = pneg %p104
        %p710 = pneg %p101
        %p711 = pneg %p125
        %p712 = pneg %p122
        %p713 = pneg %p146
        %p714 = pneg %p143
        %p715 = pneg %p167
        %p716 = pneg %p164
        %p717 = pneg %p188
        %p718 = pneg %p185
        %p719 = pneg %p209
        %p720 = pneg %p206
        %p721 = pneg %p230
        %p722 = pneg %p227
        %p723 = pneg %p251
        %p724 = pneg %p248
        %p725 = pneg %p272
        %p726 = pneg %p269
        %p727 = pneg %p293
        %p728 = pneg %p290
        %p729 = pneg %p314
        %p730 = pneg %p311
        %p731 = pneg %p335
        %p732 = pneg %p332
        %p733 = pneg %p356
        %p734 = pneg %p353
        %p735 = pneg %p377
        %p736 = pneg %p374
        %p737 = pneg %p398
        %p738 = pneg %p395
        %p739 = pneg %p419
        %p740 = pneg %p416
        %p741 = pneg %p440
        %p742 = pneg %p437
        %p743 = pneg %p466
        %p744 = pneg %p463
        %s745 = sand.u32 %s453, 1
        %s746 = scalar_lea.sflag [#allocation4], %s745
        %s747 = sand.u32 %s453, 1
        %s748 = smul.addr %s747, 64
        %s749 = scalar_lea.vmem [#allocation19], %s748
        %v751 = vld [vmem:[%s659] sm:$0xff]
        %v752 = vld [vmem:[%s659 + $0x8] sm:$0xff]
        %v753 = vld [vmem:[%s659 + $0x10] sm:$0xff]
        %v754 = vld [vmem:[%s659 + $0x18] sm:$0xff]
        %v755 = vld [vmem:[%s659 + $0x20] sm:$0xff]
        %v756 = vld [vmem:[%s659 + $0x28] sm:$0xff]
        %v757 = vld [vmem:[%s659 + $0x30] sm:$0xff]
        %v758 = vld [vmem:[%s659 + $0x38] sm:$0xff]
        %v759 = vld [vmem:[#allocation5] sm:$0xf]
        %v760 = vld [vmem:[#allocation5 + $0x4] sm:$0xf]
        %v761 = vld [vmem:[#allocation5 + $0x8] sm:$0xf]
        %v762 = vld [vmem:[#allocation5 + $0xc] sm:$0xf]
        %v763 = vld [vmem:[#allocation5 + $0x10] sm:$0xf]
        %v764 = vld [vmem:[#allocation5 + $0x14] sm:$0xf]
        %v765 = vld [vmem:[#allocation5 + $0x18] sm:$0xf]
        %v766 = vld [vmem:[#allocation5 + $0x1c] sm:$0xf]
        %v767 = vld [vmem:[#allocation5 + $0x20] sm:$0xf]
        %v768 = vld [vmem:[#allocation5 + $0x24] sm:$0xf]
        %v769 = vld [vmem:[#allocation5 + $0x28] sm:$0xf]
        %v770 = vld [vmem:[#allocation5 + $0x2c] sm:$0xf]
        %v771 = vld [vmem:[#allocation5 + $0x30] sm:$0xf]
        %v772 = vld [vmem:[#allocation5 + $0x34] sm:$0xf]
        %v773 = vld [vmem:[#allocation5 + $0x38] sm:$0xf]
        %v774 = vld [vmem:[#allocation5 + $0x3c] sm:$0xf]
        %v775 = vld [vmem:[#allocation5 + $0x40] sm:$0xf]
        %v776 = vld [vmem:[#allocation5 + $0x44] sm:$0xf]
        %v777 = vld [vmem:[#allocation5 + $0x48] sm:$0xf]
        %v778 = vld [vmem:[#allocation5 + $0x4c] sm:$0xf]
        %v779 = vld [vmem:[#allocation5 + $0x50] sm:$0xf]
        %v780 = vld [vmem:[#allocation5 + $0x54] sm:$0xf]
        %v781 = vld [vmem:[#allocation5 + $0x58] sm:$0xf]
        %v782 = vld [vmem:[#allocation5 + $0x5c] sm:$0xf]
        %v783 = vld [vmem:[#allocation5 + $0x60] sm:$0xf]
        %v784 = vld [vmem:[#allocation5 + $0x64] sm:$0xf]
        %v785 = vld [vmem:[#allocation5 + $0x68] sm:$0xf]
        %v786 = vld [vmem:[#allocation5 + $0x6c] sm:$0xf]
        %v787 = vld [vmem:[#allocation5 + $0x70] sm:$0xf]
        %v788 = vld [vmem:[#allocation5 + $0x74] sm:$0xf]
        %v789 = vld [vmem:[#allocation5 + $0x78] sm:$0xf]
        %v790 = vld [vmem:[#allocation5 + $0x7c] sm:$0xf]
        %v791 = vld [vmem:[#allocation5 + $0x80] sm:$0xf]
        %v792 = vld [vmem:[#allocation5 + $0x84] sm:$0xf]
        %v793 = vld [vmem:[#allocation5 + $0x88] sm:$0xf]
        %v794 = vld [vmem:[#allocation5 + $0x8c] sm:$0xf]
        %v795 = vld [vmem:[#allocation5 + $0x90] sm:$0xf]
        %v796 = vld [vmem:[#allocation5 + $0x94] sm:$0xf]
        %v797 = vld [vmem:[#allocation5 + $0x98] sm:$0xf]
        %v798 = vld [vmem:[#allocation5 + $0x9c] sm:$0xf]
        %v799 = vld [vmem:[#allocation5 + $0xa0] sm:$0xf]
        %v800 = vld [vmem:[#allocation5 + $0xa4] sm:$0xf]
        %v801 = vld [vmem:[#allocation5 + $0xa8] sm:$0xf]
        %v802 = vld [vmem:[#allocation5 + $0xac] sm:$0xf]
        %v803 = vld [vmem:[#allocation5 + $0xb0] sm:$0xf]
        %v804 = vld [vmem:[#allocation5 + $0xb4] sm:$0xf]
        %v805 = vld [vmem:[#allocation5 + $0xb8] sm:$0xf]
        %v806 = vld [vmem:[#allocation5 + $0xbc] sm:$0xf]
        %v807 = vld [vmem:[#allocation5 + $0xc0] sm:$0xf]
        %v808 = vld [vmem:[#allocation5 + $0xc4] sm:$0xf]
        %v809 = vld [vmem:[#allocation5 + $0xc8] sm:$0xf]
        %v810 = vld [vmem:[#allocation5 + $0xcc] sm:$0xf]
        %v811 = vld [vmem:[#allocation5 + $0xd0] sm:$0xf]
        %v812 = vld [vmem:[#allocation5 + $0xd4] sm:$0xf]
        %v813 = vld [vmem:[#allocation5 + $0xd8] sm:$0xf]
        %v814 = vld [vmem:[#allocation5 + $0xdc] sm:$0xf]
        %v815 = vld [vmem:[#allocation5 + $0xe0] sm:$0xf]
        %v816 = vld [vmem:[#allocation5 + $0xe4] sm:$0xf]
        %v817 = vld [vmem:[#allocation5 + $0xe8] sm:$0xf]
        %v818 = vld [vmem:[#allocation5 + $0xec] sm:$0xf]
        %v819 = vld [vmem:[#allocation5 + $0xf0] sm:$0xf]
        %v820 = vld [vmem:[#allocation5 + $0xf4] sm:$0xf]
        %v821 = vld [vmem:[#allocation5 + $0xf8] sm:$0xf]
        %v822 = vld [vmem:[#allocation5 + $0xfc] sm:$0xf]
        %v823 = vld [vmem:[#allocation5 + $0x100] sm:$0xf]
        %v824 = vld [vmem:[#allocation5 + $0x104] sm:$0xf]
        %v825 = vld [vmem:[#allocation5 + $0x108] sm:$0xf]
        %v826 = vld [vmem:[#allocation5 + $0x10c] sm:$0xf]
        %v827 = vld [vmem:[#allocation5 + $0x110] sm:$0xf]
        %v828 = vld [vmem:[#allocation5 + $0x114] sm:$0xf]
        %v829 = vld [vmem:[#allocation5 + $0x118] sm:$0xf]
        %v830 = vld [vmem:[#allocation5 + $0x11c] sm:$0xf]
        %v831 = vld [vmem:[#allocation5 + $0x120] sm:$0xf]
        %v832 = vld [vmem:[#allocation5 + $0x124] sm:$0xf]
        %v833 = vld [vmem:[#allocation5 + $0x128] sm:$0xf]
        %v834 = vld [vmem:[#allocation5 + $0x12c] sm:$0xf]
        %v835 = vld [vmem:[#allocation5 + $0x130] sm:$0xf]
        %v836 = vld [vmem:[#allocation5 + $0x134] sm:$0xf]
        %v837 = vld [vmem:[#allocation5 + $0x138] sm:$0xf]
        %v838 = vld [vmem:[#allocation5 + $0x13c] sm:$0xf]
        %v839 = vld [vmem:[#allocation5 + $0x140] sm:$0xf]
        %v840 = vld [vmem:[#allocation5 + $0x144] sm:$0xf]
        %v841 = vld [vmem:[#allocation5 + $0x148] sm:$0xf]
        %v842 = vld [vmem:[#allocation5 + $0x14c] sm:$0xf]
        %v843 = vld [vmem:[#allocation5 + $0x150] sm:$0xf]
        %v844 = vld [vmem:[#allocation5 + $0x154] sm:$0xf]
        %v845 = vld [vmem:[#allocation5 + $0x158] sm:$0xf]
        %v846 = vld [vmem:[#allocation5 + $0x15c] sm:$0xf]
        %v847 = vld [vmem:[#allocation5 + $0x160] sm:$0xf]
        %v848 = vld [vmem:[#allocation5 + $0x164] sm:$0xf]
        %v849 = vld [vmem:[#allocation5 + $0x168] sm:$0xf]
        %v850 = vld [vmem:[#allocation5 + $0x16c] sm:$0xf]
        %v851 = vld [vmem:[#allocation5 + $0x170] sm:$0xf]
        %v852 = vld [vmem:[#allocation5 + $0x174] sm:$0xf]
        %v853 = vld [vmem:[#allocation5 + $0x178] sm:$0xf]
        %v854 = vld [vmem:[#allocation5 + $0x17c] sm:$0xf]
        %v855 = vld [vmem:[#allocation5 + $0x180] sm:$0xf]
        %v856 = vld [vmem:[#allocation5 + $0x184] sm:$0xf]
        %v857 = vld [vmem:[#allocation5 + $0x188] sm:$0xf]
        %v858 = vld [vmem:[#allocation5 + $0x18c] sm:$0xf]
        %v859 = vld [vmem:[#allocation5 + $0x190] sm:$0xf]
        %v860 = vld [vmem:[#allocation5 + $0x194] sm:$0xf]
        %v861 = vld [vmem:[#allocation5 + $0x198] sm:$0xf]
        %v862 = vld [vmem:[#allocation5 + $0x19c] sm:$0xf]
        %v863 = vld [vmem:[#allocation5 + $0x1a0] sm:$0xf]
        %v864 = vld [vmem:[#allocation5 + $0x1a4] sm:$0xf]
        %v865 = vld [vmem:[#allocation5 + $0x1a8] sm:$0xf]
        %v866 = vld [vmem:[#allocation5 + $0x1ac] sm:$0xf]
        %v867 = vld [vmem:[#allocation5 + $0x1b0] sm:$0xf]
        %v868 = vld [vmem:[#allocation5 + $0x1b4] sm:$0xf]
        %v869 = vld [vmem:[#allocation5 + $0x1b8] sm:$0xf]
        %v870 = vld [vmem:[#allocation5 + $0x1bc] sm:$0xf]
        %v871 = vld [vmem:[#allocation5 + $0x1c0] sm:$0xf]
        %v872 = vld [vmem:[#allocation5 + $0x1c4] sm:$0xf]
        %v873 = vld [vmem:[#allocation5 + $0x1c8] sm:$0xf]
        %v874 = vld [vmem:[#allocation5 + $0x1cc] sm:$0xf]
        %v875 = vld [vmem:[#allocation5 + $0x1d0] sm:$0xf]
        %v876 = vld [vmem:[#allocation5 + $0x1d4] sm:$0xf]
        %v877 = vld [vmem:[#allocation5 + $0x1d8] sm:$0xf]
        %v878 = vld [vmem:[#allocation5 + $0x1dc] sm:$0xf]
        %v879 = vld [vmem:[#allocation5 + $0x1e0] sm:$0xf]
        %v880 = vld [vmem:[#allocation5 + $0x1e4] sm:$0xf]
        %v881 = vld [vmem:[#allocation5 + $0x1e8] sm:$0xf]
        %v882 = vld [vmem:[#allocation5 + $0x1ec] sm:$0xf]
        %v883 = vld [vmem:[#allocation5 + $0x1f0] sm:$0xf]
        %v884 = vld [vmem:[#allocation5 + $0x1f4] sm:$0xf]
        %v885 = vld [vmem:[#allocation5 + $0x1f8] sm:$0xf]
        %v886 = vld [vmem:[#allocation5 + $0x1fc] sm:$0xf]
        %v887 = vld [vmem:[%s2] sm:$0x1]
        %v888 = vpack.c.bf16 %v751, %v751
        %v889 = vpack.c.bf16 %v752, %v752
        %v890 = vpack.c.bf16 %v753, %v753
        %v891 = vpack.c.bf16 %v754, %v754
        %v892 = vpack.c.bf16 %v755, %v755
        %v893 = vpack.c.bf16 %v756, %v756
        %v894 = vpack.c.bf16 %v757, %v757
        %v895 = vpack.c.bf16 %v758, %v758
        %v897 = vlaneseq
        %v898 = vshrl.u32 %v897, 7
        %v899 = vsub.s32 0, %v898
        %v900 = vrot.slane %v887, %v899
        %v1030 = vunpack.c.l.b16 %v759
        %v1031 = vunpack.c.l.b16 %v760
        %v1032 = vunpack.c.l.b16 %v761
        %v1033 = vunpack.c.l.b16 %v762
        %v1034 = vunpack.c.l.b16 %v763
        %v1035 = vunpack.c.l.b16 %v764
        %v1036 = vunpack.c.l.b16 %v765
        %v1037 = vunpack.c.l.b16 %v766
        %v1038 = vunpack.c.l.b16 %v767
        %v1039 = vunpack.c.l.b16 %v768
        %v1040 = vunpack.c.l.b16 %v769
        %v1041 = vunpack.c.l.b16 %v770
        %v1042 = vunpack.c.l.b16 %v771
        %v1043 = vunpack.c.l.b16 %v772
        %v1044 = vunpack.c.l.b16 %v773
        %v1045 = vunpack.c.l.b16 %v774
        %v1046 = vunpack.c.l.b16 %v775
        %v1047 = vunpack.c.l.b16 %v776
        %v1048 = vunpack.c.l.b16 %v777
        %v1049 = vunpack.c.l.b16 %v778
        %v1050 = vunpack.c.l.b16 %v779
        %v1051 = vunpack.c.l.b16 %v780
        %v1052 = vunpack.c.l.b16 %v781
        %v1053 = vunpack.c.l.b16 %v782
        %v1054 = vunpack.c.l.b16 %v783
        %v1055 = vunpack.c.l.b16 %v784
        %v1056 = vunpack.c.l.b16 %v785
        %v1057 = vunpack.c.l.b16 %v786
        %v1058 = vunpack.c.l.b16 %v787
        %v1059 = vunpack.c.l.b16 %v788
        %v1060 = vunpack.c.l.b16 %v789
        %v1061 = vunpack.c.l.b16 %v790
        %v1062 = vunpack.c.l.b16 %v791
        %v1063 = vunpack.c.l.b16 %v792
        %v1064 = vunpack.c.l.b16 %v793
        %v1065 = vunpack.c.l.b16 %v794
        %v1066 = vunpack.c.l.b16 %v795
        %v1067 = vunpack.c.l.b16 %v796
        %v1068 = vunpack.c.l.b16 %v797
        %v1069 = vunpack.c.l.b16 %v798
        %v1070 = vunpack.c.l.b16 %v799
        %v1071 = vunpack.c.l.b16 %v800
        %v1072 = vunpack.c.l.b16 %v801
        %v1073 = vunpack.c.l.b16 %v802
        %v1074 = vunpack.c.l.b16 %v803
        %v1075 = vunpack.c.l.b16 %v804
        %v1076 = vunpack.c.l.b16 %v805
        %v1077 = vunpack.c.l.b16 %v806
        %v1078 = vunpack.c.l.b16 %v807
        %v1079 = vunpack.c.l.b16 %v808
        %v1080 = vunpack.c.l.b16 %v809
        %v1081 = vunpack.c.l.b16 %v810
        %v1082 = vunpack.c.l.b16 %v811
        %v1083 = vunpack.c.l.b16 %v812
        %v1084 = vunpack.c.l.b16 %v813
        %v1085 = vunpack.c.l.b16 %v814
        %v1086 = vunpack.c.l.b16 %v815
        %v1087 = vunpack.c.l.b16 %v816
        %v1088 = vunpack.c.l.b16 %v817
        %v1089 = vunpack.c.l.b16 %v818
        %v1090 = vunpack.c.l.b16 %v819
        %v1091 = vunpack.c.l.b16 %v820
        %v1092 = vunpack.c.l.b16 %v821
        %v1093 = vunpack.c.l.b16 %v822
        %v1094 = vunpack.c.l.b16 %v823
        %v1095 = vunpack.c.l.b16 %v824
        %v1096 = vunpack.c.l.b16 %v825
        %v1097 = vunpack.c.l.b16 %v826
        %v1098 = vunpack.c.l.b16 %v827
        %v1099 = vunpack.c.l.b16 %v828
        %v1100 = vunpack.c.l.b16 %v829
        %v1101 = vunpack.c.l.b16 %v830
        %v1102 = vunpack.c.l.b16 %v831
        %v1103 = vunpack.c.l.b16 %v832
        %v1104 = vunpack.c.l.b16 %v833
        %v1105 = vunpack.c.l.b16 %v834
        %v1106 = vunpack.c.l.b16 %v835
        %v1107 = vunpack.c.l.b16 %v836
        %v1108 = vunpack.c.l.b16 %v837
        %v1109 = vunpack.c.l.b16 %v838
        %v1110 = vunpack.c.l.b16 %v839
        %v1111 = vunpack.c.l.b16 %v840
        %v1112 = vunpack.c.l.b16 %v841
        %v1113 = vunpack.c.l.b16 %v842
        %v1114 = vunpack.c.l.b16 %v843
        %v1115 = vunpack.c.l.b16 %v844
        %v1116 = vunpack.c.l.b16 %v845
        %v1117 = vunpack.c.l.b16 %v846
        %v1118 = vunpack.c.l.b16 %v847
        %v1119 = vunpack.c.l.b16 %v848
        %v1120 = vunpack.c.l.b16 %v849
        %v1121 = vunpack.c.l.b16 %v850
        %v1122 = vunpack.c.l.b16 %v851
        %v1123 = vunpack.c.l.b16 %v852
        %v1124 = vunpack.c.l.b16 %v853
        %v1125 = vunpack.c.l.b16 %v854
        %v1126 = vunpack.c.l.b16 %v855
        %v1127 = vunpack.c.l.b16 %v856
        %v1128 = vunpack.c.l.b16 %v857
        %v1129 = vunpack.c.l.b16 %v858
        %v1130 = vunpack.c.l.b16 %v859
        %v1131 = vunpack.c.l.b16 %v860
        %v1132 = vunpack.c.l.b16 %v861
        %v1133 = vunpack.c.l.b16 %v862
        %v1134 = vunpack.c.l.b16 %v863
        %v1135 = vunpack.c.l.b16 %v864
        %v1136 = vunpack.c.l.b16 %v865
        %v1137 = vunpack.c.l.b16 %v866
        %v1138 = vunpack.c.l.b16 %v867
        %v1139 = vunpack.c.l.b16 %v868
        %v1140 = vunpack.c.l.b16 %v869
        %v1141 = vunpack.c.l.b16 %v870
        %v1142 = vunpack.c.l.b16 %v871
        %v1143 = vunpack.c.l.b16 %v872
        %v1144 = vunpack.c.l.b16 %v873
        %v1145 = vunpack.c.l.b16 %v874
        %v1146 = vunpack.c.l.b16 %v875
        %v1147 = vunpack.c.l.b16 %v876
        %v1148 = vunpack.c.l.b16 %v877
        %v1149 = vunpack.c.l.b16 %v878
        %v1150 = vunpack.c.l.b16 %v879
        %v1151 = vunpack.c.l.b16 %v880
        %v1152 = vunpack.c.l.b16 %v881
        %v1153 = vunpack.c.l.b16 %v882
        %v1154 = vunpack.c.l.b16 %v883
        %v1155 = vunpack.c.l.b16 %v884
        %v1156 = vunpack.c.l.b16 %v885
        %v1157 = vunpack.c.l.b16 %v886
        %v1158 = vpack.c.b16 %v1031, %v1030
        %v1159 = vpack.c.b16 %v1033, %v1032
        %v1160 = vpack.c.b16 %v1035, %v1034
        %v1161 = vpack.c.b16 %v1037, %v1036
        %v1162 = vpack.c.b16 %v1039, %v1038
        %v1163 = vpack.c.b16 %v1041, %v1040
        %v1164 = vpack.c.b16 %v1043, %v1042
        %v1165 = vpack.c.b16 %v1045, %v1044
        %v1166 = vpack.c.b16 %v1047, %v1046
        %v1167 = vpack.c.b16 %v1049, %v1048
        %v1168 = vpack.c.b16 %v1051, %v1050
        %v1169 = vpack.c.b16 %v1053, %v1052
        %v1170 = vpack.c.b16 %v1055, %v1054
        %v1171 = vpack.c.b16 %v1057, %v1056
        %v1172 = vpack.c.b16 %v1059, %v1058
        %v1173 = vpack.c.b16 %v1061, %v1060
        %v1174 = vpack.c.b16 %v1063, %v1062
        %v1175 = vpack.c.b16 %v1065, %v1064
        %v1176 = vpack.c.b16 %v1067, %v1066
        %v1177 = vpack.c.b16 %v1069, %v1068
        %v1178 = vpack.c.b16 %v1071, %v1070
        %v1179 = vpack.c.b16 %v1073, %v1072
        %v1180 = vpack.c.b16 %v1075, %v1074
        %v1181 = vpack.c.b16 %v1077, %v1076
        %v1182 = vpack.c.b16 %v1079, %v1078
        %v1183 = vpack.c.b16 %v1081, %v1080
        %v1184 = vpack.c.b16 %v1083, %v1082
        %v1185 = vpack.c.b16 %v1085, %v1084
        %v1186 = vpack.c.b16 %v1087, %v1086
        %v1187 = vpack.c.b16 %v1089, %v1088
        %v1188 = vpack.c.b16 %v1091, %v1090
        %v1189 = vpack.c.b16 %v1093, %v1092
        %v1190 = vpack.c.b16 %v1095, %v1094
        %v1191 = vpack.c.b16 %v1097, %v1096
        %v1192 = vpack.c.b16 %v1099, %v1098
        %v1193 = vpack.c.b16 %v1101, %v1100
        %v1194 = vpack.c.b16 %v1103, %v1102
        %v1195 = vpack.c.b16 %v1105, %v1104
        %v1196 = vpack.c.b16 %v1107, %v1106
        %v1197 = vpack.c.b16 %v1109, %v1108
        %v1198 = vpack.c.b16 %v1111, %v1110
        %v1199 = vpack.c.b16 %v1113, %v1112
        %v1200 = vpack.c.b16 %v1115, %v1114
        %v1201 = vpack.c.b16 %v1117, %v1116
        %v1202 = vpack.c.b16 %v1119, %v1118
        %v1203 = vpack.c.b16 %v1121, %v1120
        %v1204 = vpack.c.b16 %v1123, %v1122
        %v1205 = vpack.c.b16 %v1125, %v1124
        %v1206 = vpack.c.b16 %v1127, %v1126
        %v1207 = vpack.c.b16 %v1129, %v1128
        %v1208 = vpack.c.b16 %v1131, %v1130
        %v1209 = vpack.c.b16 %v1133, %v1132
        %v1210 = vpack.c.b16 %v1135, %v1134
        %v1211 = vpack.c.b16 %v1137, %v1136
        %v1212 = vpack.c.b16 %v1139, %v1138
        %v1213 = vpack.c.b16 %v1141, %v1140
        %v1214 = vpack.c.b16 %v1143, %v1142
        %v1215 = vpack.c.b16 %v1145, %v1144
        %v1216 = vpack.c.b16 %v1147, %v1146
        %v1217 = vpack.c.b16 %v1149, %v1148
        %v1218 = vpack.c.b16 %v1151, %v1150
        %v1219 = vpack.c.b16 %v1153, %v1152
        %v1220 = vpack.c.b16 %v1155, %v1154
        %v1221 = vpack.c.b16 %v1157, %v1156
        %1286 = vmatprep.subr.bf16.mxu0 0
        %1287 = vmatpush1.bf16.msra.mxu0 %v1165
        %1288 = vmatprep.subr.bf16.mxu0 0
        %1289 = vmatpush1.bf16.msra.mxu0 %v1164
        %1290 = vmatprep.subr.bf16.mxu0 0
        %1291 = vmatpush1.bf16.msra.mxu0 %v1163
        %1292 = vmatprep.subr.bf16.mxu0 0
        %1293 = vmatpush1.bf16.msra.mxu0 %v1162
        %1294 = vmatprep.subr.bf16.mxu0 0
        %1295 = vmatpush1.bf16.msra.mxu0 %v1161
        %1296 = vmatprep.subr.bf16.mxu0 0
        %1297 = vmatpush1.bf16.msra.mxu0 %v1160
        %1298 = vmatprep.subr.bf16.mxu0 0
        %1299 = vmatpush1.bf16.msra.mxu0 %v1159
        %1300 = vmatprep.subr.bf16.mxu0 0
        %1301 = vmatpush1.bf16.msra.mxu0 %v1158
        %1302 = vmatprep.subr.bf16.mxu0 0
        %1303 = vmatpush2.bf16.msra.mxu0 %v1173
        %1304 = vmatprep.subr.bf16.mxu0 0
        %1305 = vmatpush2.bf16.msra.mxu0 %v1172
        %1306 = vmatprep.subr.bf16.mxu0 0
        %1307 = vmatpush2.bf16.msra.mxu0 %v1171
        %1308 = vmatprep.subr.bf16.mxu0 0
        %1309 = vmatpush2.bf16.msra.mxu0 %v1170
        %1310 = vmatprep.subr.bf16.mxu0 0
        %1311 = vmatpush2.bf16.msra.mxu0 %v1169
        %1312 = vmatprep.subr.bf16.mxu0 0
        %1313 = vmatpush2.bf16.msra.mxu0 %v1168
        %1314 = vmatprep.subr.bf16.mxu0 0
        %1315 = vmatpush2.bf16.msra.mxu0 %v1167
        %1316 = vmatprep.subr.bf16.mxu0 0
        %1317 = vmatpush2.bf16.msra.mxu0 %v1166
        %1318 = vmatprep.mubr.bf16.mxu0 %v889
        %1319 = vmatmul.mubr.bf16.gmra.mxu0 %v888
        %v1320 = vpop.f32.mrf.mxu0
        %v1321 = vadd.f32 %v900, %v1320
        %v1322 = vpop.f32.mrf.mxu0
        %v1323 = vpop.f32.mrf.mxu0
        %v1324 = vpop.f32.mrf.mxu0
        %1325 = vdwg.mxu0
        %1326 = vmatprep.subr.bf16.mxu0 0
        %1327 = vmatpush1.bf16.msra.mxu0 %v1181
        %1328 = vmatprep.subr.bf16.mxu0 0
        %1329 = vmatpush1.bf16.msra.mxu0 %v1180
        %1330 = vmatprep.subr.bf16.mxu0 0
        %1331 = vmatpush1.bf16.msra.mxu0 %v1179
        %1332 = vmatprep.subr.bf16.mxu0 0
        %1333 = vmatpush1.bf16.msra.mxu0 %v1178
        %1334 = vmatprep.subr.bf16.mxu0 0
        %1335 = vmatpush1.bf16.msra.mxu0 %v1177
        %1336 = vmatprep.subr.bf16.mxu0 0
        %1337 = vmatpush1.bf16.msra.mxu0 %v1176
        %1338 = vmatprep.subr.bf16.mxu0 0
        %1339 = vmatpush1.bf16.msra.mxu0 %v1175
        %1340 = vmatprep.subr.bf16.mxu0 0
        %1341 = vmatpush1.bf16.msra.mxu0 %v1174
        %1342 = vmatprep.subr.bf16.mxu0 0
        %1343 = vmatpush2.bf16.msra.mxu0 %v1189
        %1344 = vmatprep.subr.bf16.mxu0 0
        %1345 = vmatpush2.bf16.msra.mxu0 %v1188
        %1346 = vmatprep.subr.bf16.mxu0 0
        %1347 = vmatpush2.bf16.msra.mxu0 %v1187
        %1348 = vmatprep.subr.bf16.mxu0 0
        %1349 = vmatpush2.bf16.msra.mxu0 %v1186
        %1350 = vmatprep.subr.bf16.mxu0 0
        %1351 = vmatpush2.bf16.msra.mxu0 %v1185
        %1352 = vmatprep.subr.bf16.mxu0 0
        %1353 = vmatpush2.bf16.msra.mxu0 %v1184
        %1354 = vmatprep.subr.bf16.mxu0 0
        %1355 = vmatpush2.bf16.msra.mxu0 %v1183
        %1356 = vmatprep.subr.bf16.mxu0 0
        %1357 = vmatpush2.bf16.msra.mxu0 %v1182
        %1358 = vmatprep.mubr.bf16.mxu0 %v891
        %1359 = vmatmul.mubr.bf16.gmra.mxu0 %v890
        %v1360 = vpop.f32.mrf.mxu0
        %v1361 = vadd.f32 %v1321, %v1360
        %v1362 = vpop.f32.mrf.mxu0
        %v1363 = vpop.f32.mrf.mxu0
        %v1364 = vpop.f32.mrf.mxu0
        %1365 = vdwg.mxu0
        %1366 = vmatprep.subr.bf16.mxu0 0
        %1367 = vmatpush1.bf16.msra.mxu0 %v1197
        %1368 = vmatprep.subr.bf16.mxu0 0
        %1369 = vmatpush1.bf16.msra.mxu0 %v1196
        %1370 = vmatprep.subr.bf16.mxu0 0
        %1371 = vmatpush1.bf16.msra.mxu0 %v1195
        %1372 = vmatprep.subr.bf16.mxu0 0
        %1373 = vmatpush1.bf16.msra.mxu0 %v1194
        %1374 = vmatprep.subr.bf16.mxu0 0
        %1375 = vmatpush1.bf16.msra.mxu0 %v1193
        %1376 = vmatprep.subr.bf16.mxu0 0
        %1377 = vmatpush1.bf16.msra.mxu0 %v1192
        %1378 = vmatprep.subr.bf16.mxu0 0
        %1379 = vmatpush1.bf16.msra.mxu0 %v1191
        %1380 = vmatprep.subr.bf16.mxu0 0
        %1381 = vmatpush1.bf16.msra.mxu0 %v1190
        %1382 = vmatprep.subr.bf16.mxu0 0
        %1383 = vmatpush2.bf16.msra.mxu0 %v1205
        %1384 = vmatprep.subr.bf16.mxu0 0
        %1385 = vmatpush2.bf16.msra.mxu0 %v1204
        %1386 = vmatprep.subr.bf16.mxu0 0
        %1387 = vmatpush2.bf16.msra.mxu0 %v1203
        %1388 = vmatprep.subr.bf16.mxu0 0
        %1389 = vmatpush2.bf16.msra.mxu0 %v1202
        %1390 = vmatprep.subr.bf16.mxu0 0
        %1391 = vmatpush2.bf16.msra.mxu0 %v1201
        %1392 = vmatprep.subr.bf16.mxu0 0
        %1393 = vmatpush2.bf16.msra.mxu0 %v1200
        %1394 = vmatprep.subr.bf16.mxu0 0
        %1395 = vmatpush2.bf16.msra.mxu0 %v1199
        %1396 = vmatprep.subr.bf16.mxu0 0
        %1397 = vmatpush2.bf16.msra.mxu0 %v1198
        %1398 = vmatprep.mubr.bf16.mxu0 %v893
        %1399 = vmatmul.mubr.bf16.gmra.mxu0 %v892
        %v1400 = vpop.f32.mrf.mxu0
        %v1401 = vadd.f32 %v1361, %v1400
        %v1402 = vpop.f32.mrf.mxu0
        %v1403 = vpop.f32.mrf.mxu0
        %v1404 = vpop.f32.mrf.mxu0
        %1405 = vdwg.mxu0
        %1406 = vmatprep.subr.bf16.mxu0 0
        %1407 = vmatpush1.bf16.msra.mxu0 %v1213
        %1408 = vmatprep.subr.bf16.mxu0 0
        %1409 = vmatpush1.bf16.msra.mxu0 %v1212
        %1410 = vmatprep.subr.bf16.mxu0 0
        %1411 = vmatpush1.bf16.msra.mxu0 %v1211
        %1412 = vmatprep.subr.bf16.mxu0 0
        %1413 = vmatpush1.bf16.msra.mxu0 %v1210
        %1414 = vmatprep.subr.bf16.mxu0 0
        %1415 = vmatpush1.bf16.msra.mxu0 %v1209
        %1416 = vmatprep.subr.bf16.mxu0 0
        %1417 = vmatpush1.bf16.msra.mxu0 %v1208
        %1418 = vmatprep.subr.bf16.mxu0 0
        %1419 = vmatpush1.bf16.msra.mxu0 %v1207
        %1420 = vmatprep.subr.bf16.mxu0 0
        %1421 = vmatpush1.bf16.msra.mxu0 %v1206
        %1422 = vmatprep.subr.bf16.mxu0 0
        %1423 = vmatpush2.bf16.msra.mxu0 %v1221
        %1424 = vmatprep.subr.bf16.mxu0 0
        %1425 = vmatpush2.bf16.msra.mxu0 %v1220
        %1426 = vmatprep.subr.bf16.mxu0 0
        %1427 = vmatpush2.bf16.msra.mxu0 %v1219
        %1428 = vmatprep.subr.bf16.mxu0 0
        %1429 = vmatpush2.bf16.msra.mxu0 %v1218
        %1430 = vmatprep.subr.bf16.mxu0 0
        %1431 = vmatpush2.bf16.msra.mxu0 %v1217
        %1432 = vmatprep.subr.bf16.mxu0 0
        %1433 = vmatpush2.bf16.msra.mxu0 %v1216
        %1434 = vmatprep.subr.bf16.mxu0 0
        %1435 = vmatpush2.bf16.msra.mxu0 %v1215
        %1436 = vmatprep.subr.bf16.mxu0 0
        %1437 = vmatpush2.bf16.msra.mxu0 %v1214
        %1438 = vmatprep.mubr.bf16.mxu0 %v895
        %1439 = vmatmul.mubr.bf16.gmra.mxu0 %v894
        %v1440 = vpop.f32.mrf.mxu0
        %v1441 = vadd.f32 %v1401, %v1440
        %v1442 = vpop.f32.mrf.mxu0
        %v1443 = vpop.f32.mrf.mxu0
        %v1444 = vpop.f32.mrf.mxu0
        %1445 = vdwg.mxu0
        %v1446 = vmax.f32 %v1441, 0.0
        %v1447 = vld [vmem:[#allocation7] sm:$0xf]
        %v1448 = vld [vmem:[#allocation7 + $0x4] sm:$0xf]
        %v1449 = vld [vmem:[#allocation7 + $0x8] sm:$0xf]
        %v1450 = vld [vmem:[#allocation7 + $0xc] sm:$0xf]
        %v1451 = vld [vmem:[#allocation7 + $0x10] sm:$0xf]
        %v1452 = vld [vmem:[#allocation7 + $0x14] sm:$0xf]
        %v1453 = vld [vmem:[#allocation7 + $0x18] sm:$0xf]
        %v1454 = vld [vmem:[#allocation7 + $0x1c] sm:$0xf]
        %v1455 = vld [vmem:[#allocation7 + $0x20] sm:$0xf]
        %v1456 = vld [vmem:[#allocation7 + $0x24] sm:$0xf]
        %v1457 = vld [vmem:[#allocation7 + $0x28] sm:$0xf]
        %v1458 = vld [vmem:[#allocation7 + $0x2c] sm:$0xf]
        %v1459 = vld [vmem:[#allocation7 + $0x30] sm:$0xf]
        %v1460 = vld [vmem:[#allocation7 + $0x34] sm:$0xf]
        %v1461 = vld [vmem:[#allocation7 + $0x38] sm:$0xf]
        %v1462 = vld [vmem:[#allocation7 + $0x3c] sm:$0xf]
        %v1463 = vld [vmem:[%s4] sm:$0x1]
        %v1464 = vpack.c.bf16 %v1446, %v1446
        %v1466 = vlaneseq
        %v1467 = vshrl.u32 %v1466, 7
        %v1468 = vsub.s32 0, %v1467
        %v1469 = vrot.slane %v1463, %v1468
        %v1487 = vunpack.c.l.b16 %v1447
        %v1488 = vunpack.c.l.b16 %v1448
        %v1489 = vunpack.c.l.b16 %v1449
        %v1490 = vunpack.c.l.b16 %v1450
        %v1491 = vunpack.c.l.b16 %v1451
        %v1492 = vunpack.c.l.b16 %v1452
        %v1493 = vunpack.c.l.b16 %v1453
        %v1494 = vunpack.c.l.b16 %v1454
        %v1495 = vunpack.c.l.b16 %v1455
        %v1496 = vunpack.c.l.b16 %v1456
        %v1497 = vunpack.c.l.b16 %v1457
        %v1498 = vunpack.c.l.b16 %v1458
        %v1499 = vunpack.c.l.b16 %v1459
        %v1500 = vunpack.c.l.b16 %v1460
        %v1501 = vunpack.c.l.b16 %v1461
        %v1502 = vunpack.c.l.b16 %v1462
        %v1503 = vpack.c.b16 %v1488, %v1487
        %v1504 = vpack.c.b16 %v1490, %v1489
        %v1505 = vpack.c.b16 %v1492, %v1491
        %v1506 = vpack.c.b16 %v1494, %v1493
        %v1507 = vpack.c.b16 %v1496, %v1495
        %v1508 = vpack.c.b16 %v1498, %v1497
        %v1509 = vpack.c.b16 %v1500, %v1499
        %v1510 = vpack.c.b16 %v1502, %v1501
        %1519 = vmatprep.subr.bf16.mxu0 0
        %1520 = vmatpush1.bf16.msra.mxu0 %v1510
        %1521 = vmatprep.subr.bf16.mxu0 0
        %1522 = vmatpush1.bf16.msra.mxu0 %v1509
        %1523 = vmatprep.subr.bf16.mxu0 0
        %1524 = vmatpush1.bf16.msra.mxu0 %v1508
        %1525 = vmatprep.subr.bf16.mxu0 0
        %1526 = vmatpush1.bf16.msra.mxu0 %v1507
        %1527 = vmatprep.subr.bf16.mxu0 0
        %1528 = vmatpush1.bf16.msra.mxu0 %v1506
        %1529 = vmatprep.subr.bf16.mxu0 0
        %1530 = vmatpush1.bf16.msra.mxu0 %v1505
        %1531 = vmatprep.subr.bf16.mxu0 0
        %1532 = vmatpush1.bf16.msra.mxu0 %v1504
        %1533 = vmatprep.subr.bf16.mxu0 0
        %1534 = vmatpush1.bf16.msra.mxu0 %v1503
        %1535 = vmatprep.subr.bf16.mxu0 0
        %1536 = vmatpush2.bf16.msra.mxu0 0
        %1537 = vmatprep.subr.bf16.mxu0 0
        %1538 = vmatpush2.bf16.msra.mxu0 0
        %1539 = vmatprep.subr.bf16.mxu0 0
        %1540 = vmatpush2.bf16.msra.mxu0 0
        %1541 = vmatprep.subr.bf16.mxu0 0
        %1542 = vmatpush2.bf16.msra.mxu0 0
        %1543 = vmatprep.subr.bf16.mxu0 0
        %1544 = vmatpush2.bf16.msra.mxu0 0
        %1545 = vmatprep.subr.bf16.mxu0 0
        %1546 = vmatpush2.bf16.msra.mxu0 0
        %1547 = vmatprep.subr.bf16.mxu0 0
        %1548 = vmatpush2.bf16.msra.mxu0 0
        %1549 = vmatprep.subr.bf16.mxu0 0
        %1550 = vmatpush2.bf16.msra.mxu0 0
        %1551 = vmatprep.mubr.bf16.mxu0 0
        %1552 = vmatmul.mubr.bf16.gmra.mxu0 %v1464
        %v1553 = vpop.f32.mrf.mxu0
        %v1554 = vadd.f32 %v1469, %v1553
        %v1555 = vpop.f32.mrf.mxu0
        %v1556 = vpop.f32.mrf.mxu0
        %v1557 = vpop.f32.mrf.mxu0
        %1558 = vdwg.mxu0
        %v1559 = vmax.f32 %v1554, 0.0
        %v1560 = vld [vmem:[#allocation8] sm:$0xf]
        %v1561 = vld [vmem:[#allocation8 + $0x4] sm:$0xf]
        %v1562 = vld [vmem:[#allocation8 + $0x8] sm:$0xf]
        %v1563 = vld [vmem:[#allocation8 + $0xc] sm:$0xf]
        %v1564 = vld [vmem:[#allocation8 + $0x10] sm:$0xf]
        %v1565 = vld [vmem:[#allocation8 + $0x14] sm:$0xf]
        %v1566 = vld [vmem:[#allocation8 + $0x18] sm:$0xf]
        %v1567 = vld [vmem:[#allocation8 + $0x1c] sm:$0xf]
        %v1568 = vld [vmem:[#allocation8 + $0x20] sm:$0xf]
        %v1569 = vld [vmem:[#allocation8 + $0x24] sm:$0xf]
        %v1570 = vld [vmem:[#allocation8 + $0x28] sm:$0xf]
        %v1571 = vld [vmem:[#allocation8 + $0x2c] sm:$0xf]
        %v1572 = vld [vmem:[#allocation8 + $0x30] sm:$0xf]
        %v1573 = vld [vmem:[#allocation8 + $0x34] sm:$0xf]
        %v1574 = vld [vmem:[#allocation8 + $0x38] sm:$0xf]
        %v1575 = vld [vmem:[#allocation8 + $0x3c] sm:$0xf]
        %v1576 = vld [vmem:[%s6] sm:$0x1]
        %v1577 = vpack.c.bf16 %v1559, %v1559
        %v1579 = vlaneseq
        %v1580 = vshrl.u32 %v1579, 7
        %v1581 = vsub.s32 0, %v1580
        %v1582 = vrot.slane %v1576, %v1581
        %v1600 = vunpack.c.l.b16 %v1560
        %v1601 = vunpack.c.l.b16 %v1561
        %v1602 = vunpack.c.l.b16 %v1562
        %v1603 = vunpack.c.l.b16 %v1563
        %v1604 = vunpack.c.l.b16 %v1564
        %v1605 = vunpack.c.l.b16 %v1565
        %v1606 = vunpack.c.l.b16 %v1566
        %v1607 = vunpack.c.l.b16 %v1567
        %v1608 = vunpack.c.l.b16 %v1568
        %v1609 = vunpack.c.l.b16 %v1569
        %v1610 = vunpack.c.l.b16 %v1570
        %v1611 = vunpack.c.l.b16 %v1571
        %v1612 = vunpack.c.l.b16 %v1572
        %v1613 = vunpack.c.l.b16 %v1573
        %v1614 = vunpack.c.l.b16 %v1574
        %v1615 = vunpack.c.l.b16 %v1575
        %v1616 = vpack.c.b16 %v1601, %v1600
        %v1617 = vpack.c.b16 %v1603, %v1602
        %v1618 = vpack.c.b16 %v1605, %v1604
        %v1619 = vpack.c.b16 %v1607, %v1606
        %v1620 = vpack.c.b16 %v1609, %v1608
        %v1621 = vpack.c.b16 %v1611, %v1610
        %v1622 = vpack.c.b16 %v1613, %v1612
        %v1623 = vpack.c.b16 %v1615, %v1614
        %1632 = vmatprep.subr.bf16.mxu0 0
        %1633 = vmatpush1.bf16.msra.mxu0 %v1623
        %1634 = vmatprep.subr.bf16.mxu0 0
        %1635 = vmatpush1.bf16.msra.mxu0 %v1622
        %1636 = vmatprep.subr.bf16.mxu0 0
        %1637 = vmatpush1.bf16.msra.mxu0 %v1621
        %1638 = vmatprep.subr.bf16.mxu0 0
        %1639 = vmatpush1.bf16.msra.mxu0 %v1620
        %1640 = vmatprep.subr.bf16.mxu0 0
        %1641 = vmatpush1.bf16.msra.mxu0 %v1619
        %1642 = vmatprep.subr.bf16.mxu0 0
        %1643 = vmatpush1.bf16.msra.mxu0 %v1618
        %1644 = vmatprep.subr.bf16.mxu0 0
        %1645 = vmatpush1.bf16.msra.mxu0 %v1617
        %1646 = vmatprep.subr.bf16.mxu0 0
        %1647 = vmatpush1.bf16.msra.mxu0 %v1616
        %1648 = vmatprep.subr.bf16.mxu0 0
        %1649 = vmatpush2.bf16.msra.mxu0 0
        %1650 = vmatprep.subr.bf16.mxu0 0
        %1651 = vmatpush2.bf16.msra.mxu0 0
        %1652 = vmatprep.subr.bf16.mxu0 0
        %1653 = vmatpush2.bf16.msra.mxu0 0
        %1654 = vmatprep.subr.bf16.mxu0 0
        %1655 = vmatpush2.bf16.msra.mxu0 0
        %1656 = vmatprep.subr.bf16.mxu0 0
        %1657 = vmatpush2.bf16.msra.mxu0 0
        %1658 = vmatprep.subr.bf16.mxu0 0
        %1659 = vmatpush2.bf16.msra.mxu0 0
        %1660 = vmatprep.subr.bf16.mxu0 0
        %1661 = vmatpush2.bf16.msra.mxu0 0
        %1662 = vmatprep.subr.bf16.mxu0 0
        %1663 = vmatpush2.bf16.msra.mxu0 0
        %1664 = vmatprep.mubr.bf16.mxu0 0
        %1665 = vmatmul.mubr.bf16.gmra.mxu0 %v1577
        %v1666 = vpop.f32.mrf.mxu0
        %v1667 = vadd.f32 %v1582, %v1666
        %v1668 = vpop.f32.mrf.mxu0
        %v1669 = vpop.f32.mrf.mxu0
        %v1670 = vpop.f32.mrf.mxu0
        %1671 = vdwg.mxu0
        %v1672 = vmax.f32 %v1667, 0.0
        %v1673 = vld [vmem:[#allocation10] sm:$0xf]
        %v1674 = vld [vmem:[#allocation10 + $0x4] sm:$0xf]
        %v1675 = vld [vmem:[#allocation10 + $0x8] sm:$0xf]
        %v1676 = vld [vmem:[#allocation10 + $0xc] sm:$0xf]
        %v1677 = vld [vmem:[#allocation10 + $0x10] sm:$0xf]
        %v1678 = vld [vmem:[#allocation10 + $0x14] sm:$0xf]
        %v1679 = vld [vmem:[#allocation10 + $0x18] sm:$0xf]
        %v1680 = vld [vmem:[#allocation10 + $0x1c] sm:$0xf]
        %v1681 = vld [vmem:[#allocation10 + $0x20] sm:$0xf]
        %v1682 = vld [vmem:[#allocation10 + $0x24] sm:$0xf]
        %v1683 = vld [vmem:[#allocation10 + $0x28] sm:$0xf]
        %v1684 = vld [vmem:[#allocation10 + $0x2c] sm:$0xf]
        %v1685 = vld [vmem:[#allocation10 + $0x30] sm:$0xf]
        %v1686 = vld [vmem:[#allocation10 + $0x34] sm:$0xf]
        %v1687 = vld [vmem:[#allocation10 + $0x38] sm:$0xf]
        %v1688 = vld [vmem:[#allocation10 + $0x3c] sm:$0xf]
        %v1689 = vld [vmem:[%s8] sm:$0x1]
        %v1690 = vpack.c.bf16 %v1672, %v1672
        %v1692 = vlaneseq
        %v1693 = vshrl.u32 %v1692, 7
        %v1694 = vsub.s32 0, %v1693
        %v1695 = vrot.slane %v1689, %v1694
        %v1713 = vunpack.c.l.b16 %v1673
        %v1714 = vunpack.c.l.b16 %v1674
        %v1715 = vunpack.c.l.b16 %v1675
        %v1716 = vunpack.c.l.b16 %v1676
        %v1717 = vunpack.c.l.b16 %v1677
        %v1718 = vunpack.c.l.b16 %v1678
        %v1719 = vunpack.c.l.b16 %v1679
        %v1720 = vunpack.c.l.b16 %v1680
        %v1721 = vunpack.c.l.b16 %v1681
        %v1722 = vunpack.c.l.b16 %v1682
        %v1723 = vunpack.c.l.b16 %v1683
        %v1724 = vunpack.c.l.b16 %v1684
        %v1725 = vunpack.c.l.b16 %v1685
        %v1726 = vunpack.c.l.b16 %v1686
        %v1727 = vunpack.c.l.b16 %v1687
        %v1728 = vunpack.c.l.b16 %v1688
        %v1729 = vpack.c.b16 %v1714, %v1713
        %v1730 = vpack.c.b16 %v1716, %v1715
        %v1731 = vpack.c.b16 %v1718, %v1717
        %v1732 = vpack.c.b16 %v1720, %v1719
        %v1733 = vpack.c.b16 %v1722, %v1721
        %v1734 = vpack.c.b16 %v1724, %v1723
        %v1735 = vpack.c.b16 %v1726, %v1725
        %v1736 = vpack.c.b16 %v1728, %v1727
        %1745 = vmatprep.subr.bf16.mxu0 0
        %1746 = vmatpush1.bf16.msra.mxu0 %v1736
        %1747 = vmatprep.subr.bf16.mxu0 0
        %1748 = vmatpush1.bf16.msra.mxu0 %v1735
        %1749 = vmatprep.subr.bf16.mxu0 0
        %1750 = vmatpush1.bf16.msra.mxu0 %v1734
        %1751 = vmatprep.subr.bf16.mxu0 0
        %1752 = vmatpush1.bf16.msra.mxu0 %v1733
        %1753 = vmatprep.subr.bf16.mxu0 0
        %1754 = vmatpush1.bf16.msra.mxu0 %v1732
        %1755 = vmatprep.subr.bf16.mxu0 0
        %1756 = vmatpush1.bf16.msra.mxu0 %v1731
        %1757 = vmatprep.subr.bf16.mxu0 0
        %1758 = vmatpush1.bf16.msra.mxu0 %v1730
        %1759 = vmatprep.subr.bf16.mxu0 0
        %1760 = vmatpush1.bf16.msra.mxu0 %v1729
        %1761 = vmatprep.subr.bf16.mxu0 0
        %1762 = vmatpush2.bf16.msra.mxu0 0
        %1763 = vmatprep.subr.bf16.mxu0 0
        %1764 = vmatpush2.bf16.msra.mxu0 0
        %1765 = vmatprep.subr.bf16.mxu0 0
        %1766 = vmatpush2.bf16.msra.mxu0 0
        %1767 = vmatprep.subr.bf16.mxu0 0
        %1768 = vmatpush2.bf16.msra.mxu0 0
        %1769 = vmatprep.subr.bf16.mxu0 0
        %1770 = vmatpush2.bf16.msra.mxu0 0
        %1771 = vmatprep.subr.bf16.mxu0 0
        %1772 = vmatpush2.bf16.msra.mxu0 0
        %1773 = vmatprep.subr.bf16.mxu0 0
        %1774 = vmatpush2.bf16.msra.mxu0 0
        %1775 = vmatprep.subr.bf16.mxu0 0
        %1776 = vmatpush2.bf16.msra.mxu0 0
        %1777 = vmatprep.mubr.bf16.mxu0 0
        %1778 = vmatmul.mubr.bf16.gmra.mxu0 %v1690
        %v1779 = vpop.f32.mrf.mxu0
        %v1780 = vadd.f32 %v1695, %v1779
        %v1781 = vpop.f32.mrf.mxu0
        %v1782 = vpop.f32.mrf.mxu0
        %v1783 = vpop.f32.mrf.mxu0
        %1784 = vdwg.mxu0
        %v1785 = vmax.f32 %v1780, 0.0
        %v1786 = vld [vmem:[#allocation11] sm:$0xf]
        %v1787 = vld [vmem:[#allocation11 + $0x4] sm:$0xf]
        %v1788 = vld [vmem:[#allocation11 + $0x8] sm:$0xf]
        %v1789 = vld [vmem:[#allocation11 + $0xc] sm:$0xf]
        %v1790 = vld [vmem:[#allocation11 + $0x10] sm:$0xf]
        %v1791 = vld [vmem:[#allocation11 + $0x14] sm:$0xf]
        %v1792 = vld [vmem:[#allocation11 + $0x18] sm:$0xf]
        %v1793 = vld [vmem:[#allocation11 + $0x1c] sm:$0xf]
        %v1794 = vld [vmem:[#allocation11 + $0x20] sm:$0xf]
        %v1795 = vld [vmem:[#allocation11 + $0x24] sm:$0xf]
        %v1796 = vld [vmem:[#allocation11 + $0x28] sm:$0xf]
        %v1797 = vld [vmem:[#allocation11 + $0x2c] sm:$0xf]
        %v1798 = vld [vmem:[#allocation11 + $0x30] sm:$0xf]
        %v1799 = vld [vmem:[#allocation11 + $0x34] sm:$0xf]
        %v1800 = vld [vmem:[#allocation11 + $0x38] sm:$0xf]
        %v1801 = vld [vmem:[#allocation11 + $0x3c] sm:$0xf]
        %v1802 = vld [vmem:[%s10] sm:$0x1]
        %v1803 = vpack.c.bf16 %v1785, %v1785
        %v1805 = vlaneseq
        %v1806 = vshrl.u32 %v1805, 7
        %v1807 = vsub.s32 0, %v1806
        %v1808 = vrot.slane %v1802, %v1807
        %v1826 = vunpack.c.l.b16 %v1786
        %v1827 = vunpack.c.l.b16 %v1787
        %v1828 = vunpack.c.l.b16 %v1788
        %v1829 = vunpack.c.l.b16 %v1789
        %v1830 = vunpack.c.l.b16 %v1790
        %v1831 = vunpack.c.l.b16 %v1791
        %v1832 = vunpack.c.l.b16 %v1792
        %v1833 = vunpack.c.l.b16 %v1793
        %v1834 = vunpack.c.l.b16 %v1794
        %v1835 = vunpack.c.l.b16 %v1795
        %v1836 = vunpack.c.l.b16 %v1796
        %v1837 = vunpack.c.l.b16 %v1797
        %v1838 = vunpack.c.l.b16 %v1798
        %v1839 = vunpack.c.l.b16 %v1799
        %v1840 = vunpack.c.l.b16 %v1800
        %v1841 = vunpack.c.l.b16 %v1801
        %v1842 = vpack.c.b16 %v1827, %v1826
        %v1843 = vpack.c.b16 %v1829, %v1828
        %v1844 = vpack.c.b16 %v1831, %v1830
        %v1845 = vpack.c.b16 %v1833, %v1832
        %v1846 = vpack.c.b16 %v1835, %v1834
        %v1847 = vpack.c.b16 %v1837, %v1836
        %v1848 = vpack.c.b16 %v1839, %v1838
        %v1849 = vpack.c.b16 %v1841, %v1840
        %1858 = vmatprep.subr.bf16.mxu0 0
        %1859 = vmatpush1.bf16.msra.mxu0 %v1849
        %1860 = vmatprep.subr.bf16.mxu0 0
        %1861 = vmatpush1.bf16.msra.mxu0 %v1848
        %1862 = vmatprep.subr.bf16.mxu0 0
        %1863 = vmatpush1.bf16.msra.mxu0 %v1847
        %1864 = vmatprep.subr.bf16.mxu0 0
        %1865 = vmatpush1.bf16.msra.mxu0 %v1846
        %1866 = vmatprep.subr.bf16.mxu0 0
        %1867 = vmatpush1.bf16.msra.mxu0 %v1845
        %1868 = vmatprep.subr.bf16.mxu0 0
        %1869 = vmatpush1.bf16.msra.mxu0 %v1844
        %1870 = vmatprep.subr.bf16.mxu0 0
        %1871 = vmatpush1.bf16.msra.mxu0 %v1843
        %1872 = vmatprep.subr.bf16.mxu0 0
        %1873 = vmatpush1.bf16.msra.mxu0 %v1842
        %1874 = vmatprep.subr.bf16.mxu0 0
        %1875 = vmatpush2.bf16.msra.mxu0 0
        %1876 = vmatprep.subr.bf16.mxu0 0
        %1877 = vmatpush2.bf16.msra.mxu0 0
        %1878 = vmatprep.subr.bf16.mxu0 0
        %1879 = vmatpush2.bf16.msra.mxu0 0
        %1880 = vmatprep.subr.bf16.mxu0 0
        %1881 = vmatpush2.bf16.msra.mxu0 0
        %1882 = vmatprep.subr.bf16.mxu0 0
        %1883 = vmatpush2.bf16.msra.mxu0 0
        %1884 = vmatprep.subr.bf16.mxu0 0
        %1885 = vmatpush2.bf16.msra.mxu0 0
        %1886 = vmatprep.subr.bf16.mxu0 0
        %1887 = vmatpush2.bf16.msra.mxu0 0
        %1888 = vmatprep.subr.bf16.mxu0 0
        %1889 = vmatpush2.bf16.msra.mxu0 0
        %1890 = vmatprep.mubr.bf16.mxu0 0
        %1891 = vmatmul.mubr.bf16.gmra.mxu0 %v1803
        %v1892 = vpop.f32.mrf.mxu0
        %v1893 = vadd.f32 %v1808, %v1892
        %v1894 = vpop.f32.mrf.mxu0
        %v1895 = vpop.f32.mrf.mxu0
        %v1896 = vpop.f32.mrf.mxu0
        %1897 = vdwg.mxu0
        %v1898 = vmax.f32 %v1893, 0.0
        %v1899 = vld [vmem:[#allocation13] sm:$0xf]
        %v1900 = vld [vmem:[#allocation13 + $0x4] sm:$0xf]
        %v1901 = vld [vmem:[#allocation13 + $0x8] sm:$0xf]
        %v1902 = vld [vmem:[#allocation13 + $0xc] sm:$0xf]
        %v1903 = vld [vmem:[#allocation13 + $0x10] sm:$0xf]
        %v1904 = vld [vmem:[#allocation13 + $0x14] sm:$0xf]
        %v1905 = vld [vmem:[#allocation13 + $0x18] sm:$0xf]
        %v1906 = vld [vmem:[#allocation13 + $0x1c] sm:$0xf]
        %v1907 = vld [vmem:[#allocation13 + $0x20] sm:$0xf]
        %v1908 = vld [vmem:[#allocation13 + $0x24] sm:$0xf]
        %v1909 = vld [vmem:[#allocation13 + $0x28] sm:$0xf]
        %v1910 = vld [vmem:[#allocation13 + $0x2c] sm:$0xf]
        %v1911 = vld [vmem:[#allocation13 + $0x30] sm:$0xf]
        %v1912 = vld [vmem:[#allocation13 + $0x34] sm:$0xf]
        %v1913 = vld [vmem:[#allocation13 + $0x38] sm:$0xf]
        %v1914 = vld [vmem:[#allocation13 + $0x3c] sm:$0xf]
        %v1915 = vld [vmem:[%s12] sm:$0x1]
        %v1916 = vpack.c.bf16 %v1898, %v1898
        %v1918 = vlaneseq
        %v1919 = vshrl.u32 %v1918, 7
        %v1920 = vsub.s32 0, %v1919
        %v1921 = vrot.slane %v1915, %v1920
        %v1939 = vunpack.c.l.b16 %v1899
        %v1940 = vunpack.c.l.b16 %v1900
        %v1941 = vunpack.c.l.b16 %v1901
        %v1942 = vunpack.c.l.b16 %v1902
        %v1943 = vunpack.c.l.b16 %v1903
        %v1944 = vunpack.c.l.b16 %v1904
        %v1945 = vunpack.c.l.b16 %v1905
        %v1946 = vunpack.c.l.b16 %v1906
        %v1947 = vunpack.c.l.b16 %v1907
        %v1948 = vunpack.c.l.b16 %v1908
        %v1949 = vunpack.c.l.b16 %v1909
        %v1950 = vunpack.c.l.b16 %v1910
        %v1951 = vunpack.c.l.b16 %v1911
        %v1952 = vunpack.c.l.b16 %v1912
        %v1953 = vunpack.c.l.b16 %v1913
        %v1954 = vunpack.c.l.b16 %v1914
        %v1955 = vpack.c.b16 %v1940, %v1939
        %v1956 = vpack.c.b16 %v1942, %v1941
        %v1957 = vpack.c.b16 %v1944, %v1943
        %v1958 = vpack.c.b16 %v1946, %v1945
        %v1959 = vpack.c.b16 %v1948, %v1947
        %v1960 = vpack.c.b16 %v1950, %v1949
        %v1961 = vpack.c.b16 %v1952, %v1951
        %v1962 = vpack.c.b16 %v1954, %v1953
        %1971 = vmatprep.subr.bf16.mxu0 0
        %1972 = vmatpush1.bf16.msra.mxu0 %v1962
        %1973 = vmatprep.subr.bf16.mxu0 0
        %1974 = vmatpush1.bf16.msra.mxu0 %v1961
        %1975 = vmatprep.subr.bf16.mxu0 0
        %1976 = vmatpush1.bf16.msra.mxu0 %v1960
        %1977 = vmatprep.subr.bf16.mxu0 0
        %1978 = vmatpush1.bf16.msra.mxu0 %v1959
        %1979 = vmatprep.subr.bf16.mxu0 0
        %1980 = vmatpush1.bf16.msra.mxu0 %v1958
        %1981 = vmatprep.subr.bf16.mxu0 0
        %1982 = vmatpush1.bf16.msra.mxu0 %v1957
        %1983 = vmatprep.subr.bf16.mxu0 0
        %1984 = vmatpush1.bf16.msra.mxu0 %v1956
        %1985 = vmatprep.subr.bf16.mxu0 0
        %1986 = vmatpush1.bf16.msra.mxu0 %v1955
        %1987 = vmatprep.subr.bf16.mxu0 0
        %1988 = vmatpush2.bf16.msra.mxu0 0
        %1989 = vmatprep.subr.bf16.mxu0 0
        %1990 = vmatpush2.bf16.msra.mxu0 0
        %1991 = vmatprep.subr.bf16.mxu0 0
        %1992 = vmatpush2.bf16.msra.mxu0 0
        %1993 = vmatprep.subr.bf16.mxu0 0
        %1994 = vmatpush2.bf16.msra.mxu0 0
        %1995 = vmatprep.subr.bf16.mxu0 0
        %1996 = vmatpush2.bf16.msra.mxu0 0
        %1997 = vmatprep.subr.bf16.mxu0 0
        %1998 = vmatpush2.bf16.msra.mxu0 0
        %1999 = vmatprep.subr.bf16.mxu0 0
        %2000 = vmatpush2.bf16.msra.mxu0 0
        %2001 = vmatprep.subr.bf16.mxu0 0
        %2002 = vmatpush2.bf16.msra.mxu0 0
        %2003 = vmatprep.mubr.bf16.mxu0 0
        %2004 = vmatmul.mubr.bf16.gmra.mxu0 %v1916
        %v2005 = vpop.f32.mrf.mxu0
        %v2006 = vadd.f32 %v1921, %v2005
        %v2007 = vpop.f32.mrf.mxu0
        %v2008 = vpop.f32.mrf.mxu0
        %v2009 = vpop.f32.mrf.mxu0
        %2010 = vdwg.mxu0
        %v2011 = vmax.f32 %v2006, 0.0
        %v2012 = vld [vmem:[#allocation14] sm:$0xf]
        %v2013 = vld [vmem:[#allocation14 + $0x4] sm:$0xf]
        %v2014 = vld [vmem:[#allocation14 + $0x8] sm:$0xf]
        %v2015 = vld [vmem:[#allocation14 + $0xc] sm:$0xf]
        %v2016 = vld [vmem:[#allocation14 + $0x10] sm:$0xf]
        %v2017 = vld [vmem:[#allocation14 + $0x14] sm:$0xf]
        %v2018 = vld [vmem:[#allocation14 + $0x18] sm:$0xf]
        %v2019 = vld [vmem:[#allocation14 + $0x1c] sm:$0xf]
        %v2020 = vld [vmem:[#allocation14 + $0x20] sm:$0xf]
        %v2021 = vld [vmem:[#allocation14 + $0x24] sm:$0xf]
        %v2022 = vld [vmem:[#allocation14 + $0x28] sm:$0xf]
        %v2023 = vld [vmem:[#allocation14 + $0x2c] sm:$0xf]
        %v2024 = vld [vmem:[#allocation14 + $0x30] sm:$0xf]
        %v2025 = vld [vmem:[#allocation14 + $0x34] sm:$0xf]
        %v2026 = vld [vmem:[#allocation14 + $0x38] sm:$0xf]
        %v2027 = vld [vmem:[#allocation14 + $0x3c] sm:$0xf]
        %v2028 = vld [vmem:[%s14] sm:$0x1]
        %v2029 = vpack.c.bf16 %v2011, %v2011
        %v2031 = vlaneseq
        %v2032 = vshrl.u32 %v2031, 7
        %v2033 = vsub.s32 0, %v2032
        %v2034 = vrot.slane %v2028, %v2033
        %v2052 = vunpack.c.l.b16 %v2012
        %v2053 = vunpack.c.l.b16 %v2013
        %v2054 = vunpack.c.l.b16 %v2014
        %v2055 = vunpack.c.l.b16 %v2015
        %v2056 = vunpack.c.l.b16 %v2016
        %v2057 = vunpack.c.l.b16 %v2017
        %v2058 = vunpack.c.l.b16 %v2018
        %v2059 = vunpack.c.l.b16 %v2019
        %v2060 = vunpack.c.l.b16 %v2020
        %v2061 = vunpack.c.l.b16 %v2021
        %v2062 = vunpack.c.l.b16 %v2022
        %v2063 = vunpack.c.l.b16 %v2023
        %v2064 = vunpack.c.l.b16 %v2024
        %v2065 = vunpack.c.l.b16 %v2025
        %v2066 = vunpack.c.l.b16 %v2026
        %v2067 = vunpack.c.l.b16 %v2027
        %v2068 = vpack.c.b16 %v2053, %v2052
        %v2069 = vpack.c.b16 %v2055, %v2054
        %v2070 = vpack.c.b16 %v2057, %v2056
        %v2071 = vpack.c.b16 %v2059, %v2058
        %v2072 = vpack.c.b16 %v2061, %v2060
        %v2073 = vpack.c.b16 %v2063, %v2062
        %v2074 = vpack.c.b16 %v2065, %v2064
        %v2075 = vpack.c.b16 %v2067, %v2066
        %2084 = vmatprep.subr.bf16.mxu0 0
        %2085 = vmatpush1.bf16.msra.mxu0 %v2075
        %2086 = vmatprep.subr.bf16.mxu0 0
        %2087 = vmatpush1.bf16.msra.mxu0 %v2074
        %2088 = vmatprep.subr.bf16.mxu0 0
        %2089 = vmatpush1.bf16.msra.mxu0 %v2073
        %2090 = vmatprep.subr.bf16.mxu0 0
        %2091 = vmatpush1.bf16.msra.mxu0 %v2072
        %2092 = vmatprep.subr.bf16.mxu0 0
        %2093 = vmatpush1.bf16.msra.mxu0 %v2071
        %2094 = vmatprep.subr.bf16.mxu0 0
        %2095 = vmatpush1.bf16.msra.mxu0 %v2070
        %2096 = vmatprep.subr.bf16.mxu0 0
        %2097 = vmatpush1.bf16.msra.mxu0 %v2069
        %2098 = vmatprep.subr.bf16.mxu0 0
        %2099 = vmatpush1.bf16.msra.mxu0 %v2068
        %2100 = vmatprep.subr.bf16.mxu0 0
        %2101 = vmatpush2.bf16.msra.mxu0 0
        %2102 = vmatprep.subr.bf16.mxu0 0
        %2103 = vmatpush2.bf16.msra.mxu0 0
        %2104 = vmatprep.subr.bf16.mxu0 0
        %2105 = vmatpush2.bf16.msra.mxu0 0
        %2106 = vmatprep.subr.bf16.mxu0 0
        %2107 = vmatpush2.bf16.msra.mxu0 0
        %2108 = vmatprep.subr.bf16.mxu0 0
        %2109 = vmatpush2.bf16.msra.mxu0 0
        %2110 = vmatprep.subr.bf16.mxu0 0
        %2111 = vmatpush2.bf16.msra.mxu0 0
        %2112 = vmatprep.subr.bf16.mxu0 0
        %2113 = vmatpush2.bf16.msra.mxu0 0
        %2114 = vmatprep.subr.bf16.mxu0 0
        %2115 = vmatpush2.bf16.msra.mxu0 0
        %2116 = vmatprep.mubr.bf16.mxu0 0
        %2117 = vmatmul.mubr.bf16.gmra.mxu0 %v2029
        %v2118 = vpop.f32.mrf.mxu0
        %v2119 = vadd.f32 %v2034, %v2118
        %v2120 = vpop.f32.mrf.mxu0
        %v2121 = vpop.f32.mrf.mxu0
        %v2122 = vpop.f32.mrf.mxu0
        %2123 = vdwg.mxu0
        %v2124 = vmax.f32 %v2119, 0.0
        %v2125 = vld [vmem:[#allocation16] sm:$0xf]
        %v2126 = vld [vmem:[#allocation16 + $0x4] sm:$0xf]
        %v2127 = vld [vmem:[#allocation16 + $0x8] sm:$0xf]
        %v2128 = vld [vmem:[#allocation16 + $0xc] sm:$0xf]
        %v2129 = vld [vmem:[#allocation16 + $0x10] sm:$0xf]
        %v2130 = vld [vmem:[#allocation16 + $0x14] sm:$0xf]
        %v2131 = vld [vmem:[#allocation16 + $0x18] sm:$0xf]
        %v2132 = vld [vmem:[#allocation16 + $0x1c] sm:$0xf]
        %v2133 = vld [vmem:[#allocation16 + $0x20] sm:$0xf]
        %v2134 = vld [vmem:[#allocation16 + $0x24] sm:$0xf]
        %v2135 = vld [vmem:[#allocation16 + $0x28] sm:$0xf]
        %v2136 = vld [vmem:[#allocation16 + $0x2c] sm:$0xf]
        %v2137 = vld [vmem:[#allocation16 + $0x30] sm:$0xf]
        %v2138 = vld [vmem:[#allocation16 + $0x34] sm:$0xf]
        %v2139 = vld [vmem:[#allocation16 + $0x38] sm:$0xf]
        %v2140 = vld [vmem:[#allocation16 + $0x3c] sm:$0xf]
        %v2141 = vld [vmem:[%s16] sm:$0x1]
        %v2142 = vpack.c.bf16 %v2124, %v2124
        %v2144 = vlaneseq
        %v2145 = vshrl.u32 %v2144, 7
        %v2146 = vsub.s32 0, %v2145
        %v2147 = vrot.slane %v2141, %v2146
        %v2165 = vunpack.c.l.b16 %v2125
        %v2166 = vunpack.c.l.b16 %v2126
        %v2167 = vunpack.c.l.b16 %v2127
        %v2168 = vunpack.c.l.b16 %v2128
        %v2169 = vunpack.c.l.b16 %v2129
        %v2170 = vunpack.c.l.b16 %v2130
        %v2171 = vunpack.c.l.b16 %v2131
        %v2172 = vunpack.c.l.b16 %v2132
        %v2173 = vunpack.c.l.b16 %v2133
        %v2174 = vunpack.c.l.b16 %v2134
        %v2175 = vunpack.c.l.b16 %v2135
        %v2176 = vunpack.c.l.b16 %v2136
        %v2177 = vunpack.c.l.b16 %v2137
        %v2178 = vunpack.c.l.b16 %v2138
        %v2179 = vunpack.c.l.b16 %v2139
        %v2180 = vunpack.c.l.b16 %v2140
        %v2181 = vpack.c.b16 %v2166, %v2165
        %v2182 = vpack.c.b16 %v2168, %v2167
        %v2183 = vpack.c.b16 %v2170, %v2169
        %v2184 = vpack.c.b16 %v2172, %v2171
        %v2185 = vpack.c.b16 %v2174, %v2173
        %v2186 = vpack.c.b16 %v2176, %v2175
        %v2187 = vpack.c.b16 %v2178, %v2177
        %v2188 = vpack.c.b16 %v2180, %v2179
        %2197 = vmatprep.subr.bf16.mxu0 0
        %2198 = vmatpush1.bf16.msra.mxu0 %v2188
        %2199 = vmatprep.subr.bf16.mxu0 0
        %2200 = vmatpush1.bf16.msra.mxu0 %v2187
        %2201 = vmatprep.subr.bf16.mxu0 0
        %2202 = vmatpush1.bf16.msra.mxu0 %v2186
        %2203 = vmatprep.subr.bf16.mxu0 0
        %2204 = vmatpush1.bf16.msra.mxu0 %v2185
        %2205 = vmatprep.subr.bf16.mxu0 0
        %2206 = vmatpush1.bf16.msra.mxu0 %v2184
        %2207 = vmatprep.subr.bf16.mxu0 0
        %2208 = vmatpush1.bf16.msra.mxu0 %v2183
        %2209 = vmatprep.subr.bf16.mxu0 0
        %2210 = vmatpush1.bf16.msra.mxu0 %v2182
        %2211 = vmatprep.subr.bf16.mxu0 0
        %2212 = vmatpush1.bf16.msra.mxu0 %v2181
        %2213 = vmatprep.subr.bf16.mxu0 0
        %2214 = vmatpush2.bf16.msra.mxu0 0
        %2215 = vmatprep.subr.bf16.mxu0 0
        %2216 = vmatpush2.bf16.msra.mxu0 0
        %2217 = vmatprep.subr.bf16.mxu0 0
        %2218 = vmatpush2.bf16.msra.mxu0 0
        %2219 = vmatprep.subr.bf16.mxu0 0
        %2220 = vmatpush2.bf16.msra.mxu0 0
        %2221 = vmatprep.subr.bf16.mxu0 0
        %2222 = vmatpush2.bf16.msra.mxu0 0
        %2223 = vmatprep.subr.bf16.mxu0 0
        %2224 = vmatpush2.bf16.msra.mxu0 0
        %2225 = vmatprep.subr.bf16.mxu0 0
        %2226 = vmatpush2.bf16.msra.mxu0 0
        %2227 = vmatprep.subr.bf16.mxu0 0
        %2228 = vmatpush2.bf16.msra.mxu0 0
        %2229 = vmatprep.mubr.bf16.mxu0 0
        %2230 = vmatmul.mubr.bf16.gmra.mxu0 %v2142
        %v2231 = vpop.f32.mrf.mxu0
        %v2232 = vadd.f32 %v2147, %v2231
        %v2233 = vpop.f32.mrf.mxu0
        %v2234 = vpop.f32.mrf.mxu0
        %v2235 = vpop.f32.mrf.mxu0
        %2236 = vdwg.mxu0
        %v2237 = vmax.f32 %v2232, 0.0
        %v2238 = vld [vmem:[#allocation17] sm:$0xff]
        %v2239 = vld [vmem:[#allocation17 + $0x8] sm:$0xff]
        %v2240 = vld [vmem:[#allocation17 + $0x10] sm:$0xff]
        %v2241 = vld [vmem:[#allocation17 + $0x18] sm:$0xff]
        %v2242 = vld [vmem:[#allocation17 + $0x20] sm:$0xff]
        %v2243 = vld [vmem:[#allocation17 + $0x28] sm:$0xff]
        %v2244 = vld [vmem:[#allocation17 + $0x30] sm:$0xff]
        %v2245 = vld [vmem:[#allocation17 + $0x38] sm:$0xff]
        %v2246 = vld [vmem:[#allocation17 + $0x40] sm:$0xff]
        %v2247 = vld [vmem:[#allocation17 + $0x48] sm:$0xff]
        %v2248 = vld [vmem:[#allocation17 + $0x50] sm:$0xff]
        %v2249 = vld [vmem:[#allocation17 + $0x58] sm:$0xff]
        %v2250 = vld [vmem:[#allocation17 + $0x60] sm:$0xff]
        %v2251 = vld [vmem:[#allocation17 + $0x68] sm:$0xff]
        %v2252 = vld [vmem:[#allocation17 + $0x70] sm:$0xff]
        %v2253 = vld [vmem:[#allocation17 + $0x78] sm:$0xff]
        %v2254 = vld [vmem:[#allocation17 + $0x80] sm:$0xff]
        %v2255 = vld [vmem:[#allocation17 + $0x88] sm:$0xff]
        %v2256 = vld [vmem:[#allocation17 + $0x90] sm:$0xff]
        %v2257 = vld [vmem:[#allocation17 + $0x98] sm:$0xff]
        %v2258 = vld [vmem:[#allocation17 + $0xa0] sm:$0xff]
        %v2259 = vld [vmem:[#allocation17 + $0xa8] sm:$0xff]
        %v2260 = vld [vmem:[#allocation17 + $0xb0] sm:$0xff]
        %v2261 = vld [vmem:[#allocation17 + $0xb8] sm:$0xff]
        %v2262 = vld [vmem:[#allocation17 + $0xc0] sm:$0xff]
        %v2263 = vld [vmem:[#allocation17 + $0xc8] sm:$0xff]
        %v2264 = vld [vmem:[#allocation17 + $0xd0] sm:$0xff]
        %v2265 = vld [vmem:[#allocation17 + $0xd8] sm:$0xff]
        %v2266 = vld [vmem:[#allocation17 + $0xe0] sm:$0xff]
        %v2267 = vld [vmem:[#allocation17 + $0xe8] sm:$0xff]
        %v2268 = vld [vmem:[#allocation17 + $0xf0] sm:$0xff]
        %v2269 = vld [vmem:[#allocation17 + $0xf8] sm:$0xff]
        %v2270 = vld [vmem:[#allocation17 + $0x100] sm:$0xff]
        %v2271 = vld [vmem:[#allocation17 + $0x108] sm:$0xff]
        %v2272 = vld [vmem:[#allocation17 + $0x110] sm:$0xff]
        %v2273 = vld [vmem:[#allocation17 + $0x118] sm:$0xff]
        %v2274 = vld [vmem:[#allocation17 + $0x120] sm:$0xff]
        %v2275 = vld [vmem:[#allocation17 + $0x128] sm:$0xff]
        %v2276 = vld [vmem:[#allocation17 + $0x130] sm:$0xff]
        %v2277 = vld [vmem:[#allocation17 + $0x138] sm:$0xff]
        %v2278 = vld [vmem:[#allocation17 + $0x140] sm:$0xff]
        %v2279 = vld [vmem:[#allocation17 + $0x148] sm:$0xff]
        %v2280 = vld [vmem:[#allocation17 + $0x150] sm:$0xff]
        %v2281 = vld [vmem:[#allocation17 + $0x158] sm:$0xff]
        %v2282 = vld [vmem:[#allocation17 + $0x160] sm:$0xff]
        %v2283 = vld [vmem:[#allocation17 + $0x168] sm:$0xff]
        %v2284 = vld [vmem:[#allocation17 + $0x170] sm:$0xff]
        %v2285 = vld [vmem:[#allocation17 + $0x178] sm:$0xff]
        %v2286 = vld [vmem:[#allocation17 + $0x180] sm:$0xff]
        %v2287 = vld [vmem:[#allocation17 + $0x188] sm:$0xff]
        %v2288 = vld [vmem:[#allocation17 + $0x190] sm:$0xff]
        %v2289 = vld [vmem:[#allocation17 + $0x198] sm:$0xff]
        %v2290 = vld [vmem:[#allocation17 + $0x1a0] sm:$0xff]
        %v2291 = vld [vmem:[#allocation17 + $0x1a8] sm:$0xff]
        %v2292 = vld [vmem:[#allocation17 + $0x1b0] sm:$0xff]
        %v2293 = vld [vmem:[#allocation17 + $0x1b8] sm:$0xff]
        %v2294 = vld [vmem:[#allocation17 + $0x1c0] sm:$0xff]
        %v2295 = vld [vmem:[#allocation17 + $0x1c8] sm:$0xff]
        %v2296 = vld [vmem:[#allocation17 + $0x1d0] sm:$0xff]
        %v2297 = vld [vmem:[#allocation17 + $0x1d8] sm:$0xff]
        %v2298 = vld [vmem:[#allocation17 + $0x1e0] sm:$0xff]
        %v2299 = vld [vmem:[#allocation17 + $0x1e8] sm:$0xff]
        %v2300 = vld [vmem:[#allocation17 + $0x1f0] sm:$0xff]
        %v2301 = vld [vmem:[#allocation17 + $0x1f8] sm:$0xff]
        %v2302 = vld [vmem:[%s18] sm:$0xff]
        %v2303 = vpack.c.bf16 %v2237, %v2237
        %v2305 = vlaneseq
        %v2306 = vshrl.u32 %v2305, 7
        %v2307 = vsub.s32 0, %v2306
        %v2308 = vrot.slane %v2302, %v2307
        %v2309 = vlaneseq
        %v2310 = vshrl.u32 %v2309, 7
        %v2311 = vsub.s32 1, %v2310
        %v2312 = vrot.slane %v2302, %v2311
        %v2313 = vlaneseq
        %v2314 = vshrl.u32 %v2313, 7
        %v2315 = vsub.s32 2, %v2314
        %v2316 = vrot.slane %v2302, %v2315
        %v2317 = vlaneseq
        %v2318 = vshrl.u32 %v2317, 7
        %v2319 = vsub.s32 3, %v2318
        %v2320 = vrot.slane %v2302, %v2319
        %v2321 = vlaneseq
        %v2322 = vshrl.u32 %v2321, 7
        %v2323 = vsub.s32 4, %v2322
        %v2324 = vrot.slane %v2302, %v2323
        %v2325 = vlaneseq
        %v2326 = vshrl.u32 %v2325, 7
        %v2327 = vsub.s32 5, %v2326
        %v2328 = vrot.slane %v2302, %v2327
        %v2329 = vlaneseq
        %v2330 = vshrl.u32 %v2329, 7
        %v2331 = vsub.s32 6, %v2330
        %v2332 = vrot.slane %v2302, %v2331
        %v2333 = vlaneseq
        %v2334 = vshrl.u32 %v2333, 7
        %v2335 = vsub.s32 7, %v2334
        %v2336 = vrot.slane %v2302, %v2335
        %v2409 = vunpack.c.l.b16 %v2238
        %v2410 = vunpack.c.h.b16 %v2238
        %v2411 = vunpack.c.l.b16 %v2239
        %v2412 = vunpack.c.h.b16 %v2239
        %v2413 = vunpack.c.l.b16 %v2240
        %v2414 = vunpack.c.h.b16 %v2240
        %v2415 = vunpack.c.l.b16 %v2241
        %v2416 = vunpack.c.h.b16 %v2241
        %v2417 = vunpack.c.l.b16 %v2242
        %v2418 = vunpack.c.h.b16 %v2242
        %v2419 = vunpack.c.l.b16 %v2243
        %v2420 = vunpack.c.h.b16 %v2243
        %v2421 = vunpack.c.l.b16 %v2244
        %v2422 = vunpack.c.h.b16 %v2244
        %v2423 = vunpack.c.l.b16 %v2245
        %v2424 = vunpack.c.h.b16 %v2245
        %v2425 = vunpack.c.l.b16 %v2246
        %v2426 = vunpack.c.h.b16 %v2246
        %v2427 = vunpack.c.l.b16 %v2247
        %v2428 = vunpack.c.h.b16 %v2247
        %v2429 = vunpack.c.l.b16 %v2248
        %v2430 = vunpack.c.h.b16 %v2248
        %v2431 = vunpack.c.l.b16 %v2249
        %v2432 = vunpack.c.h.b16 %v2249
        %v2433 = vunpack.c.l.b16 %v2250
        %v2434 = vunpack.c.h.b16 %v2250
        %v2435 = vunpack.c.l.b16 %v2251
        %v2436 = vunpack.c.h.b16 %v2251
        %v2437 = vunpack.c.l.b16 %v2252
        %v2438 = vunpack.c.h.b16 %v2252
        %v2439 = vunpack.c.l.b16 %v2253
        %v2440 = vunpack.c.h.b16 %v2253
        %v2441 = vunpack.c.l.b16 %v2254
        %v2442 = vunpack.c.h.b16 %v2254
        %v2443 = vunpack.c.l.b16 %v2255
        %v2444 = vunpack.c.h.b16 %v2255
        %v2445 = vunpack.c.l.b16 %v2256
        %v2446 = vunpack.c.h.b16 %v2256
        %v2447 = vunpack.c.l.b16 %v2257
        %v2448 = vunpack.c.h.b16 %v2257
        %v2449 = vunpack.c.l.b16 %v2258
        %v2450 = vunpack.c.h.b16 %v2258
        %v2451 = vunpack.c.l.b16 %v2259
        %v2452 = vunpack.c.h.b16 %v2259
        %v2453 = vunpack.c.l.b16 %v2260
        %v2454 = vunpack.c.h.b16 %v2260
        %v2455 = vunpack.c.l.b16 %v2261
        %v2456 = vunpack.c.h.b16 %v2261
        %v2457 = vunpack.c.l.b16 %v2262
        %v2458 = vunpack.c.h.b16 %v2262
        %v2459 = vunpack.c.l.b16 %v2263
        %v2460 = vunpack.c.h.b16 %v2263
        %v2461 = vunpack.c.l.b16 %v2264
        %v2462 = vunpack.c.h.b16 %v2264
        %v2463 = vunpack.c.l.b16 %v2265
        %v2464 = vunpack.c.h.b16 %v2265
        %v2465 = vunpack.c.l.b16 %v2266
        %v2466 = vunpack.c.h.b16 %v2266
        %v2467 = vunpack.c.l.b16 %v2267
        %v2468 = vunpack.c.h.b16 %v2267
        %v2469 = vunpack.c.l.b16 %v2268
        %v2470 = vunpack.c.h.b16 %v2268
        %v2471 = vunpack.c.l.b16 %v2269
        %v2472 = vunpack.c.h.b16 %v2269
        %v2473 = vunpack.c.l.b16 %v2270
        %v2474 = vunpack.c.h.b16 %v2270
        %v2475 = vunpack.c.l.b16 %v2271
        %v2476 = vunpack.c.h.b16 %v2271
        %v2477 = vunpack.c.l.b16 %v2272
        %v2478 = vunpack.c.h.b16 %v2272
        %v2479 = vunpack.c.l.b16 %v2273
        %v2480 = vunpack.c.h.b16 %v2273
        %v2481 = vunpack.c.l.b16 %v2274
        %v2482 = vunpack.c.h.b16 %v2274
        %v2483 = vunpack.c.l.b16 %v2275
        %v2484 = vunpack.c.h.b16 %v2275
        %v2485 = vunpack.c.l.b16 %v2276
        %v2486 = vunpack.c.h.b16 %v2276
        %v2487 = vunpack.c.l.b16 %v2277
        %v2488 = vunpack.c.h.b16 %v2277
        %v2489 = vunpack.c.l.b16 %v2278
        %v2490 = vunpack.c.h.b16 %v2278
        %v2491 = vunpack.c.l.b16 %v2279
        %v2492 = vunpack.c.h.b16 %v2279
        %v2493 = vunpack.c.l.b16 %v2280
        %v2494 = vunpack.c.h.b16 %v2280
        %v2495 = vunpack.c.l.b16 %v2281
        %v2496 = vunpack.c.h.b16 %v2281
        %v2497 = vunpack.c.l.b16 %v2282
        %v2498 = vunpack.c.h.b16 %v2282
        %v2499 = vunpack.c.l.b16 %v2283
        %v2500 = vunpack.c.h.b16 %v2283
        %v2501 = vunpack.c.l.b16 %v2284
        %v2502 = vunpack.c.h.b16 %v2284
        %v2503 = vunpack.c.l.b16 %v2285
        %v2504 = vunpack.c.h.b16 %v2285
        %v2505 = vunpack.c.l.b16 %v2286
        %v2506 = vunpack.c.h.b16 %v2286
        %v2507 = vunpack.c.l.b16 %v2287
        %v2508 = vunpack.c.h.b16 %v2287
        %v2509 = vunpack.c.l.b16 %v2288
        %v2510 = vunpack.c.h.b16 %v2288
        %v2511 = vunpack.c.l.b16 %v2289
        %v2512 = vunpack.c.h.b16 %v2289
        %v2513 = vunpack.c.l.b16 %v2290
        %v2514 = vunpack.c.h.b16 %v2290
        %v2515 = vunpack.c.l.b16 %v2291
        %v2516 = vunpack.c.h.b16 %v2291
        %v2517 = vunpack.c.l.b16 %v2292
        %v2518 = vunpack.c.h.b16 %v2292
        %v2519 = vunpack.c.l.b16 %v2293
        %v2520 = vunpack.c.h.b16 %v2293
        %v2521 = vunpack.c.l.b16 %v2294
        %v2522 = vunpack.c.h.b16 %v2294
        %v2523 = vunpack.c.l.b16 %v2295
        %v2524 = vunpack.c.h.b16 %v2295
        %v2525 = vunpack.c.l.b16 %v2296
        %v2526 = vunpack.c.h.b16 %v2296
        %v2527 = vunpack.c.l.b16 %v2297
        %v2528 = vunpack.c.h.b16 %v2297
        %v2529 = vunpack.c.l.b16 %v2298
        %v2530 = vunpack.c.h.b16 %v2298
        %v2531 = vunpack.c.l.b16 %v2299
        %v2532 = vunpack.c.h.b16 %v2299
        %v2533 = vunpack.c.l.b16 %v2300
        %v2534 = vunpack.c.h.b16 %v2300
        %v2535 = vunpack.c.l.b16 %v2301
        %v2536 = vunpack.c.h.b16 %v2301
        %v2537 = vpack.c.b16 %v2417, %v2409
        %v2538 = vpack.c.b16 %v2418, %v2410
        %v2539 = vpack.c.b16 %v2419, %v2411
        %v2540 = vpack.c.b16 %v2420, %v2412
        %v2541 = vpack.c.b16 %v2421, %v2413
        %v2542 = vpack.c.b16 %v2422, %v2414
        %v2543 = vpack.c.b16 %v2423, %v2415
        %v2544 = vpack.c.b16 %v2424, %v2416
        %v2545 = vpack.c.b16 %v2433, %v2425
        %v2546 = vpack.c.b16 %v2434, %v2426
        %v2547 = vpack.c.b16 %v2435, %v2427
        %v2548 = vpack.c.b16 %v2436, %v2428
        %v2549 = vpack.c.b16 %v2437, %v2429
        %v2550 = vpack.c.b16 %v2438, %v2430
        %v2551 = vpack.c.b16 %v2439, %v2431
        %v2552 = vpack.c.b16 %v2440, %v2432
        %v2553 = vpack.c.b16 %v2449, %v2441
        %v2554 = vpack.c.b16 %v2450, %v2442
        %v2555 = vpack.c.b16 %v2451, %v2443
        %v2556 = vpack.c.b16 %v2452, %v2444
        %v2557 = vpack.c.b16 %v2453, %v2445
        %v2558 = vpack.c.b16 %v2454, %v2446
        %v2559 = vpack.c.b16 %v2455, %v2447
        %v2560 = vpack.c.b16 %v2456, %v2448
        %v2561 = vpack.c.b16 %v2465, %v2457
        %v2562 = vpack.c.b16 %v2466, %v2458
        %v2563 = vpack.c.b16 %v2467, %v2459
        %v2564 = vpack.c.b16 %v2468, %v2460
        %v2565 = vpack.c.b16 %v2469, %v2461
        %v2566 = vpack.c.b16 %v2470, %v2462
        %v2567 = vpack.c.b16 %v2471, %v2463
        %v2568 = vpack.c.b16 %v2472, %v2464
        %v2569 = vpack.c.b16 %v2481, %v2473
        %v2570 = vpack.c.b16 %v2482, %v2474
        %v2571 = vpack.c.b16 %v2483, %v2475
        %v2572 = vpack.c.b16 %v2484, %v2476
        %v2573 = vpack.c.b16 %v2485, %v2477
        %v2574 = vpack.c.b16 %v2486, %v2478
        %v2575 = vpack.c.b16 %v2487, %v2479
        %v2576 = vpack.c.b16 %v2488, %v2480
        %v2577 = vpack.c.b16 %v2497, %v2489
        %v2578 = vpack.c.b16 %v2498, %v2490
        %v2579 = vpack.c.b16 %v2499, %v2491
        %v2580 = vpack.c.b16 %v2500, %v2492
        %v2581 = vpack.c.b16 %v2501, %v2493
        %v2582 = vpack.c.b16 %v2502, %v2494
        %v2583 = vpack.c.b16 %v2503, %v2495
        %v2584 = vpack.c.b16 %v2504, %v2496
        %v2585 = vpack.c.b16 %v2513, %v2505
        %v2586 = vpack.c.b16 %v2514, %v2506
        %v2587 = vpack.c.b16 %v2515, %v2507
        %v2588 = vpack.c.b16 %v2516, %v2508
        %v2589 = vpack.c.b16 %v2517, %v2509
        %v2590 = vpack.c.b16 %v2518, %v2510
        %v2591 = vpack.c.b16 %v2519, %v2511
        %v2592 = vpack.c.b16 %v2520, %v2512
        %v2593 = vpack.c.b16 %v2529, %v2521
        %v2594 = vpack.c.b16 %v2530, %v2522
        %v2595 = vpack.c.b16 %v2531, %v2523
        %v2596 = vpack.c.b16 %v2532, %v2524
        %v2597 = vpack.c.b16 %v2533, %v2525
        %v2598 = vpack.c.b16 %v2534, %v2526
        %v2599 = vpack.c.b16 %v2535, %v2527
        %v2600 = vpack.c.b16 %v2536, %v2528
        %2665 = vmatprep.subr.bf16.mxu0 %v2594
        %2666 = vmatpush1.bf16.msra.mxu0 %v2593
        %2667 = vmatprep.subr.bf16.mxu0 %v2586
        %2668 = vmatpush1.bf16.msra.mxu0 %v2585
        %2669 = vmatprep.subr.bf16.mxu0 %v2578
        %2670 = vmatpush1.bf16.msra.mxu0 %v2577
        %2671 = vmatprep.subr.bf16.mxu0 %v2570
        %2672 = vmatpush1.bf16.msra.mxu0 %v2569
        %2673 = vmatprep.subr.bf16.mxu0 %v2562
        %2674 = vmatpush1.bf16.msra.mxu0 %v2561
        %2675 = vmatprep.subr.bf16.mxu0 %v2554
        %2676 = vmatpush1.bf16.msra.mxu0 %v2553
        %2677 = vmatprep.subr.bf16.mxu0 %v2546
        %2678 = vmatpush1.bf16.msra.mxu0 %v2545
        %2679 = vmatprep.subr.bf16.mxu0 %v2538
        %2680 = vmatpush1.bf16.msra.mxu0 %v2537
        %2681 = vmatprep.subr.bf16.mxu0 0
        %2682 = vmatpush2.bf16.msra.mxu0 0
        %2683 = vmatprep.subr.bf16.mxu0 0
        %2684 = vmatpush2.bf16.msra.mxu0 0
        %2685 = vmatprep.subr.bf16.mxu0 0
        %2686 = vmatpush2.bf16.msra.mxu0 0
        %2687 = vmatprep.subr.bf16.mxu0 0
        %2688 = vmatpush2.bf16.msra.mxu0 0
        %2689 = vmatprep.subr.bf16.mxu0 0
        %2690 = vmatpush2.bf16.msra.mxu0 0
        %2691 = vmatprep.subr.bf16.mxu0 0
        %2692 = vmatpush2.bf16.msra.mxu0 0
        %2693 = vmatprep.subr.bf16.mxu0 0
        %2694 = vmatpush2.bf16.msra.mxu0 0
        %2695 = vmatprep.subr.bf16.mxu0 0
        %2696 = vmatpush2.bf16.msra.mxu0 0
        %2697 = vmatprep.mubr.bf16.mxu0 0
        %2698 = vmatmul.mubr.bf16.gmra.mxu0 %v2303
        %v2699 = vpop.f32.mrf.mxu0
        %v2700 = vadd.f32 %v2308, %v2699
        %v2701 = vpop.f32.mrf.mxu0
        %v2702 = vadd.f32 %v2312, %v2701
        %v2703 = vpop.f32.mrf.mxu0
        %v2704 = vpop.f32.mrf.mxu0
        %2705 = vdwg.mxu0
        %2706 = vmatprep.subr.bf16.mxu0 %v2596
        %2707 = vmatpush1.bf16.msra.mxu0 %v2595
        %2708 = vmatprep.subr.bf16.mxu0 %v2588
        %2709 = vmatpush1.bf16.msra.mxu0 %v2587
        %2710 = vmatprep.subr.bf16.mxu0 %v2580
        %2711 = vmatpush1.bf16.msra.mxu0 %v2579
        %2712 = vmatprep.subr.bf16.mxu0 %v2572
        %2713 = vmatpush1.bf16.msra.mxu0 %v2571
        %2714 = vmatprep.subr.bf16.mxu0 %v2564
        %2715 = vmatpush1.bf16.msra.mxu0 %v2563
        %2716 = vmatprep.subr.bf16.mxu0 %v2556
        %2717 = vmatpush1.bf16.msra.mxu0 %v2555
        %2718 = vmatprep.subr.bf16.mxu0 %v2548
        %2719 = vmatpush1.bf16.msra.mxu0 %v2547
        %2720 = vmatprep.subr.bf16.mxu0 %v2540
        %2721 = vmatpush1.bf16.msra.mxu0 %v2539
        %2722 = vmatprep.subr.bf16.mxu0 0
        %2723 = vmatpush2.bf16.msra.mxu0 0
        %2724 = vmatprep.subr.bf16.mxu0 0
        %2725 = vmatpush2.bf16.msra.mxu0 0
        %2726 = vmatprep.subr.bf16.mxu0 0
        %2727 = vmatpush2.bf16.msra.mxu0 0
        %2728 = vmatprep.subr.bf16.mxu0 0
        %2729 = vmatpush2.bf16.msra.mxu0 0
        %2730 = vmatprep.subr.bf16.mxu0 0
        %2731 = vmatpush2.bf16.msra.mxu0 0
        %2732 = vmatprep.subr.bf16.mxu0 0
        %2733 = vmatpush2.bf16.msra.mxu0 0
        %2734 = vmatprep.subr.bf16.mxu0 0
        %2735 = vmatpush2.bf16.msra.mxu0 0
        %2736 = vmatprep.subr.bf16.mxu0 0
        %2737 = vmatpush2.bf16.msra.mxu0 0
        %2738 = vmatprep.mubr.bf16.mxu0 0
        %2739 = vmatmul.mubr.bf16.gmra.mxu0 %v2303
        %v2740 = vpop.f32.mrf.mxu0
        %v2741 = vadd.f32 %v2316, %v2740
        %v2742 = vpop.f32.mrf.mxu0
        %v2743 = vadd.f32 %v2320, %v2742
        %v2744 = vpop.f32.mrf.mxu0
        %v2745 = vpop.f32.mrf.mxu0
        %2746 = vdwg.mxu0
        %2747 = vmatprep.subr.bf16.mxu0 %v2598
        %2748 = vmatpush1.bf16.msra.mxu0 %v2597
        %2749 = vmatprep.subr.bf16.mxu0 %v2590
        %2750 = vmatpush1.bf16.msra.mxu0 %v2589
        %2751 = vmatprep.subr.bf16.mxu0 %v2582
        %2752 = vmatpush1.bf16.msra.mxu0 %v2581
        %2753 = vmatprep.subr.bf16.mxu0 %v2574
        %2754 = vmatpush1.bf16.msra.mxu0 %v2573
        %2755 = vmatprep.subr.bf16.mxu0 %v2566
        %2756 = vmatpush1.bf16.msra.mxu0 %v2565
        %2757 = vmatprep.subr.bf16.mxu0 %v2558
        %2758 = vmatpush1.bf16.msra.mxu0 %v2557
        %2759 = vmatprep.subr.bf16.mxu0 %v2550
        %2760 = vmatpush1.bf16.msra.mxu0 %v2549
        %2761 = vmatprep.subr.bf16.mxu0 %v2542
        %2762 = vmatpush1.bf16.msra.mxu0 %v2541
        %2763 = vmatprep.subr.bf16.mxu0 0
        %2764 = vmatpush2.bf16.msra.mxu0 0
        %2765 = vmatprep.subr.bf16.mxu0 0
        %2766 = vmatpush2.bf16.msra.mxu0 0
        %2767 = vmatprep.subr.bf16.mxu0 0
        %2768 = vmatpush2.bf16.msra.mxu0 0
        %2769 = vmatprep.subr.bf16.mxu0 0
        %2770 = vmatpush2.bf16.msra.mxu0 0
        %2771 = vmatprep.subr.bf16.mxu0 0
        %2772 = vmatpush2.bf16.msra.mxu0 0
        %2773 = vmatprep.subr.bf16.mxu0 0
        %2774 = vmatpush2.bf16.msra.mxu0 0
        %2775 = vmatprep.subr.bf16.mxu0 0
        %2776 = vmatpush2.bf16.msra.mxu0 0
        %2777 = vmatprep.subr.bf16.mxu0 0
        %2778 = vmatpush2.bf16.msra.mxu0 0
        %2779 = vmatprep.mubr.bf16.mxu0 0
        %2780 = vmatmul.mubr.bf16.gmra.mxu0 %v2303
        %v2781 = vpop.f32.mrf.mxu0
        %v2782 = vadd.f32 %v2324, %v2781
        %v2783 = vpop.f32.mrf.mxu0
        %v2784 = vadd.f32 %v2328, %v2783
        %v2785 = vpop.f32.mrf.mxu0
        %v2786 = vpop.f32.mrf.mxu0
        %2787 = vdwg.mxu0
        %2788 = vmatprep.subr.bf16.mxu0 %v2600
        %2789 = vmatpush1.bf16.msra.mxu0 %v2599
        %2790 = vmatprep.subr.bf16.mxu0 %v2592
        %2791 = vmatpush1.bf16.msra.mxu0 %v2591
        %2792 = vmatprep.subr.bf16.mxu0 %v2584
        %2793 = vmatpush1.bf16.msra.mxu0 %v2583
        %2794 = vmatprep.subr.bf16.mxu0 %v2576
        %2795 = vmatpush1.bf16.msra.mxu0 %v2575
        %2796 = vmatprep.subr.bf16.mxu0 %v2568
        %2797 = vmatpush1.bf16.msra.mxu0 %v2567
        %2798 = vmatprep.subr.bf16.mxu0 %v2560
        %2799 = vmatpush1.bf16.msra.mxu0 %v2559
        %2800 = vmatprep.subr.bf16.mxu0 %v2552
        %2801 = vmatpush1.bf16.msra.mxu0 %v2551
        %2802 = vmatprep.subr.bf16.mxu0 %v2544
        %2803 = vmatpush1.bf16.msra.mxu0 %v2543
        %2804 = vmatprep.subr.bf16.mxu0 0
        %2805 = vmatpush2.bf16.msra.mxu0 0
        %2806 = vmatprep.subr.bf16.mxu0 0
        %2807 = vmatpush2.bf16.msra.mxu0 0
        %2808 = vmatprep.subr.bf16.mxu0 0
        %2809 = vmatpush2.bf16.msra.mxu0 0
        %2810 = vmatprep.subr.bf16.mxu0 0
        %2811 = vmatpush2.bf16.msra.mxu0 0
        %2812 = vmatprep.subr.bf16.mxu0 0
        %2813 = vmatpush2.bf16.msra.mxu0 0
        %2814 = vmatprep.subr.bf16.mxu0 0
        %2815 = vmatpush2.bf16.msra.mxu0 0
        %2816 = vmatprep.subr.bf16.mxu0 0
        %2817 = vmatpush2.bf16.msra.mxu0 0
        %2818 = vmatprep.subr.bf16.mxu0 0
        %2819 = vmatpush2.bf16.msra.mxu0 0
        %2820 = vmatprep.mubr.bf16.mxu0 0
        %2821 = vmatmul.mubr.bf16.gmra.mxu0 %v2303
        %v2822 = vpop.f32.mrf.mxu0
        %v2823 = vadd.f32 %v2332, %v2822
        %v2824 = vpop.f32.mrf.mxu0
        %v2825 = vadd.f32 %v2336, %v2824
        %v2826 = vpop.f32.mrf.mxu0
        %v2827 = vpop.f32.mrf.mxu0
        %2828 = vdwg.mxu0
        %v2829 = vxor.u32 %v2700, 2147483648
        %v2830 = vxor.u32 %v2702, 2147483648
        %v2831 = vxor.u32 %v2741, 2147483648
        %v2832 = vxor.u32 %v2743, 2147483648
        %v2833 = vxor.u32 %v2782, 2147483648
        %v2834 = vxor.u32 %v2784, 2147483648
        %v2835 = vxor.u32 %v2823, 2147483648
        %v2836 = vxor.u32 %v2825, 2147483648
        %v2837 = vmul.f32 %v2829, 1.442695
        %v2838 = vpow.pop %v2837
        %v2839 = vmul.f32 %v2830, 1.442695
        %v2840 = vpow.pop %v2839
        %v2841 = vmul.f32 %v2831, 1.442695
        %v2842 = vpow.pop %v2841
        %v2843 = vmul.f32 %v2832, 1.442695
        %v2844 = vpow.pop %v2843
        %v2845 = vmul.f32 %v2833, 1.442695
        %v2846 = vpow.pop %v2845
        %v2847 = vmul.f32 %v2834, 1.442695
        %v2848 = vpow.pop %v2847
        %v2849 = vmul.f32 %v2835, 1.442695
        %v2850 = vpow.pop %v2849
        %v2851 = vmul.f32 %v2836, 1.442695
        %v2852 = vpow.pop %v2851
        %v2853 = vadd.f32 %v2838, 1.0
        %v2854 = vadd.f32 %v2840, 1.0
        %v2855 = vadd.f32 %v2842, 1.0
        %v2856 = vadd.f32 %v2844, 1.0
        %v2857 = vadd.f32 %v2846, 1.0
        %v2858 = vadd.f32 %v2848, 1.0
        %v2859 = vadd.f32 %v2850, 1.0
        %v2860 = vadd.f32 %v2852, 1.0
        %v2861 = vrcp.pop %v2853
        %v2862 = vmul.f32 1.0, %v2861
        %v2863 = vrcp.pop %v2854
        %v2864 = vmul.f32 1.0, %v2863
        %v2865 = vrcp.pop %v2855
        %v2866 = vmul.f32 1.0, %v2865
        %v2867 = vrcp.pop %v2856
        %v2868 = vmul.f32 1.0, %v2867
        %v2869 = vrcp.pop %v2857
        %v2870 = vmul.f32 1.0, %v2869
        %v2871 = vrcp.pop %v2858
        %v2872 = vmul.f32 1.0, %v2871
        %v2873 = vrcp.pop %v2859
        %v2874 = vmul.f32 1.0, %v2873
        %v2875 = vrcp.pop %v2860
        %v2876 = vmul.f32 1.0, %v2875
        %2877 = vst [vmem:[%s749] sm:$0xff] %v2862
        %2878 = vst [vmem:[%s749 + $0x8] sm:$0xff] %v2864
        %2879 = vst [vmem:[%s749 + $0x10] sm:$0xff] %v2866
        %2880 = vst [vmem:[%s749 + $0x18] sm:$0xff] %v2868
        %2881 = vst [vmem:[%s749 + $0x20] sm:$0xff] %v2870
        %2882 = vst [vmem:[%s749 + $0x28] sm:$0xff] %v2872
        %2883 = vst [vmem:[%s749 + $0x30] sm:$0xff] %v2874
        %2884 = vst [vmem:[%s749 + $0x38] sm:$0xff] %v2876
        %s2885 = sand.u32 %s453, 1
        %s2886 = scalar_lea.sflag [#allocation4], %s2885
        %s2887 = sand.u32 %s453, 1
        %s2888 = smul.addr %s2887, 64
        %s2889 = scalar_lea.vmem [#allocation19], %s2888
        // Predicated region
        $region137: #{tpu_custom_call.1} parent=95 // pred_check
          %p2890 = pneg %p463
        $region138: #{tpu_custom_call.1} parent=95 // pred_check_branch
          %2892 = sbr.rel (%p2890) target = $region140
        $region139: #{tpu_custom_call.1} parent=95 // pred_region
          %s2894 = ssub.s32 1024, 1024
          %2895 = vsyncadd %s2886, %s2894
          %s2896 = smul.addr %s41, 8
          %s2897 = smul.addr %s2896, 128
          %s2898 = scalar_lea.hbm %s19, %s2897
          %s2900 = sshll.u32 %s2889, 4
          %s2901 = int_to_ptr.vmem [resolvable:$true] %s2900
          %2903 = dma.vmem_to_hbm [thread:$0]  %s2901, 1024, %s2898, %s2886
        $region140: #{tpu_custom_call.1} parent=95 // pred_fallthru
          _
      $region96: #{tpu_custom_call.1} parent=5 // pred_fallthru
        _
      %p2904 = scmp.le.s32.totalorder 2, %s36
      // Predicated region
      $region141: #{tpu_custom_call.1} parent=5 // pred_check
        %p2905 = pneg %p2904
      $region142: #{tpu_custom_call.1} parent=5 // pred_check_branch
        %2907 = sbr.rel (%p2905) target = $region144
      $region143: #{tpu_custom_call.1} parent=5 // pred_region
        %s2908 = ssub.s32 %s36, 2
        // Predicated region
        $region145: #{tpu_custom_call.1} parent=143 // pred_check
          %p2909 = pneg %p469
        $region146: #{tpu_custom_call.1} parent=143 // pred_check_branch
          %2911 = sbr.rel (%p2909) target = $region148
        $region147: #{tpu_custom_call.1} parent=143 // pred_region
          %s2912 = sand.u32 %s454, 1
          %s2913 = scalar_lea.sflag [#allocation4], %s2912
          %s2914 = sand.u32 %s454, 1
          %s2915 = smul.addr %s2914, 64
          %s2916 = scalar_lea.vmem [#allocation19], %s2915
          %2917 = dma.done %s2913, 1024
        $region148: #{tpu_custom_call.1} parent=143 // pred_fallthru
          _
      $region144: #{tpu_custom_call.1} parent=5 // pred_fallthru
        _
    $region6: #{tpu_custom_call.1} parent=1 // loop_footer
      %s40 = sadd.s32 1, %s36
    $region7: #{tpu_custom_call.1} parent=1 // loop_footer_branch
      %35 = sbr.rel target = $region3
    $region8: #{tpu_custom_call.1} parent=1 // loop_exit
      _
    %2918 = vsyncpa [#allocation3], 1
    %s2919 = scalar_lea.sflag [#allocation3], 1
    %2920 = vsyncpa %s2919, 1
    %2921 = vsyncpa [#allocation6], 1
    %2922 = vsyncpa [#allocation9], 1
    %2923 = vsyncpa [#allocation12], 1
    %2924 = vsyncpa [#allocation15], 1
    %2925 = vsyncpa [#allocation18], 1
    %2926 = vsyncpa [#allocation4], 1
    %s2927 = scalar_lea.sflag [#allocation4], 1
    %2928 = vsyncpa %s2927, 1

</llo_original>
